<compile_context>
chip_gen: v7x
topology: tpu7x:2x2x1
jax: 0.10.0
libtpu: 0.0.40
codegen_flags: <defaults>
</compile_context>

<pallas_src>
import jax
import jax.numpy as jnp
from jax import lax
from jax.experimental import pallas as pl
from jax.experimental.pallas import tpu as pltpu


# Shapes implied by Linear(5070, 150): 28x28x1 input, 3x3 VALID conv -> 26x26,
# 2x2/2 max pool -> 13x13, 30 channels => 13*13*30 = 5070 features.
H_POOL = W_POOL = 13
C_OUT = 30
N_POS = H_POOL * W_POOL          # 169 pooled spatial positions
N_FEAT = N_POS * C_OUT           # 5070
HID = 150
N_CLS = 10

TK = 2560                        # K tile for the Linear(5070,150) pipeline
K_PAD = 5120                     # 5070 padded up to a multiple of TK
TM_MAX = 2048                    # max row tile (pooled positions), conv stage
TN_MAX = 512                     # max batch tile, MLP stage


def _ceil_to(x, m):
    return ((x + m - 1) // m) * m


def conv_pool_relu_kernel(p_ref, w_ref, b_ref, o_ref):
    # p_ref: (TM, 36) bf16  im2col patches, col = pool_window(4)*9 + conv_tap(9)
    # w_ref: (36, 120) bf16 block-diagonal conv weight (4 copies of (9,30))
    # b_ref: (1, 30)  f32   conv bias
    # o_ref: (TM, 30) bf16  relu(maxpool2x2(conv(x) + b))
    c = jnp.dot(p_ref[...], w_ref[...], preferred_element_type=jnp.float32)
    m = jnp.maximum(jnp.maximum(c[:, 0:30], c[:, 30:60]),
                    jnp.maximum(c[:, 60:90], c[:, 90:120]))
    # bias is constant over the pool window and relu is monotonic -> add once.
    o_ref[...] = jnp.maximum(m + b_ref[...], 0.0).astype(o_ref.dtype)


def mlp_kernel(x_ref, w1_ref, b1_ref, w2_ref, b2_ref, o_ref, acc_ref):
    # Batch-tiled, K-pipelined Linear(5070->150); ReLU + Linear(150->10) fused
    # into the last K step.
    # x_ref: (TN, TK) bf16, w1_ref: (TK, 150) bf16, b1_ref: (1, 150) f32
    # w2_ref: (150, 10) f32, b2_ref: (1, 10) f32
    # o_ref: (TN, 10) f32, acc_ref: (TN, 150) f32
    k = pl.program_id(1)

    @pl.when(k == 0)
    def _():
        acc_ref[...] = jnp.zeros_like(acc_ref)

    acc_ref[...] += jnp.dot(x_ref[...], w1_ref[...],
                            preferred_element_type=jnp.float32)

    @pl.when(k == pl.num_programs(1) - 1)
    def _():
        h = jnp.maximum(acc_ref[...] + b1_ref[...], 0.0)
        o_ref[...] = (jnp.dot(h, w2_ref[...], preferred_element_type=jnp.float32)
                      + b2_ref[...])


def prepare_params(params):
    """One-time host-side parameter repacking (weights are constants)."""
    wc, bc, w1, b1, w2, b2 = params
    # torch conv weight (O=30, I=1, kH=3, kW=3) -> (taps=9, channels=30)
    w9 = wc.reshape(C_OUT, 9).T
    # Block-diagonal replication so all 4 pool-window positions come out of a
    # single matmul: wb[w*9+t, w*30+c] = w9[t, c].
    wb = jnp.zeros((36, 4 * C_OUT), jnp.float32)
    for w in range(4):
        wb = wb.at[w * 9:(w + 1) * 9, w * C_OUT:(w + 1) * C_OUT].set(w9)
    # Fold torch's (C,H,W) flatten permutation into w1: kernel feature order is
    # (position, channel); torch order is (channel, position).
    w1p = w1.reshape(C_OUT, N_POS, HID).transpose(1, 0, 2).reshape(N_FEAT, HID)
    w1p = jnp.pad(w1p, ((0, K_PAD - N_FEAT), (0, 0)))   # zero rows for K padding
    return (wb.astype(jnp.bfloat16), bc.reshape(1, C_OUT),
            w1p.astype(jnp.bfloat16), b1.reshape(1, HID),
            w2, b2.reshape(1, N_CLS))


@jax.jit
def dense_cnn_forward(x, prepared):
    """x: (N, 1, 28, 28) float32 -> (N, 10) float32"""
    wb, bc, w1p, b1, w2, b2 = prepared
    N = x.shape[0]
    M = N * N_POS

    # Conv row tile: cap at TM_MAX, but aim for >=2 blocks (v7x has 2 TCs).
    TM = min(TM_MAX, max(8, _ceil_to(pl.cdiv(M, 2), 8)))
    Mp = pl.cdiv(M, TM) * TM

    # im2col built directly in (row=(n, pooled-pos), col=(pool-window, tap))
    # order; the 2x2 pool becomes a stride-2 slice, so no big transpose is
    # emitted by XLA.  Emitted in bf16 to halve the patches HBM round-trip.
    x2 = x[:, 0].astype(jnp.bfloat16)                       # (N, 28, 28)
    cols = []
    for dy in range(2):
        for dx in range(2):
            for ky in range(3):
                for kx in range(3):
                    cols.append(
                        x2[:, dy + ky:dy + ky + 2 * H_POOL:2,
                              dx + kx:dx + kx + 2 * W_POOL:2])  # (N, 13, 13)
    patches = jnp.stack(cols, axis=-1).reshape(M, 36)
    patches = jnp.pad(patches, ((0, Mp - M), (0, 0)))

    pooled = pl.pallas_call(
        conv_pool_relu_kernel,
        out_shape=jax.ShapeDtypeStruct((Mp, C_OUT), jnp.bfloat16),
        grid_spec=pltpu.PrefetchScalarGridSpec(
            num_scalar_prefetch=0,
            grid=(Mp // TM,),
            in_specs=[
                pl.BlockSpec((TM, 36), lambda i: (i, 0)),
                pl.BlockSpec((36, 4 * C_OUT), lambda i: (0, 0)),
                pl.BlockSpec((1, C_OUT), lambda i: (0, 0)),
            ],
            out_specs=pl.BlockSpec((TM, C_OUT), lambda i: (i, 0)),
        ),
        compiler_params=pltpu.CompilerParams(
            dimension_semantics=("parallel",)),
    )(patches, wb, bc)

    # Contiguous (free) reshape -- the flatten permutation already lives in w1p.
    feat = pooled[:M].reshape(N, N_FEAT)

    # Batch tile for the MLP (bounds VMEM for any N; parallel axis for v7x).
    TN = min(TN_MAX, _ceil_to(N, 8))
    Np = pl.cdiv(N, TN) * TN
    feat = jnp.pad(feat, ((0, Np - N), (0, K_PAD - N_FEAT)))  # rows + K padding

    out = pl.pallas_call(
        mlp_kernel,
        out_shape=jax.ShapeDtypeStruct((Np, N_CLS), jnp.float32),
        grid_spec=pltpu.PrefetchScalarGridSpec(
            num_scalar_prefetch=0,
            grid=(Np // TN, K_PAD // TK),
            in_specs=[
                pl.BlockSpec((TN, TK), lambda m, k: (m, k)),
                pl.BlockSpec((TK, HID), lambda m, k: (k, 0)),
                pl.BlockSpec((1, HID), lambda m, k: (0, 0)),
                pl.BlockSpec((HID, N_CLS), lambda m, k: (0, 0)),
                pl.BlockSpec((1, N_CLS), lambda m, k: (0, 0)),
            ],
            out_specs=pl.BlockSpec((TN, N_CLS), lambda m, k: (m, 0)),
            scratch_shapes=[pltpu.VMEM((TN, HID), jnp.float32)],
        ),
        compiler_params=pltpu.CompilerParams(
            dimension_semantics=("parallel", "arbitrary")),
    )(feat, w1p, b1, w2, b2)
    return out[:N]


def init_params(key):
    # deterministic synthetic parameters with the same shapes as the torch module
    k = jax.random.split(key, 6)
    wc = jax.random.uniform(k[0], (30, 1, 3, 3), jnp.float32, -1.0, 1.0) / 3.0
    bc = jax.random.uniform(k[1], (30,), jnp.float32, -1.0, 1.0) / 3.0
    w1 = jax.random.uniform(k[2], (5070, 150), jnp.float32, -1.0, 1.0) / jnp.sqrt(5070.0)
    b1 = jax.random.uniform(k[3], (150,), jnp.float32, -1.0, 1.0) / jnp.sqrt(5070.0)
    w2 = jax.random.uniform(k[4], (150, 10), jnp.float32, -1.0, 1.0) / jnp.sqrt(150.0)
    b2 = jax.random.uniform(k[5], (10,), jnp.float32, -1.0, 1.0) / jnp.sqrt(150.0)
    return wc, bc, w1, b1, w2, b2


def ref_forward(x, params):
    # pure-JAX f32 reference reproducing the torch forward semantics
    wc, bc, w1, b1, w2, b2 = params
    conv = lax.conv_general_dilated(
        x, wc, (1, 1), "VALID", dimension_numbers=("NCHW", "OIHW", "NCHW")
    ) + bc.reshape(1, 30, 1, 1)
    pooled = lax.reduce_window(conv, -jnp.inf, lax.max,
                               (1, 1, 2, 2), (1, 1, 2, 2), "VALID")
    h = jnp.maximum(pooled, 0.0).reshape(x.shape[0], -1)
    h = jnp.maximum(h @ w1 + b1, 0.0)
    return h @ w2 + b2


if __name__ == "__main__":
    key = jax.random.PRNGKey(0)
    kx, kp = jax.random.split(key)
    # Linear(5070, 150) implies a 28x28 single-channel input (MNIST-like).
    x = jax.random.normal(kx, (2, 1, 28, 28), jnp.float32)
    params = init_params(kp)
    prepared = prepare_params(params)

    y = jax.block_until_ready(dense_cnn_forward(x, prepared))
    y_ref = ref_forward(x, params)

    assert y.shape == (2, 10) and y.dtype == jnp.float32
    # bf16 weights/activations with f32 accumulation -> looser tolerance.
    assert jnp.allclose(y, y_ref, atol=2e-2, rtol=2e-2)
    print("KERNEL_OK")
</pallas_src>

<mosaic_0001>
module attributes {stable_mosaic.version = 11 : i64} {
  func.func @conv_pool_relu_kernel(%arg0: i32, %arg1: memref<176x36xbf16, #tpu.memory_space<vmem>>, %arg2: memref<36x120xbf16, #tpu.memory_space<vmem>>, %arg3: memref<1x30xf32, #tpu.memory_space<vmem>>, %arg4: memref<176x30xbf16, #tpu.memory_space<vmem>>) attributes {dimension_semantics = [#tpu.dimension_semantics<parallel>], iteration_bounds = array<i64: 2>, scalar_prefetch = 0 : i64, scratch_operands = 0 : i64, tpu.core_type = #tpu.core_type<tc>, window_params = [{transform_indices = @transform_0, window_bounds = array<i64: 176, 36>}, {pipeline_mode = #tpu.pipeline_mode<synchronous>, transform_indices = @transform_1, window_bounds = array<i64: 36, 120>}, {pipeline_mode = #tpu.pipeline_mode<synchronous>, transform_indices = @transform_2, window_bounds = array<i64: 1, 30>}, {transform_indices = @transform_3, window_bounds = array<i64: 176, 30>}]} {
    %c0 = arith.constant 0 : index
    %c0_0 = arith.constant 0 : index
    %0 = vector.load %arg1[%c0, %c0_0] : memref<176x36xbf16, #tpu.memory_space<vmem>>, vector<176x36xbf16>
    %c0_1 = arith.constant 0 : index
    %c0_2 = arith.constant 0 : index
    %1 = vector.load %arg2[%c0_1, %c0_2] : memref<36x120xbf16, #tpu.memory_space<vmem>>, vector<36x120xbf16>
    %cst = arith.constant dense<0.000000e+00> : vector<176x120xf32>
    %2 = tpu.matmul %0, %1, %cst {dimension_numbers = #tpu.dot_dimension_numbers<[1], [0], [0], [1], [0, 0, 1, 1], [], []>} : vector<176x36xbf16>, vector<36x120xbf16>, vector<176x120xf32> -> vector<176x120xf32>
    %3 = vector.extract_strided_slice %2 {offsets = [0, 0], sizes = [176, 30], strides = [1, 1]} : vector<176x120xf32> to vector<176x30xf32>
    %4 = vector.extract_strided_slice %2 {offsets = [0, 30], sizes = [176, 30], strides = [1, 1]} : vector<176x120xf32> to vector<176x30xf32>
    %5 = arith.maximumf %3, %4 : vector<176x30xf32>
    %6 = vector.extract_strided_slice %2 {offsets = [0, 60], sizes = [176, 30], strides = [1, 1]} : vector<176x120xf32> to vector<176x30xf32>
    %7 = vector.extract_strided_slice %2 {offsets = [0, 90], sizes = [176, 30], strides = [1, 1]} : vector<176x120xf32> to vector<176x30xf32>
    %8 = arith.maximumf %6, %7 : vector<176x30xf32>
    %9 = arith.maximumf %5, %8 : vector<176x30xf32>
    %c0_3 = arith.constant 0 : index
    %c0_4 = arith.constant 0 : index
    %10 = vector.load %arg3[%c0_3, %c0_4] : memref<1x30xf32, #tpu.memory_space<vmem>>, vector<1x30xf32>
    %11 = vector.broadcast %10 : vector<1x30xf32> to vector<176x30xf32>
    %12 = arith.addf %9, %11 : vector<176x30xf32>
    %cst_5 = arith.constant 0.000000e+00 : f32
    %13 = vector.broadcast %cst_5 : f32 to vector<176x30xf32>
    %14 = arith.maximumf %12, %13 : vector<176x30xf32>
    %15 = arith.truncf %14 : vector<176x30xf32> to vector<176x30xbf16>
    %c0_6 = arith.constant 0 : index
    %c0_7 = arith.constant 0 : index
    %16 = vector.load %arg4[%c0_6, %c0_7] : memref<176x30xbf16, #tpu.memory_space<vmem>>, vector<176x30xbf16>
    tpu.vector_store %arg4[%c0_6, %c0_7], %15 {strides = array<i32>} : memref<176x30xbf16, #tpu.memory_space<vmem>>, vector<176x30xbf16>,
    return
  }
  func.func @transform_0(%arg0: i32) -> (i32, i32) {
    %c0_i32 = arith.constant 0 : i32
    %c0_i32_0 = arith.constant 0 : i32
    return %arg0, %c0_i32 : i32, i32
  }
  func.func @transform_1(%arg0: i32) -> (i32, i32) {
    %c0_i32 = arith.constant 0 : i32
    %c0_i32_0 = arith.constant 0 : i32
    %c0_i32_1 = arith.constant 0 : i32
    return %c0_i32, %c0_i32_0 : i32, i32
  }
  func.func @transform_2(%arg0: i32) -> (i32, i32) {
    %c0_i32 = arith.constant 0 : i32
    %c0_i32_0 = arith.constant 0 : i32
    %c0_i32_1 = arith.constant 0 : i32
    return %c0_i32, %c0_i32_0 : i32, i32
  }
  func.func @transform_3(%arg0: i32) -> (i32, i32) {
    %c0_i32 = arith.constant 0 : i32
    %c0_i32_0 = arith.constant 0 : i32
    return %arg0, %c0_i32 : i32, i32
  }
}

module attributes {stable_mosaic.version = 11 : i64} {
  func.func @mlp_kernel(%arg0: i32, %arg1: i32, %arg2: memref<8x2560xbf16, #tpu.memory_space<vmem>>, %arg3: memref<2560x150xbf16, #tpu.memory_space<vmem>>, %arg4: memref<1x150xf32, #tpu.memory_space<vmem>>, %arg5: memref<150x10xf32, #tpu.memory_space<vmem>>, %arg6: memref<1x10xf32, #tpu.memory_space<vmem>>, %arg7: memref<8x10xf32, #tpu.memory_space<vmem>>, %arg8: memref<8x150xf32, #tpu.memory_space<vmem>>) attributes {dimension_semantics = [#tpu.dimension_semantics<parallel>, #tpu.dimension_semantics<arbitrary>], iteration_bounds = array<i64: 1, 2>, scalar_prefetch = 0 : i64, scratch_operands = 1 : i64, tpu.core_type = #tpu.core_type<tc>, window_params = [{transform_indices = @transform_0, window_bounds = array<i64: 8, 2560>}, {transform_indices = @transform_1, window_bounds = array<i64: 2560, 150>}, {pipeline_mode = #tpu.pipeline_mode<synchronous>, transform_indices = @transform_2, window_bounds = array<i64: 1, 150>}, {pipeline_mode = #tpu.pipeline_mode<synchronous>, transform_indices = @transform_3, window_bounds = array<i64: 150, 10>}, {pipeline_mode = #tpu.pipeline_mode<synchronous>, transform_indices = @transform_4, window_bounds = array<i64: 1, 10>}, {transform_indices = @transform_5, window_bounds = array<i64: 8, 10>}]} {
    %c0_i32 = arith.constant 0 : i32
    %0 = arith.cmpi eq, %arg1, %c0_i32 : i32
    %1 = arith.extui %0 : i1 to i32
    %c0_i32_0 = arith.constant 0 : i32
    %2 = arith.cmpi ne, %1, %c0_i32_0 : i32
    scf.if %2 {
      %cst_9 = arith.constant 0.000000e+00 : f32
      %12 = vector.broadcast %cst_9 : f32 to vector<8x150xf32>
      %c0_10 = arith.constant 0 : index
      %c0_11 = arith.constant 0 : index
      %13 = vector.load %arg8[%c0_10, %c0_11] : memref<8x150xf32, #tpu.memory_space<vmem>>, vector<8x150xf32>
      tpu.vector_store %arg8[%c0_10, %c0_11], %12 {strides = array<i32>} : memref<8x150xf32, #tpu.memory_space<vmem>>, vector<8x150xf32>,
    } else {
    }
    %c0 = arith.constant 0 : index
    %c0_1 = arith.constant 0 : index
    %3 = vector.load %arg8[%c0, %c0_1] : memref<8x150xf32, #tpu.memory_space<vmem>>, vector<8x150xf32>
    %c0_2 = arith.constant 0 : index
    %c0_3 = arith.constant 0 : index
    %4 = vector.load %arg2[%c0_2, %c0_3] : memref<8x2560xbf16, #tpu.memory_space<vmem>>, vector<8x2560xbf16>
    %c0_4 = arith.constant 0 : index
    %c0_5 = arith.constant 0 : index
    %5 = vector.load %arg3[%c0_4, %c0_5] : memref<2560x150xbf16, #tpu.memory_space<vmem>>, vector<2560x150xbf16>
    %cst = arith.constant dense<0.000000e+00> : vector<8x150xf32>
    %6 = tpu.matmul %4, %5, %cst {dimension_numbers = #tpu.dot_dimension_numbers<[1], [0], [0], [1], [0, 0, 1, 1], [], []>} : vector<8x2560xbf16>, vector<2560x150xbf16>, vector<8x150xf32> -> vector<8x150xf32>
    %7 = arith.addf %3, %6 : vector<8x150xf32>
    %c0_6 = arith.constant 0 : index
    %c0_7 = arith.constant 0 : index
    %8 = vector.load %arg8[%c0_6, %c0_7] : memref<8x150xf32, #tpu.memory_space<vmem>>, vector<8x150xf32>
    tpu.vector_store %arg8[%c0_6, %c0_7], %7 {strides = array<i32>} : memref<8x150xf32, #tpu.memory_space<vmem>>, vector<8x150xf32>,
    %c1_i32 = arith.constant 1 : i32
    %9 = arith.cmpi eq, %arg1, %c1_i32 : i32
    %10 = arith.extui %9 : i1 to i32
    %c0_i32_8 = arith.constant 0 : i32
    %11 = arith.cmpi ne, %10, %c0_i32_8 : i32
    scf.if %11 {
      %c0_9 = arith.constant 0 : index
      %c0_10 = arith.constant 0 : index
      %12 = vector.load %arg8[%c0_9, %c0_10] : memref<8x150xf32, #tpu.memory_space<vmem>>, vector<8x150xf32>
      %c0_11 = arith.constant 0 : index
      %c0_12 = arith.constant 0 : index
      %13 = vector.load %arg4[%c0_11, %c0_12] : memref<1x150xf32, #tpu.memory_space<vmem>>, vector<1x150xf32>
      %14 = vector.broadcast %13 : vector<1x150xf32> to vector<8x150xf32>
      %15 = arith.addf %12, %14 : vector<8x150xf32>
      %cst_13 = arith.constant 0.000000e+00 : f32
      %16 = vector.broadcast %cst_13 : f32 to vector<8x150xf32>
      %17 = arith.maximumf %15, %16 : vector<8x150xf32>
      %c0_14 = arith.constant 0 : index
      %c0_15 = arith.constant 0 : index
      %18 = vector.load %arg5[%c0_14, %c0_15] : memref<150x10xf32, #tpu.memory_space<vmem>>, vector<150x10xf32>
      %cst_16 = arith.constant dense<0.000000e+00> : vector<8x10xf32>
      %19 = tpu.matmul %17, %18, %cst_16 {dimension_numbers = #tpu.dot_dimension_numbers<[1], [0], [0], [1], [0, 0, 1, 1], [], []>} : vector<8x150xf32>, vector<150x10xf32>, vector<8x10xf32> -> vector<8x10xf32>
      %c0_17 = arith.constant 0 : index
      %c0_18 = arith.constant 0 : index
      %20 = vector.load %arg6[%c0_17, %c0_18] : memref<1x10xf32, #tpu.memory_space<vmem>>, vector<1x10xf32>
      %21 = vector.broadcast %20 : vector<1x10xf32> to vector<8x10xf32>
      %22 = arith.addf %19, %21 : vector<8x10xf32>
      %c0_19 = arith.constant 0 : index
      %c0_20 = arith.constant 0 : index
      %23 = vector.load %arg7[%c0_19, %c0_20] : memref<8x10xf32, #tpu.memory_space<vmem>>, vector<8x10xf32>
      tpu.vector_store %arg7[%c0_19, %c0_20], %22 {strides = array<i32>} : memref<8x10xf32, #tpu.memory_space<vmem>>, vector<8x10xf32>,
    } else {
    }
    return
  }
  func.func @transform_0(%arg0: i32, %arg1: i32) -> (i32, i32) {
    %c0_i32 = arith.constant 0 : i32
    return %arg0, %arg1 : i32, i32
  }
  func.func @transform_1(%arg0: i32, %arg1: i32) -> (i32, i32) {
    %c0_i32 = arith.constant 0 : i32
    %c0_i32_0 = arith.constant 0 : i32
    return %arg1, %c0_i32 : i32, i32
  }
  func.func @transform_2(%arg0: i32, %arg1: i32) -> (i32, i32) {
    %c0_i32 = arith.constant 0 : i32
    %c0_i32_0 = arith.constant 0 : i32
    %c0_i32_1 = arith.constant 0 : i32
    return %c0_i32, %c0_i32_0 : i32, i32
  }
  func.func @transform_3(%arg0: i32, %arg1: i32) -> (i32, i32) {
    %c0_i32 = arith.constant 0 : i32
    %c0_i32_0 = arith.constant 0 : i32
    %c0_i32_1 = arith.constant 0 : i32
    return %c0_i32, %c0_i32_0 : i32, i32
  }
  func.func @transform_4(%arg0: i32, %arg1: i32) -> (i32, i32) {
    %c0_i32 = arith.constant 0 : i32
    %c0_i32_0 = arith.constant 0 : i32
    %c0_i32_1 = arith.constant 0 : i32
    return %c0_i32, %c0_i32_0 : i32, i32
  }
  func.func @transform_5(%arg0: i32, %arg1: i32) -> (i32, i32) {
    %c0_i32 = arith.constant 0 : i32
    %c0_i32_0 = arith.constant 0 : i32
    return %arg0, %c0_i32 : i32, i32
  }
}

</mosaic_0001>

<llo_original>
// kernel: dense_cnn_forward.2
$region0: #{dense_cnn_forward.2}
  #allocation0 [shape = 'u32[]', space=smem, size = 0x4, offset = 0x4, fixed_abs, tag = 'smem constant byte address 0x4 - core index']
  #allocation1 [shape = 'u32[144,128]{1,0:T(1,128)}', space=vmem, size = 0x12000, scoped, tag = 'internal scratch']
  %s0 = inlined_call_operand.vmem [shape: bf16[352,36], index: 0, kind: input, shape index: {}]
  %s1 = inlined_call_operand.hbm [shape: bf16[36,120], index: 1, kind: input, shape index: {}]
  %s2 = inlined_call_operand.hbm [shape: f32[1,30], index: 2, kind: input, shape index: {}]
  %s3 = inlined_call_operand.vmem [shape: bf16[352,30], index: 3, kind: output, shape index: {}]
  %s4 = sld [smem:[#allocation0]]
  $region53: #{dense_cnn_forward.2} parent=0
    _
  %s6 = ssub.s32 1, %s4
  %s7 = scalar_select 0, %s6, %s4
  $region1: #{dense_cnn_forward.2} parent=0
    #allocation2 [shape = 'u8[10240]{0}', space=vmem, size = 0x2800, scoped, tag = 'input window, operand 1, single buffered']
    #allocation3 [shape = 's32[2]{0}', space=sflag, size = 0x8, scoped, tag = 'scoped memory for dense_cnn_forward.2']
    #allocation4 [shape = 'u8[512]{0}', space=vmem, size = 0x400, scoped, tag = 'input window, operand 2, single buffered']
    #allocation5 [shape = 's32[1]{0}', space=sflag, size = 0x4, scoped, tag = 'scoped memory for dense_cnn_forward.2']
    %8 = vsyncpa [#allocation3], 0
    %9 = vsyncpa [#allocation5], 0
    loop: start=0, step=1, limit=4
    $region2: #{dense_cnn_forward.2} parent=1 // loop_pre_header
      _
    $region3: #{dense_cnn_forward.2} parent=1 // loop_header
      %s11 = sphi 0, %s15
      %p12 = scmp.ge.s32.totalorder %s11, 4
      %s21 = sphi 0, %s23
      %s24 = sphi 0, %s21
      %s25 = sphi 0, %s24
      %s41 = sphi 0, %s25
      %s45 = sphi 0, %s45
      %s47 = sphi 0, %s45
      %s48 = sphi 0, %s47
      %s62 = sphi 0, %s48
      %s66 = sphi 0, %s66
      %s68 = sphi 0, %s66
      %s69 = sphi 0, %s68
      %s83 = sphi 0, %s69
      %s89 = sphi 0, %s91
      %s92 = sphi 0, %s89
      %s93 = sphi 0, %s92
      %s109 = sphi 0, %s93
    $region4: #{dense_cnn_forward.2} parent=1 // loop_header_branch
      %14 = sbr.rel (%p12) target = $region8
    $region5: #{dense_cnn_forward.2} parent=1 // loop_body
      %s16 = ssub.s32 %s11, 1
      %s17 = ssub.s32 %s11, 2
      %s18 = sadd.s32 %s11, 1
      %s19 = ssub.s32 %s11, %s18
      %p20 = scmp.eq.s32.totalorder %s19, 0
      %s22 = sadd.s32 %s21, 1
      %s23 = scalar_select %p20, %s21, %s22
      %p26 = pneg %p20
      %p27 = scmp.eq.s32.totalorder %s11, 1
      %p28 = por %p26, %p27
      %p29 = scmp.ne.s32.totalorder %s21, %s24
      %p30 = scmp.eq.s32.totalorder %s11, 0
      %p31 = por %p29, %p30
      %p32 = scmp.ne.s32.totalorder %s21, %s24
      %p33 = scmp.eq.s32.totalorder %s16, 1
      %p34 = por %p32, %p33
      %p35 = scmp.ne.s32.totalorder %s24, %s25
      %p36 = scmp.eq.s32.totalorder %s16, 0
      %p37 = por %p35, %p36
      %p38 = scmp.ne.s32.totalorder %s24, %s25
      %p39 = scmp.eq.s32.totalorder %s17, 1
      %p40 = por %p38, %p39
      %p42 = scmp.ne.s32.totalorder %s25, %s41
      %p43 = scmp.eq.s32.totalorder %s17, 0
      %p44 = por %p42, %p43
      %s46 = sadd.s32 %s45, 1
      %p49 = scmp.eq.s32.totalorder %s11, 1
      %p50 = scmp.ne.s32.totalorder %s45, %s47
      %p51 = scmp.eq.s32.totalorder %s11, 0
      %p52 = por %p50, %p51
      %p53 = scmp.ne.s32.totalorder %s45, %s47
      %p54 = scmp.eq.s32.totalorder %s16, 1
      %p55 = por %p53, %p54
      %p56 = scmp.ne.s32.totalorder %s47, %s48
      %p57 = scmp.eq.s32.totalorder %s16, 0
      %p58 = por %p56, %p57
      %p59 = scmp.ne.s32.totalorder %s47, %s48
      %p60 = scmp.eq.s32.totalorder %s17, 1
      %p61 = por %p59, %p60
      %p63 = scmp.ne.s32.totalorder %s48, %s62
      %p64 = scmp.eq.s32.totalorder %s17, 0
      %p65 = por %p63, %p64
      %s67 = sadd.s32 %s66, 1
      %p70 = scmp.eq.s32.totalorder %s11, 1
      %p71 = scmp.ne.s32.totalorder %s66, %s68
      %p72 = scmp.eq.s32.totalorder %s11, 0
      %p73 = por %p71, %p72
      %p74 = scmp.ne.s32.totalorder %s66, %s68
      %p75 = scmp.eq.s32.totalorder %s16, 1
      %p76 = por %p74, %p75
      %p77 = scmp.ne.s32.totalorder %s68, %s69
      %p78 = scmp.eq.s32.totalorder %s16, 0
      %p79 = por %p77, %p78
      %p80 = scmp.ne.s32.totalorder %s68, %s69
      %p81 = scmp.eq.s32.totalorder %s17, 1
      %p82 = por %p80, %p81
      %p84 = scmp.ne.s32.totalorder %s69, %s83
      %p85 = scmp.eq.s32.totalorder %s17, 0
      %p86 = por %p84, %p85
      %s87 = ssub.s32 %s11, %s18
      %p88 = scmp.eq.s32.totalorder %s87, 0
      %s90 = sadd.s32 %s89, 1
      %s91 = scalar_select %p88, %s89, %s90
      %p94 = pneg %p88
      %p95 = scmp.eq.s32.totalorder %s11, 1
      %p96 = por %p94, %p95
      %p97 = scmp.ne.s32.totalorder %s89, %s92
      %p98 = scmp.eq.s32.totalorder %s11, 0
      %p99 = por %p97, %p98
      %p100 = scmp.ne.s32.totalorder %s89, %s92
      %p101 = scmp.eq.s32.totalorder %s16, 1
      %p102 = por %p100, %p101
      %p103 = scmp.ne.s32.totalorder %s92, %s93
      %p104 = scmp.eq.s32.totalorder %s16, 0
      %p105 = por %p103, %p104
      %p106 = scmp.ne.s32.totalorder %s92, %s93
      %p107 = scmp.eq.s32.totalorder %s17, 1
      %p108 = por %p106, %p107
      %p110 = scmp.ne.s32.totalorder %s93, %s109
      %p111 = scmp.eq.s32.totalorder %s17, 0
      %p112 = por %p110, %p111
      %p113 = scmp.le.s32.totalorder 1, %s11
      %p114 = scmp.lt.s32.totalorder %s11, 3
      %p115 = pnand %p113, %p114
      %p116 = pneg %p115
      // Predicated region
      $region9: #{dense_cnn_forward.2} parent=5 // pred_check
        _
      $region10: #{dense_cnn_forward.2} parent=5 // pred_check_branch
        %118 = sbr.rel (%p115) target = $region12
      $region11: #{dense_cnn_forward.2} parent=5 // pred_region
        %s119 = ssub.s32 %s11, 1
        // Predicated region
        $region13: #{dense_cnn_forward.2} parent=11 // pred_check
          %p120 = pneg %p58
        $region14: #{dense_cnn_forward.2} parent=11 // pred_check_branch
          %122 = sbr.rel (%p120) target = $region16
        $region15: #{dense_cnn_forward.2} parent=11 // pred_region
          %s124 = ssub.s32 320, 320
          %125 = vsyncadd [#allocation3], %s124
          %s126 = sshll.u32 [#allocation2], 4
          %s127 = int_to_ptr.vmem [resolvable:$true] %s126
          %132 = dma.hbm_to_vmem [thread:$0]  %s1, 320, %s127, [#allocation3], 64, 64, 4
        $region16: #{dense_cnn_forward.2} parent=11 // pred_fallthru
          _
        // Predicated region
        $region17: #{dense_cnn_forward.2} parent=11 // pred_check
          %p133 = pneg %p79
        $region18: #{dense_cnn_forward.2} parent=11 // pred_check_branch
          %135 = sbr.rel (%p133) target = $region20
        $region19: #{dense_cnn_forward.2} parent=11 // pred_region
          %s137 = ssub.s32 16, 16
          %138 = vsyncadd [#allocation5], %s137
          %s140 = sshll.u32 [#allocation4], 4
          %s141 = int_to_ptr.vmem [resolvable:$true] %s140
          %143 = dma.hbm_to_vmem [thread:$0]  %s2, 16, %s141, [#allocation5]
        $region20: #{dense_cnn_forward.2} parent=11 // pred_fallthru
          _
      $region12: #{dense_cnn_forward.2} parent=5 // pred_fallthru
        _
      %p144 = scmp.lt.s32.totalorder %s11, 2
      // Predicated region
      $region21: #{dense_cnn_forward.2} parent=5 // pred_check
        %p145 = pneg %p144
      $region22: #{dense_cnn_forward.2} parent=5 // pred_check_branch
        %147 = sbr.rel (%p145) target = $region24
      $region23: #{dense_cnn_forward.2} parent=5 // pred_region
        // Predicated region
        $region25: #{dense_cnn_forward.2} parent=23 // pred_check
          %p148 = pneg %p31
        $region26: #{dense_cnn_forward.2} parent=23 // pred_check_branch
          %150 = sbr.rel (%p148) target = $region28
        $region27: #{dense_cnn_forward.2} parent=23 // pred_region
          %s151 = smul.u32 22, %s11
          %p152 = scmp.lt.s32.totalorder %s151, 43
          %s153 = scalar_select %p152, %s151, 43
          %s154 = smul.addr %s153, 4
          %s155 = scalar_lea.vmem %s0, %s154
          %s156 = smul.u32 22, %s11
        $region28: #{dense_cnn_forward.2} parent=23 // pred_fallthru
          _
      $region24: #{dense_cnn_forward.2} parent=5 // pred_fallthru
        _
      %p157 = scmp.le.s32.totalorder 1, %s11
      %p158 = scmp.lt.s32.totalorder %s11, 3
      %p159 = pnand %p157, %p158
      %p160 = pneg %p159
      // Predicated region
      $region29: #{dense_cnn_forward.2} parent=5 // pred_check
        _
      $region30: #{dense_cnn_forward.2} parent=5 // pred_check_branch
        %162 = sbr.rel (%p159) target = $region32
      $region31: #{dense_cnn_forward.2} parent=5 // pred_region
        %s163 = ssub.s32 %s11, 1
        // Predicated region
        $region33: #{dense_cnn_forward.2} parent=31 // pred_check
          %p164 = pneg %p58
        $region34: #{dense_cnn_forward.2} parent=31 // pred_check_branch
          %166 = sbr.rel (%p164) target = $region36
        $region35: #{dense_cnn_forward.2} parent=31 // pred_region
          %167 = dma.done [#allocation3], 320
        $region36: #{dense_cnn_forward.2} parent=31 // pred_fallthru
          _
        // Predicated region
        $region37: #{dense_cnn_forward.2} parent=31 // pred_check
          %p168 = pneg %p79
        $region38: #{dense_cnn_forward.2} parent=31 // pred_check_branch
          %170 = sbr.rel (%p168) target = $region40
        $region39: #{dense_cnn_forward.2} parent=31 // pred_region
          %171 = dma.done [#allocation5], 16
        $region40: #{dense_cnn_forward.2} parent=31 // pred_fallthru
          _
        %s172 = smul.u32 22, %s16
        %p173 = scmp.lt.s32.totalorder %s172, 43
        %s174 = scalar_select %p173, %s172, 43
        %s175 = smul.addr %s174, 4
        %s176 = scalar_lea.vmem %s0, %s175
        %p177 = pneg %p37
        %p178 = pneg %p34
        %p179 = pneg %p58
        %p180 = pneg %p55
        %p181 = pneg %p79
        %p182 = pneg %p76
        %p183 = pneg %p105
        %p184 = pneg %p102
        %s185 = smul.u32 22, %s16
        %p186 = scmp.lt.s32.totalorder %s185, 43
        %s187 = scalar_select %p186, %s185, 43
        %s188 = smul.addr %s187, 4
        %s189 = scalar_lea.vmem %s3, %s188
        %s190 = smul.u32 22, %s16
        %p191 = scmp.lt.s32.totalorder %s190, 43
        %s192 = scalar_select %p191, %s190, 43
        %s193 = smul.addr %s192, 4
        %s194 = scalar_lea.vmem %s0, %s193
        %s195 = smul.u32 22, %s16
        %s196 = smul.u32 22, %s16
        %p197 = scmp.lt.s32.totalorder %s196, 43
        %s198 = scalar_select %p197, %s196, 43
        %s199 = smul.addr %s198, 4
        %s200 = scalar_lea.vmem %s3, %s199
        %s201 = smul.u32 22, %s16
        %v203 = vld [vmem:[%s194] sm:$0xf]
        %v204 = vld [vmem:[%s194 + $0x4] sm:$0xf]
        %v205 = vld [vmem:[%s194 + $0x8] sm:$0xf]
        %v206 = vld [vmem:[%s194 + $0xc] sm:$0xf]
        %v207 = vld [vmem:[%s194 + $0x10] sm:$0xf]
        %v208 = vld [vmem:[%s194 + $0x14] sm:$0xf]
        %v209 = vld [vmem:[%s194 + $0x18] sm:$0xf]
        %v210 = vld [vmem:[%s194 + $0x1c] sm:$0xf]
        %v211 = vld [vmem:[%s194 + $0x20] sm:$0xf]
        %v212 = vld [vmem:[%s194 + $0x24] sm:$0xf]
        %v213 = vld [vmem:[%s194 + $0x28] sm:$0xf]
        %v214 = vld [vmem:[%s194 + $0x2c] sm:$0xf]
        %v215 = vld [vmem:[%s194 + $0x30] sm:$0xf]
        %v216 = vld [vmem:[%s194 + $0x34] sm:$0xf]
        %v217 = vld [vmem:[%s194 + $0x38] sm:$0xf]
        %v218 = vld [vmem:[%s194 + $0x3c] sm:$0xf]
        %v219 = vld [vmem:[%s194 + $0x40] sm:$0xf]
        %v220 = vld [vmem:[%s194 + $0x44] sm:$0xf]
        %v221 = vld [vmem:[%s194 + $0x48] sm:$0xf]
        %v222 = vld [vmem:[%s194 + $0x4c] sm:$0xf]
        %v223 = vld [vmem:[%s194 + $0x50] sm:$0xf]
        %v224 = vld [vmem:[%s194 + $0x54] sm:$0xf]
        %v225 = vld [vmem:[#allocation2] sm:$0xf]
        %v226 = vld [vmem:[#allocation2 + $0x4] sm:$0xf]
        %v227 = vld [vmem:[#allocation2 + $0x8] sm:$0xf]
        %v228 = vld [vmem:[#allocation2 + $0xc] sm:$0xf]
        %v229 = vld [vmem:[#allocation2 + $0x10] sm:$0x3]
        %v252 = vunpack.c.l.b16 %v203
        %v253 = vunpack.c.l.b16 %v204
        %v254 = vunpack.c.l.b16 %v205
        %v255 = vunpack.c.l.b16 %v206
        %v256 = vunpack.c.l.b16 %v207
        %v257 = vunpack.c.l.b16 %v208
        %v258 = vunpack.c.l.b16 %v209
        %v259 = vunpack.c.l.b16 %v210
        %v260 = vunpack.c.l.b16 %v211
        %v261 = vunpack.c.l.b16 %v212
        %v262 = vunpack.c.l.b16 %v213
        %v263 = vunpack.c.l.b16 %v214
        %v264 = vunpack.c.l.b16 %v215
        %v265 = vunpack.c.l.b16 %v216
        %v266 = vunpack.c.l.b16 %v217
        %v267 = vunpack.c.l.b16 %v218
        %v268 = vunpack.c.l.b16 %v219
        %v269 = vunpack.c.l.b16 %v220
        %v270 = vunpack.c.l.b16 %v221
        %v271 = vunpack.c.l.b16 %v222
        %v272 = vunpack.c.l.b16 %v223
        %v273 = vunpack.c.l.b16 %v224
        %v274 = vpack.c.b16 %v253, %v252
        %v275 = vpack.c.b16 %v255, %v254
        %v276 = vpack.c.b16 %v257, %v256
        %v277 = vpack.c.b16 %v259, %v258
        %v278 = vpack.c.b16 %v261, %v260
        %v279 = vpack.c.b16 %v263, %v262
        %v280 = vpack.c.b16 %v265, %v264
        %v281 = vpack.c.b16 %v267, %v266
        %v282 = vpack.c.b16 %v269, %v268
        %v283 = vpack.c.b16 %v271, %v270
        %v284 = vpack.c.b16 %v273, %v272
        %v290 = vunpack.c.l.b16 %v225
        %v291 = vunpack.c.l.b16 %v226
        %v292 = vunpack.c.l.b16 %v227
        %v293 = vunpack.c.l.b16 %v228
        %v294 = vunpack.c.l.b16 %v229
        %v295 = vpack.c.b16 %v291, %v290
        %v296 = vpack.c.b16 %v293, %v292
        %v297 = vpack.c.b16 %v294, %v294
        %vm300 = vcmask 293888
        %v302 = vsel %vm300, %v274, 0
        %v305 = vsel %vm300, %v275, 0
        %v308 = vsel %vm300, %v276, 0
        %v311 = vsel %vm300, %v277, 0
        %v314 = vsel %vm300, %v278, 0
        %v317 = vsel %vm300, %v279, 0
        %v320 = vsel %vm300, %v280, 0
        %v323 = vsel %vm300, %v281, 0
        %v326 = vsel %vm300, %v282, 0
        %v329 = vsel %vm300, %v283, 0
        %v332 = vsel %vm300, %v284, 0
        %vm334 = vcmask 1041408
        %v336 = vsel %vm334, %v297, 0
        %338 = vmatprep.subr.bf16.mxu0 0
        %339 = vmatpush1.bf16.msra.mxu0 %v295
        %340 = vmatprep.subr.bf16.mxu0 0
        %341 = vmatpush1.bf16.msra.mxu0 %v296
        %342 = vmatprep.subr.bf16.mxu0 0
        %343 = vmatpush1.bf16.msra.mxu0 %v336
        %344 = vmatprep.subr.bf16.mxu0 0
        %345 = vmatpush1.bf16.msra.mxu0 0
        %346 = vmatprep.subr.bf16.mxu0 0
        %347 = vmatpush1.bf16.msra.mxu0 0
        %348 = vmatprep.subr.bf16.mxu0 0
        %349 = vmatpush1.bf16.msra.mxu0 0
        %350 = vmatprep.subr.bf16.mxu0 0
        %351 = vmatpush1.bf16.msra.mxu0 0
        %352 = vmatprep.subr.bf16.mxu0 0
        %353 = vmatpush1.bf16.msra.mxu0 0
        %354 = vmatprep.subr.bf16.mxu0 0
        %355 = vmatpush1.bf16.msra.mxu0 0
        %356 = vmatprep.subr.bf16.mxu0 0
        %357 = vmatpush1.bf16.msra.mxu0 0
        %358 = vmatprep.subr.bf16.mxu0 0
        %359 = vmatpush1.bf16.msra.mxu0 0
        %360 = vmatprep.subr.bf16.mxu0 0
        %361 = vmatpush1.bf16.msra.mxu0 0
        %362 = vmatprep.subr.bf16.mxu0 0
        %363 = vmatpush1.bf16.msra.mxu0 0
        %364 = vmatprep.subr.bf16.mxu0 0
        %365 = vmatpush1.bf16.msra.mxu0 0
        %366 = vmatprep.subr.bf16.mxu0 0
        %367 = vmatpush1.bf16.msra.mxu0 0
        %368 = vmatprep.subr.bf16.mxu0 0
        %369 = vmatpush1.bf16.msra.mxu0 0
        %370 = vmatprep.mubr.bf16.mxu0 0
        %371 = vmatmul.mubr.bf16.gmra.mrb[0].mxu0 %v302
        %v372 = vpop.f32.mrb[0].mxu0
        %v373 = vadd.f32 0.0, %v372
        %v374 = vpop.f32.mrb[0].mxu0
        %v375 = vpop.f32.mrb[0].mxu0
        %v376 = vadd.f32 0.0, %v375
        %v377 = vpop.f32.mrb[0].mxu0
        %378 = vmatprep.mubr.bf16.mxu0 0
        %379 = vmatmul.mubr.bf16.gmra.mrb[0].mxu0 %v305
        %v380 = vpop.f32.mrb[0].mxu0
        %v381 = vadd.f32 0.0, %v380
        %v382 = vpop.f32.mrb[0].mxu0
        %v383 = vpop.f32.mrb[0].mxu0
        %v384 = vadd.f32 0.0, %v383
        %v385 = vpop.f32.mrb[0].mxu0
        %386 = vmatprep.mubr.bf16.mxu0 0
        %387 = vmatmul.mubr.bf16.gmra.mrb[0].mxu0 %v308
        %v388 = vpop.f32.mrb[0].mxu0
        %v389 = vadd.f32 0.0, %v388
        %v390 = vpop.f32.mrb[0].mxu0
        %v391 = vpop.f32.mrb[0].mxu0
        %v392 = vadd.f32 0.0, %v391
        %v393 = vpop.f32.mrb[0].mxu0
        %394 = vmatprep.mubr.bf16.mxu0 0
        %395 = vmatmul.mubr.bf16.gmra.mrb[0].mxu0 %v311
        %v396 = vpop.f32.mrb[0].mxu0
        %v397 = vadd.f32 0.0, %v396
        %v398 = vpop.f32.mrb[0].mxu0
        %v399 = vpop.f32.mrb[0].mxu0
        %v400 = vadd.f32 0.0, %v399
        %v401 = vpop.f32.mrb[0].mxu0
        %402 = vmatprep.mubr.bf16.mxu0 0
        %403 = vmatmul.mubr.bf16.gmra.mrb[0].mxu0 %v314
        %v404 = vpop.f32.mrb[0].mxu0
        %v405 = vadd.f32 0.0, %v404
        %v406 = vpop.f32.mrb[0].mxu0
        %v407 = vpop.f32.mrb[0].mxu0
        %v408 = vadd.f32 0.0, %v407
        %v409 = vpop.f32.mrb[0].mxu0
        %410 = vmatprep.mubr.bf16.mxu0 0
        %411 = vmatmul.mubr.bf16.gmra.mrb[0].mxu0 %v317
        %v412 = vpop.f32.mrb[0].mxu0
        %v413 = vadd.f32 0.0, %v412
        %v414 = vpop.f32.mrb[0].mxu0
        %v415 = vpop.f32.mrb[0].mxu0
        %v416 = vadd.f32 0.0, %v415
        %v417 = vpop.f32.mrb[0].mxu0
        %418 = vmatprep.mubr.bf16.mxu0 0
        %419 = vmatmul.mubr.bf16.gmra.mrb[0].mxu0 %v320
        %v420 = vpop.f32.mrb[0].mxu0
        %v421 = vadd.f32 0.0, %v420
        %v422 = vpop.f32.mrb[0].mxu0
        %v423 = vpop.f32.mrb[0].mxu0
        %v424 = vadd.f32 0.0, %v423
        %v425 = vpop.f32.mrb[0].mxu0
        %426 = vmatprep.mubr.bf16.mxu0 0
        %427 = vmatmul.mubr.bf16.gmra.mrb[0].mxu0 %v323
        %v428 = vpop.f32.mrb[0].mxu0
        %v429 = vadd.f32 0.0, %v428
        %v430 = vpop.f32.mrb[0].mxu0
        %v431 = vpop.f32.mrb[0].mxu0
        %v432 = vadd.f32 0.0, %v431
        %v433 = vpop.f32.mrb[0].mxu0
        %434 = vmatprep.mubr.bf16.mxu0 0
        %435 = vmatmul.mubr.bf16.gmra.mrb[0].mxu0 %v326
        %v436 = vpop.f32.mrb[0].mxu0
        %v437 = vadd.f32 0.0, %v436
        %v438 = vpop.f32.mrb[0].mxu0
        %v439 = vpop.f32.mrb[0].mxu0
        %v440 = vadd.f32 0.0, %v439
        %v441 = vpop.f32.mrb[0].mxu0
        %442 = vmatprep.mubr.bf16.mxu0 0
        %443 = vmatmul.mubr.bf16.gmra.mrb[0].mxu0 %v329
        %v444 = vpop.f32.mrb[0].mxu0
        %v445 = vadd.f32 0.0, %v444
        %v446 = vpop.f32.mrb[0].mxu0
        %v447 = vpop.f32.mrb[0].mxu0
        %v448 = vadd.f32 0.0, %v447
        %v449 = vpop.f32.mrb[0].mxu0
        %450 = vmatprep.mubr.bf16.mxu0 0
        %451 = vmatmul.mubr.bf16.gmra.mrb[0].mxu0 %v332
        %v452 = vpop.f32.mrb[0].mxu0
        %v453 = vadd.f32 0.0, %v452
        %v454 = vpop.f32.mrb[0].mxu0
        %v455 = vpop.f32.mrb[0].mxu0
        %v456 = vadd.f32 0.0, %v455
        %v457 = vpop.f32.mrb[0].mxu0
        %458 = vdwg.mxu0
        %481 = vrot.lane.b32.xlu0 %v373, 98
        %v482 = vpop.permute.xlu0 %481
        %483 = vrot.lane.b32.xlu0 %v376, 98
        %v484 = vpop.permute.xlu0 %483
        %485 = vrot.lane.b32.xlu0 %v381, 98
        %v486 = vpop.permute.xlu0 %485
        %487 = vrot.lane.b32.xlu0 %v384, 98
        %v488 = vpop.permute.xlu0 %487
        %489 = vrot.lane.b32.xlu0 %v389, 98
        %v490 = vpop.permute.xlu0 %489
        %491 = vrot.lane.b32.xlu0 %v392, 98
        %v492 = vpop.permute.xlu0 %491
        %493 = vrot.lane.b32.xlu0 %v397, 98
        %v494 = vpop.permute.xlu0 %493
        %495 = vrot.lane.b32.xlu0 %v400, 98
        %v496 = vpop.permute.xlu0 %495
        %497 = vrot.lane.b32.xlu0 %v405, 98
        %v498 = vpop.permute.xlu0 %497
        %499 = vrot.lane.b32.xlu0 %v408, 98
        %v500 = vpop.permute.xlu0 %499
        %501 = vrot.lane.b32.xlu0 %v413, 98
        %v502 = vpop.permute.xlu0 %501
        %503 = vrot.lane.b32.xlu0 %v416, 98
        %v504 = vpop.permute.xlu0 %503
        %505 = vrot.lane.b32.xlu0 %v421, 98
        %v506 = vpop.permute.xlu0 %505
        %507 = vrot.lane.b32.xlu0 %v424, 98
        %v508 = vpop.permute.xlu0 %507
        %509 = vrot.lane.b32.xlu0 %v429, 98
        %v510 = vpop.permute.xlu0 %509
        %511 = vrot.lane.b32.xlu0 %v432, 98
        %v512 = vpop.permute.xlu0 %511
        %513 = vrot.lane.b32.xlu0 %v437, 98
        %v514 = vpop.permute.xlu0 %513
        %515 = vrot.lane.b32.xlu0 %v440, 98
        %v516 = vpop.permute.xlu0 %515
        %517 = vrot.lane.b32.xlu0 %v445, 98
        %v518 = vpop.permute.xlu0 %517
        %519 = vrot.lane.b32.xlu0 %v448, 98
        %v520 = vpop.permute.xlu0 %519
        %521 = vrot.lane.b32.xlu0 %v453, 98
        %v522 = vpop.permute.xlu0 %521
        %523 = vrot.lane.b32.xlu0 %v456, 98
        %v524 = vpop.permute.xlu0 %523
        %v547 = vmax.f32 %v373, %v482
        %v548 = vmax.f32 %v376, %v484
        %v549 = vmax.f32 %v381, %v486
        %v550 = vmax.f32 %v384, %v488
        %v551 = vmax.f32 %v389, %v490
        %v552 = vmax.f32 %v392, %v492
        %v553 = vmax.f32 %v397, %v494
        %v554 = vmax.f32 %v400, %v496
        %v555 = vmax.f32 %v405, %v498
        %v556 = vmax.f32 %v408, %v500
        %v557 = vmax.f32 %v413, %v502
        %v558 = vmax.f32 %v416, %v504
        %v559 = vmax.f32 %v421, %v506
        %v560 = vmax.f32 %v424, %v508
        %v561 = vmax.f32 %v429, %v510
        %v562 = vmax.f32 %v432, %v512
        %v563 = vmax.f32 %v437, %v514
        %v564 = vmax.f32 %v440, %v516
        %v565 = vmax.f32 %v445, %v518
        %v566 = vmax.f32 %v448, %v520
        %v567 = vmax.f32 %v453, %v522
        %v568 = vmax.f32 %v456, %v524
        %591 = vrot.lane.b32.xlu0 %v547, 68
        %v592 = vpop.permute.xlu0 %591
        %593 = vrot.lane.b32.xlu0 %v548, 68
        %v594 = vpop.permute.xlu0 %593
        %595 = vrot.lane.b32.xlu0 %v549, 68
        %v596 = vpop.permute.xlu0 %595
        %597 = vrot.lane.b32.xlu0 %v550, 68
        %v598 = vpop.permute.xlu0 %597
        %599 = vrot.lane.b32.xlu0 %v551, 68
        %v600 = vpop.permute.xlu0 %599
        %601 = vrot.lane.b32.xlu0 %v552, 68
        %v602 = vpop.permute.xlu0 %601
        %603 = vrot.lane.b32.xlu0 %v553, 68
        %v604 = vpop.permute.xlu0 %603
        %605 = vrot.lane.b32.xlu0 %v554, 68
        %v606 = vpop.permute.xlu0 %605
        %607 = vrot.lane.b32.xlu0 %v555, 68
        %v608 = vpop.permute.xlu0 %607
        %609 = vrot.lane.b32.xlu0 %v556, 68
        %v610 = vpop.permute.xlu0 %609
        %611 = vrot.lane.b32.xlu0 %v557, 68
        %v612 = vpop.permute.xlu0 %611
        %613 = vrot.lane.b32.xlu0 %v558, 68
        %v614 = vpop.permute.xlu0 %613
        %615 = vrot.lane.b32.xlu0 %v559, 68
        %v616 = vpop.permute.xlu0 %615
        %617 = vrot.lane.b32.xlu0 %v560, 68
        %v618 = vpop.permute.xlu0 %617
        %619 = vrot.lane.b32.xlu0 %v561, 68
        %v620 = vpop.permute.xlu0 %619
        %621 = vrot.lane.b32.xlu0 %v562, 68
        %v622 = vpop.permute.xlu0 %621
        %623 = vrot.lane.b32.xlu0 %v563, 68
        %v624 = vpop.permute.xlu0 %623
        %625 = vrot.lane.b32.xlu0 %v564, 68
        %v626 = vpop.permute.xlu0 %625
        %627 = vrot.lane.b32.xlu0 %v565, 68
        %v628 = vpop.permute.xlu0 %627
        %629 = vrot.lane.b32.xlu0 %v566, 68
        %v630 = vpop.permute.xlu0 %629
        %631 = vrot.lane.b32.xlu0 %v567, 68
        %v632 = vpop.permute.xlu0 %631
        %633 = vrot.lane.b32.xlu0 %v568, 68
        %v634 = vpop.permute.xlu0 %633
        %v657 = vmax.f32 %v547, %v592
        %v658 = vmax.f32 %v548, %v594
        %v659 = vmax.f32 %v549, %v596
        %v660 = vmax.f32 %v550, %v598
        %v661 = vmax.f32 %v551, %v600
        %v662 = vmax.f32 %v552, %v602
        %v663 = vmax.f32 %v553, %v604
        %v664 = vmax.f32 %v554, %v606
        %v665 = vmax.f32 %v555, %v608
        %v666 = vmax.f32 %v556, %v610
        %v667 = vmax.f32 %v557, %v612
        %v668 = vmax.f32 %v558, %v614
        %v669 = vmax.f32 %v559, %v616
        %v670 = vmax.f32 %v560, %v618
        %v671 = vmax.f32 %v561, %v620
        %v672 = vmax.f32 %v562, %v622
        %v673 = vmax.f32 %v563, %v624
        %v674 = vmax.f32 %v564, %v626
        %v675 = vmax.f32 %v565, %v628
        %v676 = vmax.f32 %v566, %v630
        %v677 = vmax.f32 %v567, %v632
        %v678 = vmax.f32 %v568, %v634
        %v679 = vld [vmem:[#allocation4] sm:$0x1]
        %v681 = vlaneseq
        %v682 = vshrl.u32 %v681, 7
        %v683 = vsub.s32 0, %v682
        %v684 = vrot.slane %v679, %v683
        %v686 = vadd.f32 %v657, %v684
        %v687 = vadd.f32 %v658, %v684
        %v688 = vadd.f32 %v659, %v684
        %v689 = vadd.f32 %v660, %v684
        %v690 = vadd.f32 %v661, %v684
        %v691 = vadd.f32 %v662, %v684
        %v692 = vadd.f32 %v663, %v684
        %v693 = vadd.f32 %v664, %v684
        %v694 = vadd.f32 %v665, %v684
        %v695 = vadd.f32 %v666, %v684
        %v696 = vadd.f32 %v667, %v684
        %v697 = vadd.f32 %v668, %v684
        %v698 = vadd.f32 %v669, %v684
        %v699 = vadd.f32 %v670, %v684
        %v700 = vadd.f32 %v671, %v684
        %v701 = vadd.f32 %v672, %v684
        %v702 = vadd.f32 %v673, %v684
        %v703 = vadd.f32 %v674, %v684
        %v704 = vadd.f32 %v675, %v684
        %v705 = vadd.f32 %v676, %v684
        %v706 = vadd.f32 %v677, %v684
        %v707 = vadd.f32 %v678, %v684
        %v708 = vmax.f32 %v686, 0.0
        %v709 = vmax.f32 %v687, 0.0
        %v710 = vmax.f32 %v688, 0.0
        %v711 = vmax.f32 %v689, 0.0
        %v712 = vmax.f32 %v690, 0.0
        %v713 = vmax.f32 %v691, 0.0
        %v714 = vmax.f32 %v692, 0.0
        %v715 = vmax.f32 %v693, 0.0
        %v716 = vmax.f32 %v694, 0.0
        %v717 = vmax.f32 %v695, 0.0
        %v718 = vmax.f32 %v696, 0.0
        %v719 = vmax.f32 %v697, 0.0
        %v720 = vmax.f32 %v698, 0.0
        %v721 = vmax.f32 %v699, 0.0
        %v722 = vmax.f32 %v700, 0.0
        %v723 = vmax.f32 %v701, 0.0
        %v724 = vmax.f32 %v702, 0.0
        %v725 = vmax.f32 %v703, 0.0
        %v726 = vmax.f32 %v704, 0.0
        %v727 = vmax.f32 %v705, 0.0
        %v728 = vmax.f32 %v706, 0.0
        %v729 = vmax.f32 %v707, 0.0
        %v730 = vpack.c.bf16 %v709, %v708
        %v731 = vpack.c.bf16 %v711, %v710
        %v732 = vpack.c.bf16 %v713, %v712
        %v733 = vpack.c.bf16 %v715, %v714
        %v734 = vpack.c.bf16 %v717, %v716
        %v735 = vpack.c.bf16 %v719, %v718
        %v736 = vpack.c.bf16 %v721, %v720
        %v737 = vpack.c.bf16 %v723, %v722
        %v738 = vpack.c.bf16 %v725, %v724
        %v739 = vpack.c.bf16 %v727, %v726
        %v740 = vpack.c.bf16 %v729, %v728
        %v752 = vunpack.c.l.b16 %v730
        %v753 = vunpack.c.h.b16 %v730
        %v754 = vunpack.c.l.b16 %v731
        %v755 = vunpack.c.h.b16 %v731
        %v756 = vunpack.c.l.b16 %v732
        %v757 = vunpack.c.h.b16 %v732
        %v758 = vunpack.c.l.b16 %v733
        %v759 = vunpack.c.h.b16 %v733
        %v760 = vunpack.c.l.b16 %v734
        %v761 = vunpack.c.h.b16 %v734
        %v762 = vunpack.c.l.b16 %v735
        %v763 = vunpack.c.h.b16 %v735
        %v764 = vunpack.c.l.b16 %v736
        %v765 = vunpack.c.h.b16 %v736
        %v766 = vunpack.c.l.b16 %v737
        %v767 = vunpack.c.h.b16 %v737
        %v768 = vunpack.c.l.b16 %v738
        %v769 = vunpack.c.h.b16 %v738
        %v770 = vunpack.c.l.b16 %v739
        %v771 = vunpack.c.h.b16 %v739
        %v772 = vunpack.c.l.b16 %v740
        %v773 = vunpack.c.h.b16 %v740
        %v774 = vpack.c.b16 %v752, %v752
        %v775 = vpack.c.b16 %v753, %v753
        %v776 = vpack.c.b16 %v754, %v754
        %v777 = vpack.c.b16 %v755, %v755
        %v778 = vpack.c.b16 %v756, %v756
        %v779 = vpack.c.b16 %v757, %v757
        %v780 = vpack.c.b16 %v758, %v758
        %v781 = vpack.c.b16 %v759, %v759
        %v782 = vpack.c.b16 %v760, %v760
        %v783 = vpack.c.b16 %v761, %v761
        %v784 = vpack.c.b16 %v762, %v762
        %v785 = vpack.c.b16 %v763, %v763
        %v786 = vpack.c.b16 %v764, %v764
        %v787 = vpack.c.b16 %v765, %v765
        %v788 = vpack.c.b16 %v766, %v766
        %v789 = vpack.c.b16 %v767, %v767
        %v790 = vpack.c.b16 %v768, %v768
        %v791 = vpack.c.b16 %v769, %v769
        %v792 = vpack.c.b16 %v770, %v770
        %v793 = vpack.c.b16 %v771, %v771
        %v794 = vpack.c.b16 %v772, %v772
        %v795 = vpack.c.b16 %v773, %v773
        %vm818 = vcmask 240640
        %819 = vst.msk [vmem:[%s200] sm:$0xf] %vm818, %v774
        %820 = vst.msk [vmem:[%s200 + $0x4] sm:$0xf] %vm818, %v775
        %821 = vst.msk [vmem:[%s200 + $0x8] sm:$0xf] %vm818, %v776
        %822 = vst.msk [vmem:[%s200 + $0xc] sm:$0xf] %vm818, %v777
        %823 = vst.msk [vmem:[%s200 + $0x10] sm:$0xf] %vm818, %v778
        %824 = vst.msk [vmem:[%s200 + $0x14] sm:$0xf] %vm818, %v779
        %825 = vst.msk [vmem:[%s200 + $0x18] sm:$0xf] %vm818, %v780
        %826 = vst.msk [vmem:[%s200 + $0x1c] sm:$0xf] %vm818, %v781
        %827 = vst.msk [vmem:[%s200 + $0x20] sm:$0xf] %vm818, %v782
        %828 = vst.msk [vmem:[%s200 + $0x24] sm:$0xf] %vm818, %v783
        %829 = vst.msk [vmem:[%s200 + $0x28] sm:$0xf] %vm818, %v784
        %830 = vst.msk [vmem:[%s200 + $0x2c] sm:$0xf] %vm818, %v785
        %831 = vst.msk [vmem:[%s200 + $0x30] sm:$0xf] %vm818, %v786
        %832 = vst.msk [vmem:[%s200 + $0x34] sm:$0xf] %vm818, %v787
        %833 = vst.msk [vmem:[%s200 + $0x38] sm:$0xf] %vm818, %v788
        %834 = vst.msk [vmem:[%s200 + $0x3c] sm:$0xf] %vm818, %v789
        %835 = vst.msk [vmem:[%s200 + $0x40] sm:$0xf] %vm818, %v790
        %836 = vst.msk [vmem:[%s200 + $0x44] sm:$0xf] %vm818, %v791
        %837 = vst.msk [vmem:[%s200 + $0x48] sm:$0xf] %vm818, %v792
        %838 = vst.msk [vmem:[%s200 + $0x4c] sm:$0xf] %vm818, %v793
        %839 = vst.msk [vmem:[%s200 + $0x50] sm:$0xf] %vm818, %v794
        %840 = vst.msk [vmem:[%s200 + $0x54] sm:$0xf] %vm818, %v795
        %s841 = smul.u32 22, %s16
        %p842 = scmp.lt.s32.totalorder %s841, 43
        %s843 = scalar_select %p842, %s841, 43
        %s844 = smul.addr %s843, 4
        %s845 = scalar_lea.vmem %s3, %s844
        // Predicated region
        $region41: #{dense_cnn_forward.2} parent=31 // pred_check
          %p846 = pneg %p102
        $region42: #{dense_cnn_forward.2} parent=31 // pred_check_branch
          %848 = sbr.rel (%p846) target = $region44
        $region43: #{dense_cnn_forward.2} parent=31 // pred_region
          %s849 = smul.u32 22, %s16
        $region44: #{dense_cnn_forward.2} parent=31 // pred_fallthru
          _
      $region32: #{dense_cnn_forward.2} parent=5 // pred_fallthru
        _
      %p850 = scmp.le.s32.totalorder 2, %s11
      // Predicated region
      $region45: #{dense_cnn_forward.2} parent=5 // pred_check
        %p851 = pneg %p850
      $region46: #{dense_cnn_forward.2} parent=5 // pred_check_branch
        %853 = sbr.rel (%p851) target = $region48
      $region47: #{dense_cnn_forward.2} parent=5 // pred_region
        %s854 = ssub.s32 %s11, 2
        // Predicated region
        $region49: #{dense_cnn_forward.2} parent=47 // pred_check
          %p855 = pneg %p108
        $region50: #{dense_cnn_forward.2} parent=47 // pred_check_branch
          %857 = sbr.rel (%p855) target = $region52
        $region51: #{dense_cnn_forward.2} parent=47 // pred_region
          %s858 = smul.u32 22, %s17
          %p859 = scmp.lt.s32.totalorder %s858, 43
          %s860 = scalar_select %p859, %s858, 43
          %s861 = smul.addr %s860, 4
          %s862 = scalar_lea.vmem %s3, %s861
        $region52: #{dense_cnn_forward.2} parent=47 // pred_fallthru
          _
      $region48: #{dense_cnn_forward.2} parent=5 // pred_fallthru
        _
    $region6: #{dense_cnn_forward.2} parent=1 // loop_footer
      %s15 = sadd.s32 1, %s11
    $region7: #{dense_cnn_forward.2} parent=1 // loop_footer_branch
      %10 = sbr.rel target = $region3
    $region8: #{dense_cnn_forward.2} parent=1 // loop_exit
      _
    %863 = vsyncpa [#allocation3], 1
    %s864 = scalar_lea.sflag [#allocation3], 1
    %865 = vsyncpa %s864, 1
    %866 = vsyncpa [#allocation5], 1

// kernel: dense_cnn_forward.3
$region0: #{dense_cnn_forward.3}
  #allocation0 [shape = 'u32[]', space=smem, size = 0x4, offset = 0x4, fixed_abs, tag = 'smem constant byte address 0x4 - core index']
  #allocation1 [shape = 'u32[144,128]{1,0:T(1,128)}', space=vmem, size = 0x12000, scoped, tag = 'internal scratch']
  #allocation2 [shape = 'f32[8,150]{1,0:T(8,128)}', space=vmem, size = 0x2000, scoped, tag = 'scratch operand']
  %s0 = inlined_call_operand.vmem [shape: bf16[8,5120], index: 0, kind: input, shape index: {}]
  %s1 = inlined_call_operand.vmem [shape: bf16[5120,150], index: 1, kind: input, shape index: {}]
  %s2 = inlined_call_operand.vmem [shape: f32[1,150], index: 2, kind: input, shape index: {}]
  %s3 = inlined_call_operand.vmem [shape: f32[150,10], index: 3, kind: input, shape index: {}]
  %s4 = inlined_call_operand.vmem [shape: f32[1,10], index: 4, kind: input, shape index: {}]
  %s5 = inlined_call_operand.vmem [shape: f32[8,10], index: 5, kind: output, shape index: {}]
  %s6 = sld [smem:[#allocation0]]
  $region61: #{dense_cnn_forward.3} parent=0
    _
  %s8 = ssub.s32 1, %s6
  %s9 = scalar_select 0, %s8, %s6
  loop: start=0, step=1, limit=4
  $region2: #{dense_cnn_forward.3} parent=0 // loop_pre_header
    _
  $region3: #{dense_cnn_forward.3} parent=0 // loop_header
    %s11 = sphi 0, %s15
    %p12 = scmp.ge.s32.totalorder %s11, 4
    %s18 = sphi 0, %s30
    %s19 = sphi 0, %s26
    %s20 = sphi 0, %s18
    %s21 = sphi 0, %s19
    %s22 = sphi 0, %s20
    %s23 = sphi 0, %s21
    %s35 = sphi 0, %s37
    %s38 = sphi 0, %s35
    %s39 = sphi 0, %s38
    %s55 = sphi 0, %s39
    %s61 = sphi 0, %s63
    %s64 = sphi 0, %s61
    %s65 = sphi 0, %s64
    %s81 = sphi 0, %s65
    %s85 = sphi 0, %s85
    %s87 = sphi 0, %s85
    %s88 = sphi 0, %s87
    %s102 = sphi 0, %s88
    %s106 = sphi 0, %s106
    %s108 = sphi 0, %s106
    %s109 = sphi 0, %s108
    %s123 = sphi 0, %s109
    %s127 = sphi 0, %s127
    %s129 = sphi 0, %s127
    %s130 = sphi 0, %s129
    %s144 = sphi 0, %s130
    %s150 = sphi 0, %s152
    %s153 = sphi 0, %s150
    %s154 = sphi 0, %s153
    %s170 = sphi 0, %s154
  $region4: #{dense_cnn_forward.3} parent=0 // loop_header_branch
    %14 = sbr.rel (%p12) target = $region8
  $region5: #{dense_cnn_forward.3} parent=0 // loop_body
    %s16 = ssub.s32 %s11, 1
    %s17 = ssub.s32 %s11, 2
    %s24 = sadd.s32 1, %s19
    %p25 = scmp.ge.s32.totalorder %s24, 2
    %s26 = scalar_select %p25, 0, %s24
    %s27 = sadd.s32 1, %s18
    %s28 = scalar_select %p25, %s27, %s18
    %p29 = scmp.ge.s32.totalorder %s28, 1
    %s30 = scalar_select %p29, 0, %s28
    %s31 = ssub.s32 %s18, %s30
    %s32 = ssub.s32 %s19, %s26
    %s33 = sor.u32 %s31, %s32
    %p34 = scmp.eq.s32.totalorder %s33, 0
    %s36 = sadd.s32 %s35, 1
    %s37 = scalar_select %p34, %s35, %s36
    %p40 = pneg %p34
    %p41 = scmp.eq.s32.totalorder %s11, 1
    %p42 = por %p40, %p41
    %p43 = scmp.ne.s32.totalorder %s35, %s38
    %p44 = scmp.eq.s32.totalorder %s11, 0
    %p45 = por %p43, %p44
    %p46 = scmp.ne.s32.totalorder %s35, %s38
    %p47 = scmp.eq.s32.totalorder %s16, 1
    %p48 = por %p46, %p47
    %p49 = scmp.ne.s32.totalorder %s38, %s39
    %p50 = scmp.eq.s32.totalorder %s16, 0
    %p51 = por %p49, %p50
    %p52 = scmp.ne.s32.totalorder %s38, %s39
    %p53 = scmp.eq.s32.totalorder %s17, 1
    %p54 = por %p52, %p53
    %p56 = scmp.ne.s32.totalorder %s39, %s55
    %p57 = scmp.eq.s32.totalorder %s17, 0
    %p58 = por %p56, %p57
    %s59 = ssub.s32 %s19, %s26
    %p60 = scmp.eq.s32.totalorder %s59, 0
    %s62 = sadd.s32 %s61, 1
    %s63 = scalar_select %p60, %s61, %s62
    %p66 = pneg %p60
    %p67 = scmp.eq.s32.totalorder %s11, 1
    %p68 = por %p66, %p67
    %p69 = scmp.ne.s32.totalorder %s61, %s64
    %p70 = scmp.eq.s32.totalorder %s11, 0
    %p71 = por %p69, %p70
    %p72 = scmp.ne.s32.totalorder %s61, %s64
    %p73 = scmp.eq.s32.totalorder %s16, 1
    %p74 = por %p72, %p73
    %p75 = scmp.ne.s32.totalorder %s64, %s65
    %p76 = scmp.eq.s32.totalorder %s16, 0
    %p77 = por %p75, %p76
    %p78 = scmp.ne.s32.totalorder %s64, %s65
    %p79 = scmp.eq.s32.totalorder %s17, 1
    %p80 = por %p78, %p79
    %p82 = scmp.ne.s32.totalorder %s65, %s81
    %p83 = scmp.eq.s32.totalorder %s17, 0
    %p84 = por %p82, %p83
    %s86 = sadd.s32 %s85, 1
    %p89 = scmp.eq.s32.totalorder %s11, 1
    %p90 = scmp.ne.s32.totalorder %s85, %s87
    %p91 = scmp.eq.s32.totalorder %s11, 0
    %p92 = por %p90, %p91
    %p93 = scmp.ne.s32.totalorder %s85, %s87
    %p94 = scmp.eq.s32.totalorder %s16, 1
    %p95 = por %p93, %p94
    %p96 = scmp.ne.s32.totalorder %s87, %s88
    %p97 = scmp.eq.s32.totalorder %s16, 0
    %p98 = por %p96, %p97
    %p99 = scmp.ne.s32.totalorder %s87, %s88
    %p100 = scmp.eq.s32.totalorder %s17, 1
    %p101 = por %p99, %p100
    %p103 = scmp.ne.s32.totalorder %s88, %s102
    %p104 = scmp.eq.s32.totalorder %s17, 0
    %p105 = por %p103, %p104
    %s107 = sadd.s32 %s106, 1
    %p110 = scmp.eq.s32.totalorder %s11, 1
    %p111 = scmp.ne.s32.totalorder %s106, %s108
    %p112 = scmp.eq.s32.totalorder %s11, 0
    %p113 = por %p111, %p112
    %p114 = scmp.ne.s32.totalorder %s106, %s108
    %p115 = scmp.eq.s32.totalorder %s16, 1
    %p116 = por %p114, %p115
    %p117 = scmp.ne.s32.totalorder %s108, %s109
    %p118 = scmp.eq.s32.totalorder %s16, 0
    %p119 = por %p117, %p118
    %p120 = scmp.ne.s32.totalorder %s108, %s109
    %p121 = scmp.eq.s32.totalorder %s17, 1
    %p122 = por %p120, %p121
    %p124 = scmp.ne.s32.totalorder %s109, %s123
    %p125 = scmp.eq.s32.totalorder %s17, 0
    %p126 = por %p124, %p125
    %s128 = sadd.s32 %s127, 1
    %p131 = scmp.eq.s32.totalorder %s11, 1
    %p132 = scmp.ne.s32.totalorder %s127, %s129
    %p133 = scmp.eq.s32.totalorder %s11, 0
    %p134 = por %p132, %p133
    %p135 = scmp.ne.s32.totalorder %s127, %s129
    %p136 = scmp.eq.s32.totalorder %s16, 1
    %p137 = por %p135, %p136
    %p138 = scmp.ne.s32.totalorder %s129, %s130
    %p139 = scmp.eq.s32.totalorder %s16, 0
    %p140 = por %p138, %p139
    %p141 = scmp.ne.s32.totalorder %s129, %s130
    %p142 = scmp.eq.s32.totalorder %s17, 1
    %p143 = por %p141, %p142
    %p145 = scmp.ne.s32.totalorder %s130, %s144
    %p146 = scmp.eq.s32.totalorder %s17, 0
    %p147 = por %p145, %p146
    %s148 = ssub.s32 %s18, %s30
    %p149 = scmp.eq.s32.totalorder %s148, 0
    %s151 = sadd.s32 %s150, 1
    %s152 = scalar_select %p149, %s150, %s151
    %p155 = pneg %p149
    %p156 = scmp.eq.s32.totalorder %s11, 1
    %p157 = por %p155, %p156
    %p158 = scmp.ne.s32.totalorder %s150, %s153
    %p159 = scmp.eq.s32.totalorder %s11, 0
    %p160 = por %p158, %p159
    %p161 = scmp.ne.s32.totalorder %s150, %s153
    %p162 = scmp.eq.s32.totalorder %s16, 1
    %p163 = por %p161, %p162
    %p164 = scmp.ne.s32.totalorder %s153, %s154
    %p165 = scmp.eq.s32.totalorder %s16, 0
    %p166 = por %p164, %p165
    %p167 = scmp.ne.s32.totalorder %s153, %s154
    %p168 = scmp.eq.s32.totalorder %s17, 1
    %p169 = por %p167, %p168
    %p171 = scmp.ne.s32.totalorder %s154, %s170
    %p172 = scmp.eq.s32.totalorder %s17, 0
    %p173 = por %p171, %p172
    %p174 = scmp.le.s32.totalorder 1, %s11
    %p175 = scmp.lt.s32.totalorder %s11, 3
    %p176 = pnand %p174, %p175
    %p177 = pneg %p176
    // Predicated region
    $region9: #{dense_cnn_forward.3} parent=5 // pred_check
      _
    $region10: #{dense_cnn_forward.3} parent=5 // pred_check_branch
      %179 = sbr.rel (%p176) target = $region12
    $region11: #{dense_cnn_forward.3} parent=5 // pred_region
      %s180 = ssub.s32 %s11, 1
      // Predicated region
      $region13: #{dense_cnn_forward.3} parent=11 // pred_check
        %p181 = pneg %p98
      $region14: #{dense_cnn_forward.3} parent=11 // pred_check_branch
        %183 = sbr.rel (%p181) target = $region16
      $region15: #{dense_cnn_forward.3} parent=11 // pred_region
        _
      $region16: #{dense_cnn_forward.3} parent=11 // pred_fallthru
        _
      // Predicated region
      $region17: #{dense_cnn_forward.3} parent=11 // pred_check
        %p184 = pneg %p119
      $region18: #{dense_cnn_forward.3} parent=11 // pred_check_branch
        %186 = sbr.rel (%p184) target = $region20
      $region19: #{dense_cnn_forward.3} parent=11 // pred_region
        _
      $region20: #{dense_cnn_forward.3} parent=11 // pred_fallthru
        _
      // Predicated region
      $region21: #{dense_cnn_forward.3} parent=11 // pred_check
        %p187 = pneg %p140
      $region22: #{dense_cnn_forward.3} parent=11 // pred_check_branch
        %189 = sbr.rel (%p187) target = $region24
      $region23: #{dense_cnn_forward.3} parent=11 // pred_region
        _
      $region24: #{dense_cnn_forward.3} parent=11 // pred_fallthru
        _
    $region12: #{dense_cnn_forward.3} parent=5 // pred_fallthru
      _
    %p190 = scmp.lt.s32.totalorder %s11, 2
    // Predicated region
    $region25: #{dense_cnn_forward.3} parent=5 // pred_check
      %p191 = pneg %p190
    $region26: #{dense_cnn_forward.3} parent=5 // pred_check_branch
      %193 = sbr.rel (%p191) target = $region28
    $region27: #{dense_cnn_forward.3} parent=5 // pred_region
      // Predicated region
      $region29: #{dense_cnn_forward.3} parent=27 // pred_check
        %p194 = pneg %p45
      $region30: #{dense_cnn_forward.3} parent=27 // pred_check_branch
        %196 = sbr.rel (%p194) target = $region32
      $region31: #{dense_cnn_forward.3} parent=27 // pred_region
        %s197 = smul.u32 20, %s19
        %p198 = scmp.lt.s32.totalorder %s18, 0
        %s199 = scalar_select %p198, %s18, 0
        %p200 = scmp.lt.s32.totalorder %s197, 39
        %s201 = scalar_select %p200, %s197, 39
        %s202 = smul.addr %s199, 40
        %s203 = sadd.s32 %s201, %s202
        %s204 = smul.addr %s203, 4
        %s205 = scalar_lea.vmem %s0, %s204
        %s206 = smul.u32 20, %s19
      $region32: #{dense_cnn_forward.3} parent=27 // pred_fallthru
        _
      // Predicated region
      $region33: #{dense_cnn_forward.3} parent=27 // pred_check
        %p207 = pneg %p71
      $region34: #{dense_cnn_forward.3} parent=27 // pred_check_branch
        %209 = sbr.rel (%p207) target = $region36
      $region35: #{dense_cnn_forward.3} parent=27 // pred_region
        %s210 = smul.u32 320, %s19
        %p211 = scmp.lt.s32.totalorder %s210, 639
        %s212 = scalar_select %p211, %s210, 639
        %s213 = smul.addr %s212, 2
        %s214 = smul.addr %s213, 4
        %s215 = scalar_lea.vmem %s1, %s214
        %s216 = smul.u32 320, %s19
      $region36: #{dense_cnn_forward.3} parent=27 // pred_fallthru
        _
    $region28: #{dense_cnn_forward.3} parent=5 // pred_fallthru
      _
    %p217 = scmp.le.s32.totalorder 1, %s11
    %p218 = scmp.lt.s32.totalorder %s11, 3
    %p219 = pnand %p217, %p218
    %p220 = pneg %p219
    // Predicated region
    $region37: #{dense_cnn_forward.3} parent=5 // pred_check
      _
    $region38: #{dense_cnn_forward.3} parent=5 // pred_check_branch
      %222 = sbr.rel (%p219) target = $region40
    $region39: #{dense_cnn_forward.3} parent=5 // pred_region
      %s223 = ssub.s32 %s11, 1
      %s224 = smul.u32 20, %s21
      %p225 = scmp.lt.s32.totalorder %s20, 0
      %s226 = scalar_select %p225, %s20, 0
      %p227 = scmp.lt.s32.totalorder %s224, 39
      %s228 = scalar_select %p227, %s224, 39
      %s229 = smul.addr %s226, 40
      %s230 = sadd.s32 %s228, %s229
      %s231 = smul.addr %s230, 4
      %s232 = scalar_lea.vmem %s0, %s231
      %p233 = pneg %p51
      %p234 = pneg %p48
      %s235 = smul.u32 320, %s21
      %p236 = scmp.lt.s32.totalorder %s235, 639
      %s237 = scalar_select %p236, %s235, 639
      %s238 = smul.addr %s237, 2
      %s239 = smul.addr %s238, 4
      %s240 = scalar_lea.vmem %s1, %s239
      %p241 = pneg %p77
      %p242 = pneg %p74
      %p243 = pneg %p98
      %p244 = pneg %p95
      %p245 = pneg %p119
      %p246 = pneg %p116
      %p247 = pneg %p140
      %p248 = pneg %p137
      %p249 = pneg %p166
      %p250 = pneg %p163
      %p251 = scmp.lt.s32.totalorder %s20, 0
      %s252 = scalar_select %p251, %s20, 0
      %s253 = smul.addr %s252, 8
      %s254 = scalar_lea.vmem %s5, %s253
      %s255 = smul.u32 20, %s21
      %p256 = scmp.lt.s32.totalorder %s20, 0
      %s257 = scalar_select %p256, %s20, 0
      %p258 = scmp.lt.s32.totalorder %s255, 39
      %s259 = scalar_select %p258, %s255, 39
      %s260 = smul.addr %s257, 40
      %s261 = sadd.s32 %s259, %s260
      %s262 = smul.addr %s261, 4
      %s263 = scalar_lea.vmem %s0, %s262
      %s264 = smul.u32 20, %s21
      %s265 = smul.u32 320, %s21
      %p266 = scmp.lt.s32.totalorder %s265, 639
      %s267 = scalar_select %p266, %s265, 639
      %s268 = smul.addr %s267, 2
      %s269 = smul.addr %s268, 4
      %s270 = scalar_lea.vmem %s1, %s269
      %s271 = smul.u32 320, %s21
      %p272 = scmp.lt.s32.totalorder %s20, 0
      %s273 = scalar_select %p272, %s20, 0
      %s274 = smul.addr %s273, 8
      %s275 = scalar_lea.vmem %s5, %s274
      %p276 = scmp.eq.s32.totalorder %s21, 0
      // Predicated region
      $region41: #{dense_cnn_forward.3} parent=39 // pred_check
        %p277 = pneg %p276
      $region42: #{dense_cnn_forward.3} parent=39 // pred_check_branch
        %279 = sbr.rel (%p277) target = $region44
      $region43: #{dense_cnn_forward.3} parent=39 // pred_region
        %280 = vst [vmem:[#allocation2] sm:$0xff] 0.0
        %vm281 = vcmask 179200
        %282 = vst.msk [vmem:[#allocation2 + $0x8] sm:$0xff] %vm281, 0.0
      $region44: #{dense_cnn_forward.3} parent=39 // pred_fallthru
        _
      %v283 = vld [vmem:[#allocation2] sm:$0xff]
      %v284 = vld [vmem:[#allocation2 + $0x8] sm:$0xff]
      %v285 = vld [vmem:[%s263] sm:$0xff]
      %v286 = vld [vmem:[%s263 + $0x8] sm:$0xff]
      %v287 = vld [vmem:[%s263 + $0x10] sm:$0xff]
      %v288 = vld [vmem:[%s263 + $0x18] sm:$0xff]
      %v289 = vld [vmem:[%s263 + $0x20] sm:$0xff]
      %v290 = vld [vmem:[%s263 + $0x28] sm:$0xff]
      %v291 = vld [vmem:[%s263 + $0x30] sm:$0xff]
      %v292 = vld [vmem:[%s263 + $0x38] sm:$0xff]
      %v293 = vld [vmem:[%s263 + $0x40] sm:$0xff]
      %v294 = vld [vmem:[%s263 + $0x48] sm:$0xff]
      %v295 = vld [vmem:[%s270] sm:$0xff]
      %v296 = vld [vmem:[%s270 + $0x8] sm:$0xff]
      %v297 = vld [vmem:[%s270 + $0x10] sm:$0xff]
      %v298 = vld [vmem:[%s270 + $0x18] sm:$0xff]
      %v299 = vld [vmem:[%s270 + $0x20] sm:$0xff]
      %v300 = vld [vmem:[%s270 + $0x28] sm:$0xff]
      %v301 = vld [vmem:[%s270 + $0x30] sm:$0xff]
      %v302 = vld [vmem:[%s270 + $0x38] sm:$0xff]
      %v303 = vld [vmem:[%s270 + $0x40] sm:$0xff]
      %v304 = vld [vmem:[%s270 + $0x48] sm:$0xff]
      %v305 = vld [vmem:[%s270 + $0x50] sm:$0xff]
      %v306 = vld [vmem:[%s270 + $0x58] sm:$0xff]
      %v307 = vld [vmem:[%s270 + $0x60] sm:$0xff]
      %v308 = vld [vmem:[%s270 + $0x68] sm:$0xff]
      %v309 = vld [vmem:[%s270 + $0x70] sm:$0xff]
      %v310 = vld [vmem:[%s270 + $0x78] sm:$0xff]
      %v311 = vld [vmem:[%s270 + $0x80] sm:$0xff]
      %v312 = vld [vmem:[%s270 + $0x88] sm:$0xff]
      %v313 = vld [vmem:[%s270 + $0x90] sm:$0xff]
      %v314 = vld [vmem:[%s270 + $0x98] sm:$0xff]
      %v315 = vld [vmem:[%s270 + $0xa0] sm:$0xff]
      %v316 = vld [vmem:[%s270 + $0xa8] sm:$0xff]
      %v317 = vld [vmem:[%s270 + $0xb0] sm:$0xff]
      %v318 = vld [vmem:[%s270 + $0xb8] sm:$0xff]
      %v319 = vld [vmem:[%s270 + $0xc0] sm:$0xff]
      %v320 = vld [vmem:[%s270 + $0xc8] sm:$0xff]
      %v321 = vld [vmem:[%s270 + $0xd0] sm:$0xff]
      %v322 = vld [vmem:[%s270 + $0xd8] sm:$0xff]
      %v323 = vld [vmem:[%s270 + $0xe0] sm:$0xff]
      %v324 = vld [vmem:[%s270 + $0xe8] sm:$0xff]
      %v325 = vld [vmem:[%s270 + $0xf0] sm:$0xff]
      %v326 = vld [vmem:[%s270 + $0xf8] sm:$0xff]
      %v327 = vld [vmem:[%s270 + $0x100] sm:$0xff]
      %v328 = vld [vmem:[%s270 + $0x108] sm:$0xff]
      %v329 = vld [vmem:[%s270 + $0x110] sm:$0xff]
      %v330 = vld [vmem:[%s270 + $0x118] sm:$0xff]
      %v331 = vld [vmem:[%s270 + $0x120] sm:$0xff]
      %v332 = vld [vmem:[%s270 + $0x128] sm:$0xff]
      %v333 = vld [vmem:[%s270 + $0x130] sm:$0xff]
      %v334 = vld [vmem:[%s270 + $0x138] sm:$0xff]
      %v335 = vld [vmem:[%s270 + $0x140] sm:$0xff]
      %v336 = vld [vmem:[%s270 + $0x148] sm:$0xff]
      %v337 = vld [vmem:[%s270 + $0x150] sm:$0xff]
      %v338 = vld [vmem:[%s270 + $0x158] sm:$0xff]
      %v339 = vld [vmem:[%s270 + $0x160] sm:$0xff]
      %v340 = vld [vmem:[%s270 + $0x168] sm:$0xff]
      %v341 = vld [vmem:[%s270 + $0x170] sm:$0xff]
      %v342 = vld [vmem:[%s270 + $0x178] sm:$0xff]
      %v343 = vld [vmem:[%s270 + $0x180] sm:$0xff]
      %v344 = vld [vmem:[%s270 + $0x188] sm:$0xff]
      %v345 = vld [vmem:[%s270 + $0x190] sm:$0xff]
      %v346 = vld [vmem:[%s270 + $0x198] sm:$0xff]
      %v347 = vld [vmem:[%s270 + $0x1a0] sm:$0xff]
      %v348 = vld [vmem:[%s270 + $0x1a8] sm:$0xff]
      %v349 = vld [vmem:[%s270 + $0x1b0] sm:$0xff]
      %v350 = vld [vmem:[%s270 + $0x1b8] sm:$0xff]
      %v351 = vld [vmem:[%s270 + $0x1c0] sm:$0xff]
      %v352 = vld [vmem:[%s270 + $0x1c8] sm:$0xff]
      %v353 = vld [vmem:[%s270 + $0x1d0] sm:$0xff]
      %v354 = vld [vmem:[%s270 + $0x1d8] sm:$0xff]
      %v355 = vld [vmem:[%s270 + $0x1e0] sm:$0xff]
      %v356 = vld [vmem:[%s270 + $0x1e8] sm:$0xff]
      %v357 = vld [vmem:[%s270 + $0x1f0] sm:$0xff]
      %v358 = vld [vmem:[%s270 + $0x1f8] sm:$0xff]
      %v359 = vld [vmem:[%s270 + $0x200] sm:$0xff]
      %v360 = vld [vmem:[%s270 + $0x208] sm:$0xff]
      %v361 = vld [vmem:[%s270 + $0x210] sm:$0xff]
      %v362 = vld [vmem:[%s270 + $0x218] sm:$0xff]
      %v363 = vld [vmem:[%s270 + $0x220] sm:$0xff]
      %v364 = vld [vmem:[%s270 + $0x228] sm:$0xff]
      %v365 = vld [vmem:[%s270 + $0x230] sm:$0xff]
      %v366 = vld [vmem:[%s270 + $0x238] sm:$0xff]
      %v367 = vld [vmem:[%s270 + $0x240] sm:$0xff]
      %v368 = vld [vmem:[%s270 + $0x248] sm:$0xff]
      %v369 = vld [vmem:[%s270 + $0x250] sm:$0xff]
      %v370 = vld [vmem:[%s270 + $0x258] sm:$0xff]
      %v371 = vld [vmem:[%s270 + $0x260] sm:$0xff]
      %v372 = vld [vmem:[%s270 + $0x268] sm:$0xff]
      %v373 = vld [vmem:[%s270 + $0x270] sm:$0xff]
      %v374 = vld [vmem:[%s270 + $0x278] sm:$0xff]
      %v375 = vld [vmem:[%s270 + $0x280] sm:$0xff]
      %v376 = vld [vmem:[%s270 + $0x288] sm:$0xff]
      %v377 = vld [vmem:[%s270 + $0x290] sm:$0xff]
      %v378 = vld [vmem:[%s270 + $0x298] sm:$0xff]
      %v379 = vld [vmem:[%s270 + $0x2a0] sm:$0xff]
      %v380 = vld [vmem:[%s270 + $0x2a8] sm:$0xff]
      %v381 = vld [vmem:[%s270 + $0x2b0] sm:$0xff]
      %v382 = vld [vmem:[%s270 + $0x2b8] sm:$0xff]
      %v383 = vld [vmem:[%s270 + $0x2c0] sm:$0xff]
      %v384 = vld [vmem:[%s270 + $0x2c8] sm:$0xff]
      %v385 = vld [vmem:[%s270 + $0x2d0] sm:$0xff]
      %v386 = vld [vmem:[%s270 + $0x2d8] sm:$0xff]
      %v387 = vld [vmem:[%s270 + $0x2e0] sm:$0xff]
      %v388 = vld [vmem:[%s270 + $0x2e8] sm:$0xff]
      %v389 = vld [vmem:[%s270 + $0x2f0] sm:$0xff]
      %v390 = vld [vmem:[%s270 + $0x2f8] sm:$0xff]
      %v391 = vld [vmem:[%s270 + $0x300] sm:$0xff]
      %v392 = vld [vmem:[%s270 + $0x308] sm:$0xff]
      %v393 = vld [vmem:[%s270 + $0x310] sm:$0xff]
      %v394 = vld [vmem:[%s270 + $0x318] sm:$0xff]
      %v395 = vld [vmem:[%s270 + $0x320] sm:$0xff]
      %v396 = vld [vmem:[%s270 + $0x328] sm:$0xff]
      %v397 = vld [vmem:[%s270 + $0x330] sm:$0xff]
      %v398 = vld [vmem:[%s270 + $0x338] sm:$0xff]
      %v399 = vld [vmem:[%s270 + $0x340] sm:$0xff]
      %v400 = vld [vmem:[%s270 + $0x348] sm:$0xff]
      %v401 = vld [vmem:[%s270 + $0x350] sm:$0xff]
      %v402 = vld [vmem:[%s270 + $0x358] sm:$0xff]
      %v403 = vld [vmem:[%s270 + $0x360] sm:$0xff]
      %v404 = vld [vmem:[%s270 + $0x368] sm:$0xff]
      %v405 = vld [vmem:[%s270 + $0x370] sm:$0xff]
      %v406 = vld [vmem:[%s270 + $0x378] sm:$0xff]
      %v407 = vld [vmem:[%s270 + $0x380] sm:$0xff]
      %v408 = vld [vmem:[%s270 + $0x388] sm:$0xff]
      %v409 = vld [vmem:[%s270 + $0x390] sm:$0xff]
      %v410 = vld [vmem:[%s270 + $0x398] sm:$0xff]
      %v411 = vld [vmem:[%s270 + $0x3a0] sm:$0xff]
      %v412 = vld [vmem:[%s270 + $0x3a8] sm:$0xff]
      %v413 = vld [vmem:[%s270 + $0x3b0] sm:$0xff]
      %v414 = vld [vmem:[%s270 + $0x3b8] sm:$0xff]
      %v415 = vld [vmem:[%s270 + $0x3c0] sm:$0xff]
      %v416 = vld [vmem:[%s270 + $0x3c8] sm:$0xff]
      %v417 = vld [vmem:[%s270 + $0x3d0] sm:$0xff]
      %v418 = vld [vmem:[%s270 + $0x3d8] sm:$0xff]
      %v419 = vld [vmem:[%s270 + $0x3e0] sm:$0xff]
      %v420 = vld [vmem:[%s270 + $0x3e8] sm:$0xff]
      %v421 = vld [vmem:[%s270 + $0x3f0] sm:$0xff]
      %v422 = vld [vmem:[%s270 + $0x3f8] sm:$0xff]
      %v423 = vld [vmem:[%s270 + $0x400] sm:$0xff]
      %v424 = vld [vmem:[%s270 + $0x408] sm:$0xff]
      %v425 = vld [vmem:[%s270 + $0x410] sm:$0xff]
      %v426 = vld [vmem:[%s270 + $0x418] sm:$0xff]
      %v427 = vld [vmem:[%s270 + $0x420] sm:$0xff]
      %v428 = vld [vmem:[%s270 + $0x428] sm:$0xff]
      %v429 = vld [vmem:[%s270 + $0x430] sm:$0xff]
      %v430 = vld [vmem:[%s270 + $0x438] sm:$0xff]
      %v431 = vld [vmem:[%s270 + $0x440] sm:$0xff]
      %v432 = vld [vmem:[%s270 + $0x448] sm:$0xff]
      %v433 = vld [vmem:[%s270 + $0x450] sm:$0xff]
      %v434 = vld [vmem:[%s270 + $0x458] sm:$0xff]
      %v435 = vld [vmem:[%s270 + $0x460] sm:$0xff]
      %v436 = vld [vmem:[%s270 + $0x468] sm:$0xff]
      %v437 = vld [vmem:[%s270 + $0x470] sm:$0xff]
      %v438 = vld [vmem:[%s270 + $0x478] sm:$0xff]
      %v439 = vld [vmem:[%s270 + $0x480] sm:$0xff]
      %v440 = vld [vmem:[%s270 + $0x488] sm:$0xff]
      %v441 = vld [vmem:[%s270 + $0x490] sm:$0xff]
      %v442 = vld [vmem:[%s270 + $0x498] sm:$0xff]
      %v443 = vld [vmem:[%s270 + $0x4a0] sm:$0xff]
      %v444 = vld [vmem:[%s270 + $0x4a8] sm:$0xff]
      %v445 = vld [vmem:[%s270 + $0x4b0] sm:$0xff]
      %v446 = vld [vmem:[%s270 + $0x4b8] sm:$0xff]
      %v447 = vld [vmem:[%s270 + $0x4c0] sm:$0xff]
      %v448 = vld [vmem:[%s270 + $0x4c8] sm:$0xff]
      %v449 = vld [vmem:[%s270 + $0x4d0] sm:$0xff]
      %v450 = vld [vmem:[%s270 + $0x4d8] sm:$0xff]
      %v451 = vld [vmem:[%s270 + $0x4e0] sm:$0xff]
      %v452 = vld [vmem:[%s270 + $0x4e8] sm:$0xff]
      %v453 = vld [vmem:[%s270 + $0x4f0] sm:$0xff]
      %v454 = vld [vmem:[%s270 + $0x4f8] sm:$0xff]
      %v455 = vld [vmem:[%s270 + $0x500] sm:$0xff]
      %v456 = vld [vmem:[%s270 + $0x508] sm:$0xff]
      %v457 = vld [vmem:[%s270 + $0x510] sm:$0xff]
      %v458 = vld [vmem:[%s270 + $0x518] sm:$0xff]
      %v459 = vld [vmem:[%s270 + $0x520] sm:$0xff]
      %v460 = vld [vmem:[%s270 + $0x528] sm:$0xff]
      %v461 = vld [vmem:[%s270 + $0x530] sm:$0xff]
      %v462 = vld [vmem:[%s270 + $0x538] sm:$0xff]
      %v463 = vld [vmem:[%s270 + $0x540] sm:$0xff]
      %v464 = vld [vmem:[%s270 + $0x548] sm:$0xff]
      %v465 = vld [vmem:[%s270 + $0x550] sm:$0xff]
      %v466 = vld [vmem:[%s270 + $0x558] sm:$0xff]
      %v467 = vld [vmem:[%s270 + $0x560] sm:$0xff]
      %v468 = vld [vmem:[%s270 + $0x568] sm:$0xff]
      %v469 = vld [vmem:[%s270 + $0x570] sm:$0xff]
      %v470 = vld [vmem:[%s270 + $0x578] sm:$0xff]
      %v471 = vld [vmem:[%s270 + $0x580] sm:$0xff]
      %v472 = vld [vmem:[%s270 + $0x588] sm:$0xff]
      %v473 = vld [vmem:[%s270 + $0x590] sm:$0xff]
      %v474 = vld [vmem:[%s270 + $0x598] sm:$0xff]
      %v475 = vld [vmem:[%s270 + $0x5a0] sm:$0xff]
      %v476 = vld [vmem:[%s270 + $0x5a8] sm:$0xff]
      %v477 = vld [vmem:[%s270 + $0x5b0] sm:$0xff]
      %v478 = vld [vmem:[%s270 + $0x5b8] sm:$0xff]
      %v479 = vld [vmem:[%s270 + $0x5c0] sm:$0xff]
      %v480 = vld [vmem:[%s270 + $0x5c8] sm:$0xff]
      %v481 = vld [vmem:[%s270 + $0x5d0] sm:$0xff]
      %v482 = vld [vmem:[%s270 + $0x5d8] sm:$0xff]
      %v483 = vld [vmem:[%s270 + $0x5e0] sm:$0xff]
      %v484 = vld [vmem:[%s270 + $0x5e8] sm:$0xff]
      %v485 = vld [vmem:[%s270 + $0x5f0] sm:$0xff]
      %v486 = vld [vmem:[%s270 + $0x5f8] sm:$0xff]
      %v487 = vld [vmem:[%s270 + $0x600] sm:$0xff]
      %v488 = vld [vmem:[%s270 + $0x608] sm:$0xff]
      %v489 = vld [vmem:[%s270 + $0x610] sm:$0xff]
      %v490 = vld [vmem:[%s270 + $0x618] sm:$0xff]
      %v491 = vld [vmem:[%s270 + $0x620] sm:$0xff]
      %v492 = vld [vmem:[%s270 + $0x628] sm:$0xff]
      %v493 = vld [vmem:[%s270 + $0x630] sm:$0xff]
      %v494 = vld [vmem:[%s270 + $0x638] sm:$0xff]
      %v495 = vld [vmem:[%s270 + $0x640] sm:$0xff]
      %v496 = vld [vmem:[%s270 + $0x648] sm:$0xff]
      %v497 = vld [vmem:[%s270 + $0x650] sm:$0xff]
      %v498 = vld [vmem:[%s270 + $0x658] sm:$0xff]
      %v499 = vld [vmem:[%s270 + $0x660] sm:$0xff]
      %v500 = vld [vmem:[%s270 + $0x668] sm:$0xff]
      %v501 = vld [vmem:[%s270 + $0x670] sm:$0xff]
      %v502 = vld [vmem:[%s270 + $0x678] sm:$0xff]
      %v503 = vld [vmem:[%s270 + $0x680] sm:$0xff]
      %v504 = vld [vmem:[%s270 + $0x688] sm:$0xff]
      %v505 = vld [vmem:[%s270 + $0x690] sm:$0xff]
      %v506 = vld [vmem:[%s270 + $0x698] sm:$0xff]
      %v507 = vld [vmem:[%s270 + $0x6a0] sm:$0xff]
      %v508 = vld [vmem:[%s270 + $0x6a8] sm:$0xff]
      %v509 = vld [vmem:[%s270 + $0x6b0] sm:$0xff]
      %v510 = vld [vmem:[%s270 + $0x6b8] sm:$0xff]
      %v511 = vld [vmem:[%s270 + $0x6c0] sm:$0xff]
      %v512 = vld [vmem:[%s270 + $0x6c8] sm:$0xff]
      %v513 = vld [vmem:[%s270 + $0x6d0] sm:$0xff]
      %v514 = vld [vmem:[%s270 + $0x6d8] sm:$0xff]
      %v515 = vld [vmem:[%s270 + $0x6e0] sm:$0xff]
      %v516 = vld [vmem:[%s270 + $0x6e8] sm:$0xff]
      %v517 = vld [vmem:[%s270 + $0x6f0] sm:$0xff]
      %v518 = vld [vmem:[%s270 + $0x6f8] sm:$0xff]
      %v519 = vld [vmem:[%s270 + $0x700] sm:$0xff]
      %v520 = vld [vmem:[%s270 + $0x708] sm:$0xff]
      %v521 = vld [vmem:[%s270 + $0x710] sm:$0xff]
      %v522 = vld [vmem:[%s270 + $0x718] sm:$0xff]
      %v523 = vld [vmem:[%s270 + $0x720] sm:$0xff]
      %v524 = vld [vmem:[%s270 + $0x728] sm:$0xff]
      %v525 = vld [vmem:[%s270 + $0x730] sm:$0xff]
      %v526 = vld [vmem:[%s270 + $0x738] sm:$0xff]
      %v527 = vld [vmem:[%s270 + $0x740] sm:$0xff]
      %v528 = vld [vmem:[%s270 + $0x748] sm:$0xff]
      %v529 = vld [vmem:[%s270 + $0x750] sm:$0xff]
      %v530 = vld [vmem:[%s270 + $0x758] sm:$0xff]
      %v531 = vld [vmem:[%s270 + $0x760] sm:$0xff]
      %v532 = vld [vmem:[%s270 + $0x768] sm:$0xff]
      %v533 = vld [vmem:[%s270 + $0x770] sm:$0xff]
      %v534 = vld [vmem:[%s270 + $0x778] sm:$0xff]
      %v535 = vld [vmem:[%s270 + $0x780] sm:$0xff]
      %v536 = vld [vmem:[%s270 + $0x788] sm:$0xff]
      %v537 = vld [vmem:[%s270 + $0x790] sm:$0xff]
      %v538 = vld [vmem:[%s270 + $0x798] sm:$0xff]
      %v539 = vld [vmem:[%s270 + $0x7a0] sm:$0xff]
      %v540 = vld [vmem:[%s270 + $0x7a8] sm:$0xff]
      %v541 = vld [vmem:[%s270 + $0x7b0] sm:$0xff]
      %v542 = vld [vmem:[%s270 + $0x7b8] sm:$0xff]
      %v543 = vld [vmem:[%s270 + $0x7c0] sm:$0xff]
      %v544 = vld [vmem:[%s270 + $0x7c8] sm:$0xff]
      %v545 = vld [vmem:[%s270 + $0x7d0] sm:$0xff]
      %v546 = vld [vmem:[%s270 + $0x7d8] sm:$0xff]
      %v547 = vld [vmem:[%s270 + $0x7e0] sm:$0xff]
      %v548 = vld [vmem:[%s270 + $0x7e8] sm:$0xff]
      %v549 = vld [vmem:[%s270 + $0x7f0] sm:$0xff]
      %v550 = vld [vmem:[%s270 + $0x7f8] sm:$0xff]
      %v551 = vld [vmem:[%s270 + $0x800] sm:$0xff]
      %v552 = vld [vmem:[%s270 + $0x808] sm:$0xff]
      %v553 = vld [vmem:[%s270 + $0x810] sm:$0xff]
      %v554 = vld [vmem:[%s270 + $0x818] sm:$0xff]
      %v555 = vld [vmem:[%s270 + $0x820] sm:$0xff]
      %v556 = vld [vmem:[%s270 + $0x828] sm:$0xff]
      %v557 = vld [vmem:[%s270 + $0x830] sm:$0xff]
      %v558 = vld [vmem:[%s270 + $0x838] sm:$0xff]
      %v559 = vld [vmem:[%s270 + $0x840] sm:$0xff]
      %v560 = vld [vmem:[%s270 + $0x848] sm:$0xff]
      %v561 = vld [vmem:[%s270 + $0x850] sm:$0xff]
      %v562 = vld [vmem:[%s270 + $0x858] sm:$0xff]
      %v563 = vld [vmem:[%s270 + $0x860] sm:$0xff]
      %v564 = vld [vmem:[%s270 + $0x868] sm:$0xff]
      %v565 = vld [vmem:[%s270 + $0x870] sm:$0xff]
      %v566 = vld [vmem:[%s270 + $0x878] sm:$0xff]
      %v567 = vld [vmem:[%s270 + $0x880] sm:$0xff]
      %v568 = vld [vmem:[%s270 + $0x888] sm:$0xff]
      %v569 = vld [vmem:[%s270 + $0x890] sm:$0xff]
      %v570 = vld [vmem:[%s270 + $0x898] sm:$0xff]
      %v571 = vld [vmem:[%s270 + $0x8a0] sm:$0xff]
      %v572 = vld [vmem:[%s270 + $0x8a8] sm:$0xff]
      %v573 = vld [vmem:[%s270 + $0x8b0] sm:$0xff]
      %v574 = vld [vmem:[%s270 + $0x8b8] sm:$0xff]
      %v575 = vld [vmem:[%s270 + $0x8c0] sm:$0xff]
      %v576 = vld [vmem:[%s270 + $0x8c8] sm:$0xff]
      %v577 = vld [vmem:[%s270 + $0x8d0] sm:$0xff]
      %v578 = vld [vmem:[%s270 + $0x8d8] sm:$0xff]
      %v579 = vld [vmem:[%s270 + $0x8e0] sm:$0xff]
      %v580 = vld [vmem:[%s270 + $0x8e8] sm:$0xff]
      %v581 = vld [vmem:[%s270 + $0x8f0] sm:$0xff]
      %v582 = vld [vmem:[%s270 + $0x8f8] sm:$0xff]
      %v583 = vld [vmem:[%s270 + $0x900] sm:$0xff]
      %v584 = vld [vmem:[%s270 + $0x908] sm:$0xff]
      %v585 = vld [vmem:[%s270 + $0x910] sm:$0xff]
      %v586 = vld [vmem:[%s270 + $0x918] sm:$0xff]
      %v587 = vld [vmem:[%s270 + $0x920] sm:$0xff]
      %v588 = vld [vmem:[%s270 + $0x928] sm:$0xff]
      %v589 = vld [vmem:[%s270 + $0x930] sm:$0xff]
      %v590 = vld [vmem:[%s270 + $0x938] sm:$0xff]
      %v591 = vld [vmem:[%s270 + $0x940] sm:$0xff]
      %v592 = vld [vmem:[%s270 + $0x948] sm:$0xff]
      %v593 = vld [vmem:[%s270 + $0x950] sm:$0xff]
      %v594 = vld [vmem:[%s270 + $0x958] sm:$0xff]
      %v595 = vld [vmem:[%s270 + $0x960] sm:$0xff]
      %v596 = vld [vmem:[%s270 + $0x968] sm:$0xff]
      %v597 = vld [vmem:[%s270 + $0x970] sm:$0xff]
      %v598 = vld [vmem:[%s270 + $0x978] sm:$0xff]
      %v599 = vld [vmem:[%s270 + $0x980] sm:$0xff]
      %v600 = vld [vmem:[%s270 + $0x988] sm:$0xff]
      %v601 = vld [vmem:[%s270 + $0x990] sm:$0xff]
      %v602 = vld [vmem:[%s270 + $0x998] sm:$0xff]
      %v603 = vld [vmem:[%s270 + $0x9a0] sm:$0xff]
      %v604 = vld [vmem:[%s270 + $0x9a8] sm:$0xff]
      %v605 = vld [vmem:[%s270 + $0x9b0] sm:$0xff]
      %v606 = vld [vmem:[%s270 + $0x9b8] sm:$0xff]
      %v607 = vld [vmem:[%s270 + $0x9c0] sm:$0xff]
      %v608 = vld [vmem:[%s270 + $0x9c8] sm:$0xff]
      %v609 = vld [vmem:[%s270 + $0x9d0] sm:$0xff]
      %v610 = vld [vmem:[%s270 + $0x9d8] sm:$0xff]
      %v611 = vld [vmem:[%s270 + $0x9e0] sm:$0xff]
      %v612 = vld [vmem:[%s270 + $0x9e8] sm:$0xff]
      %v613 = vld [vmem:[%s270 + $0x9f0] sm:$0xff]
      %v614 = vld [vmem:[%s270 + $0x9f8] sm:$0xff]
      %v625 = vunpack.c.l.b16 %v285
      %v626 = vunpack.c.h.b16 %v285
      %v627 = vunpack.c.l.b16 %v286
      %v628 = vunpack.c.h.b16 %v286
      %v629 = vunpack.c.l.b16 %v287
      %v630 = vunpack.c.h.b16 %v287
      %v631 = vunpack.c.l.b16 %v288
      %v632 = vunpack.c.h.b16 %v288
      %v633 = vunpack.c.l.b16 %v289
      %v634 = vunpack.c.h.b16 %v289
      %v635 = vunpack.c.l.b16 %v290
      %v636 = vunpack.c.h.b16 %v290
      %v637 = vunpack.c.l.b16 %v291
      %v638 = vunpack.c.h.b16 %v291
      %v639 = vunpack.c.l.b16 %v292
      %v640 = vunpack.c.h.b16 %v292
      %v641 = vunpack.c.l.b16 %v293
      %v642 = vunpack.c.h.b16 %v293
      %v643 = vunpack.c.l.b16 %v294
      %v644 = vunpack.c.h.b16 %v294
      %v645 = vpack.c.b16 %v625, %v625
      %v646 = vpack.c.b16 %v626, %v626
      %v647 = vpack.c.b16 %v627, %v627
      %v648 = vpack.c.b16 %v628, %v628
      %v649 = vpack.c.b16 %v629, %v629
      %v650 = vpack.c.b16 %v630, %v630
      %v651 = vpack.c.b16 %v631, %v631
      %v652 = vpack.c.b16 %v632, %v632
      %v653 = vpack.c.b16 %v633, %v633
      %v654 = vpack.c.b16 %v634, %v634
      %v655 = vpack.c.b16 %v635, %v635
      %v656 = vpack.c.b16 %v636, %v636
      %v657 = vpack.c.b16 %v637, %v637
      %v658 = vpack.c.b16 %v638, %v638
      %v659 = vpack.c.b16 %v639, %v639
      %v660 = vpack.c.b16 %v640, %v640
      %v661 = vpack.c.b16 %v641, %v641
      %v662 = vpack.c.b16 %v642, %v642
      %v663 = vpack.c.b16 %v643, %v643
      %v664 = vpack.c.b16 %v644, %v644
      %v1005 = vunpack.c.l.b16 %v295
      %v1006 = vunpack.c.h.b16 %v295
      %v1007 = vunpack.c.l.b16 %v296
      %v1008 = vunpack.c.h.b16 %v296
      %v1009 = vunpack.c.l.b16 %v297
      %v1010 = vunpack.c.h.b16 %v297
      %v1011 = vunpack.c.l.b16 %v298
      %v1012 = vunpack.c.h.b16 %v298
      %v1013 = vunpack.c.l.b16 %v299
      %v1014 = vunpack.c.h.b16 %v299
      %v1015 = vunpack.c.l.b16 %v300
      %v1016 = vunpack.c.h.b16 %v300
      %v1017 = vunpack.c.l.b16 %v301
      %v1018 = vunpack.c.h.b16 %v301
      %v1019 = vunpack.c.l.b16 %v302
      %v1020 = vunpack.c.h.b16 %v302
      %v1021 = vunpack.c.l.b16 %v303
      %v1022 = vunpack.c.h.b16 %v303
      %v1023 = vunpack.c.l.b16 %v304
      %v1024 = vunpack.c.h.b16 %v304
      %v1025 = vunpack.c.l.b16 %v305
      %v1026 = vunpack.c.h.b16 %v305
      %v1027 = vunpack.c.l.b16 %v306
      %v1028 = vunpack.c.h.b16 %v306
      %v1029 = vunpack.c.l.b16 %v307
      %v1030 = vunpack.c.h.b16 %v307
      %v1031 = vunpack.c.l.b16 %v308
      %v1032 = vunpack.c.h.b16 %v308
      %v1033 = vunpack.c.l.b16 %v309
      %v1034 = vunpack.c.h.b16 %v309
      %v1035 = vunpack.c.l.b16 %v310
      %v1036 = vunpack.c.h.b16 %v310
      %v1037 = vunpack.c.l.b16 %v311
      %v1038 = vunpack.c.h.b16 %v311
      %v1039 = vunpack.c.l.b16 %v312
      %v1040 = vunpack.c.h.b16 %v312
      %v1041 = vunpack.c.l.b16 %v313
      %v1042 = vunpack.c.h.b16 %v313
      %v1043 = vunpack.c.l.b16 %v314
      %v1044 = vunpack.c.h.b16 %v314
      %v1045 = vunpack.c.l.b16 %v315
      %v1046 = vunpack.c.h.b16 %v315
      %v1047 = vunpack.c.l.b16 %v316
      %v1048 = vunpack.c.h.b16 %v316
      %v1049 = vunpack.c.l.b16 %v317
      %v1050 = vunpack.c.h.b16 %v317
      %v1051 = vunpack.c.l.b16 %v318
      %v1052 = vunpack.c.h.b16 %v318
      %v1053 = vunpack.c.l.b16 %v319
      %v1054 = vunpack.c.h.b16 %v319
      %v1055 = vunpack.c.l.b16 %v320
      %v1056 = vunpack.c.h.b16 %v320
      %v1057 = vunpack.c.l.b16 %v321
      %v1058 = vunpack.c.h.b16 %v321
      %v1059 = vunpack.c.l.b16 %v322
      %v1060 = vunpack.c.h.b16 %v322
      %v1061 = vunpack.c.l.b16 %v323
      %v1062 = vunpack.c.h.b16 %v323
      %v1063 = vunpack.c.l.b16 %v324
      %v1064 = vunpack.c.h.b16 %v324
      %v1065 = vunpack.c.l.b16 %v325
      %v1066 = vunpack.c.h.b16 %v325
      %v1067 = vunpack.c.l.b16 %v326
      %v1068 = vunpack.c.h.b16 %v326
      %v1069 = vunpack.c.l.b16 %v327
      %v1070 = vunpack.c.h.b16 %v327
      %v1071 = vunpack.c.l.b16 %v328
      %v1072 = vunpack.c.h.b16 %v328
      %v1073 = vunpack.c.l.b16 %v329
      %v1074 = vunpack.c.h.b16 %v329
      %v1075 = vunpack.c.l.b16 %v330
      %v1076 = vunpack.c.h.b16 %v330
      %v1077 = vunpack.c.l.b16 %v331
      %v1078 = vunpack.c.h.b16 %v331
      %v1079 = vunpack.c.l.b16 %v332
      %v1080 = vunpack.c.h.b16 %v332
      %v1081 = vunpack.c.l.b16 %v333
      %v1082 = vunpack.c.h.b16 %v333
      %v1083 = vunpack.c.l.b16 %v334
      %v1084 = vunpack.c.h.b16 %v334
      %v1085 = vunpack.c.l.b16 %v335
      %v1086 = vunpack.c.h.b16 %v335
      %v1087 = vunpack.c.l.b16 %v336
      %v1088 = vunpack.c.h.b16 %v336
      %v1089 = vunpack.c.l.b16 %v337
      %v1090 = vunpack.c.h.b16 %v337
      %v1091 = vunpack.c.l.b16 %v338
      %v1092 = vunpack.c.h.b16 %v338
      %v1093 = vunpack.c.l.b16 %v339
      %v1094 = vunpack.c.h.b16 %v339
      %v1095 = vunpack.c.l.b16 %v340
      %v1096 = vunpack.c.h.b16 %v340
      %v1097 = vunpack.c.l.b16 %v341
      %v1098 = vunpack.c.h.b16 %v341
      %v1099 = vunpack.c.l.b16 %v342
      %v1100 = vunpack.c.h.b16 %v342
      %v1101 = vunpack.c.l.b16 %v343
      %v1102 = vunpack.c.h.b16 %v343
      %v1103 = vunpack.c.l.b16 %v344
      %v1104 = vunpack.c.h.b16 %v344
      %v1105 = vunpack.c.l.b16 %v345
      %v1106 = vunpack.c.h.b16 %v345
      %v1107 = vunpack.c.l.b16 %v346
      %v1108 = vunpack.c.h.b16 %v346
      %v1109 = vunpack.c.l.b16 %v347
      %v1110 = vunpack.c.h.b16 %v347
      %v1111 = vunpack.c.l.b16 %v348
      %v1112 = vunpack.c.h.b16 %v348
      %v1113 = vunpack.c.l.b16 %v349
      %v1114 = vunpack.c.h.b16 %v349
      %v1115 = vunpack.c.l.b16 %v350
      %v1116 = vunpack.c.h.b16 %v350
      %v1117 = vunpack.c.l.b16 %v351
      %v1118 = vunpack.c.h.b16 %v351
      %v1119 = vunpack.c.l.b16 %v352
      %v1120 = vunpack.c.h.b16 %v352
      %v1121 = vunpack.c.l.b16 %v353
      %v1122 = vunpack.c.h.b16 %v353
      %v1123 = vunpack.c.l.b16 %v354
      %v1124 = vunpack.c.h.b16 %v354
      %v1125 = vunpack.c.l.b16 %v355
      %v1126 = vunpack.c.h.b16 %v355
      %v1127 = vunpack.c.l.b16 %v356
      %v1128 = vunpack.c.h.b16 %v356
      %v1129 = vunpack.c.l.b16 %v357
      %v1130 = vunpack.c.h.b16 %v357
      %v1131 = vunpack.c.l.b16 %v358
      %v1132 = vunpack.c.h.b16 %v358
      %v1133 = vunpack.c.l.b16 %v359
      %v1134 = vunpack.c.h.b16 %v359
      %v1135 = vunpack.c.l.b16 %v360
      %v1136 = vunpack.c.h.b16 %v360
      %v1137 = vunpack.c.l.b16 %v361
      %v1138 = vunpack.c.h.b16 %v361
      %v1139 = vunpack.c.l.b16 %v362
      %v1140 = vunpack.c.h.b16 %v362
      %v1141 = vunpack.c.l.b16 %v363
      %v1142 = vunpack.c.h.b16 %v363
      %v1143 = vunpack.c.l.b16 %v364
      %v1144 = vunpack.c.h.b16 %v364
      %v1145 = vunpack.c.l.b16 %v365
      %v1146 = vunpack.c.h.b16 %v365
      %v1147 = vunpack.c.l.b16 %v366
      %v1148 = vunpack.c.h.b16 %v366
      %v1149 = vunpack.c.l.b16 %v367
      %v1150 = vunpack.c.h.b16 %v367
      %v1151 = vunpack.c.l.b16 %v368
      %v1152 = vunpack.c.h.b16 %v368
      %v1153 = vunpack.c.l.b16 %v369
      %v1154 = vunpack.c.h.b16 %v369
      %v1155 = vunpack.c.l.b16 %v370
      %v1156 = vunpack.c.h.b16 %v370
      %v1157 = vunpack.c.l.b16 %v371
      %v1158 = vunpack.c.h.b16 %v371
      %v1159 = vunpack.c.l.b16 %v372
      %v1160 = vunpack.c.h.b16 %v372
      %v1161 = vunpack.c.l.b16 %v373
      %v1162 = vunpack.c.h.b16 %v373
      %v1163 = vunpack.c.l.b16 %v374
      %v1164 = vunpack.c.h.b16 %v374
      %v1165 = vunpack.c.l.b16 %v375
      %v1166 = vunpack.c.h.b16 %v375
      %v1167 = vunpack.c.l.b16 %v376
      %v1168 = vunpack.c.h.b16 %v376
      %v1169 = vunpack.c.l.b16 %v377
      %v1170 = vunpack.c.h.b16 %v377
      %v1171 = vunpack.c.l.b16 %v378
      %v1172 = vunpack.c.h.b16 %v378
      %v1173 = vunpack.c.l.b16 %v379
      %v1174 = vunpack.c.h.b16 %v379
      %v1175 = vunpack.c.l.b16 %v380
      %v1176 = vunpack.c.h.b16 %v380
      %v1177 = vunpack.c.l.b16 %v381
      %v1178 = vunpack.c.h.b16 %v381
      %v1179 = vunpack.c.l.b16 %v382
      %v1180 = vunpack.c.h.b16 %v382
      %v1181 = vunpack.c.l.b16 %v383
      %v1182 = vunpack.c.h.b16 %v383
      %v1183 = vunpack.c.l.b16 %v384
      %v1184 = vunpack.c.h.b16 %v384
      %v1185 = vunpack.c.l.b16 %v385
      %v1186 = vunpack.c.h.b16 %v385
      %v1187 = vunpack.c.l.b16 %v386
      %v1188 = vunpack.c.h.b16 %v386
      %v1189 = vunpack.c.l.b16 %v387
      %v1190 = vunpack.c.h.b16 %v387
      %v1191 = vunpack.c.l.b16 %v388
      %v1192 = vunpack.c.h.b16 %v388
      %v1193 = vunpack.c.l.b16 %v389
      %v1194 = vunpack.c.h.b16 %v389
      %v1195 = vunpack.c.l.b16 %v390
      %v1196 = vunpack.c.h.b16 %v390
      %v1197 = vunpack.c.l.b16 %v391
      %v1198 = vunpack.c.h.b16 %v391
      %v1199 = vunpack.c.l.b16 %v392
      %v1200 = vunpack.c.h.b16 %v392
      %v1201 = vunpack.c.l.b16 %v393
      %v1202 = vunpack.c.h.b16 %v393
      %v1203 = vunpack.c.l.b16 %v394
      %v1204 = vunpack.c.h.b16 %v394
      %v1205 = vunpack.c.l.b16 %v395
      %v1206 = vunpack.c.h.b16 %v395
      %v1207 = vunpack.c.l.b16 %v396
      %v1208 = vunpack.c.h.b16 %v396
      %v1209 = vunpack.c.l.b16 %v397
      %v1210 = vunpack.c.h.b16 %v397
      %v1211 = vunpack.c.l.b16 %v398
      %v1212 = vunpack.c.h.b16 %v398
      %v1213 = vunpack.c.l.b16 %v399
      %v1214 = vunpack.c.h.b16 %v399
      %v1215 = vunpack.c.l.b16 %v400
      %v1216 = vunpack.c.h.b16 %v400
      %v1217 = vunpack.c.l.b16 %v401
      %v1218 = vunpack.c.h.b16 %v401
      %v1219 = vunpack.c.l.b16 %v402
      %v1220 = vunpack.c.h.b16 %v402
      %v1221 = vunpack.c.l.b16 %v403
      %v1222 = vunpack.c.h.b16 %v403
      %v1223 = vunpack.c.l.b16 %v404
      %v1224 = vunpack.c.h.b16 %v404
      %v1225 = vunpack.c.l.b16 %v405
      %v1226 = vunpack.c.h.b16 %v405
      %v1227 = vunpack.c.l.b16 %v406
      %v1228 = vunpack.c.h.b16 %v406
      %v1229 = vunpack.c.l.b16 %v407
      %v1230 = vunpack.c.h.b16 %v407
      %v1231 = vunpack.c.l.b16 %v408
      %v1232 = vunpack.c.h.b16 %v408
      %v1233 = vunpack.c.l.b16 %v409
      %v1234 = vunpack.c.h.b16 %v409
      %v1235 = vunpack.c.l.b16 %v410
      %v1236 = vunpack.c.h.b16 %v410
      %v1237 = vunpack.c.l.b16 %v411
      %v1238 = vunpack.c.h.b16 %v411
      %v1239 = vunpack.c.l.b16 %v412
      %v1240 = vunpack.c.h.b16 %v412
      %v1241 = vunpack.c.l.b16 %v413
      %v1242 = vunpack.c.h.b16 %v413
      %v1243 = vunpack.c.l.b16 %v414
      %v1244 = vunpack.c.h.b16 %v414
      %v1245 = vunpack.c.l.b16 %v415
      %v1246 = vunpack.c.h.b16 %v415
      %v1247 = vunpack.c.l.b16 %v416
      %v1248 = vunpack.c.h.b16 %v416
      %v1249 = vunpack.c.l.b16 %v417
      %v1250 = vunpack.c.h.b16 %v417
      %v1251 = vunpack.c.l.b16 %v418
      %v1252 = vunpack.c.h.b16 %v418
      %v1253 = vunpack.c.l.b16 %v419
      %v1254 = vunpack.c.h.b16 %v419
      %v1255 = vunpack.c.l.b16 %v420
      %v1256 = vunpack.c.h.b16 %v420
      %v1257 = vunpack.c.l.b16 %v421
      %v1258 = vunpack.c.h.b16 %v421
      %v1259 = vunpack.c.l.b16 %v422
      %v1260 = vunpack.c.h.b16 %v422
      %v1261 = vunpack.c.l.b16 %v423
      %v1262 = vunpack.c.h.b16 %v423
      %v1263 = vunpack.c.l.b16 %v424
      %v1264 = vunpack.c.h.b16 %v424
      %v1265 = vunpack.c.l.b16 %v425
      %v1266 = vunpack.c.h.b16 %v425
      %v1267 = vunpack.c.l.b16 %v426
      %v1268 = vunpack.c.h.b16 %v426
      %v1269 = vunpack.c.l.b16 %v427
      %v1270 = vunpack.c.h.b16 %v427
      %v1271 = vunpack.c.l.b16 %v428
      %v1272 = vunpack.c.h.b16 %v428
      %v1273 = vunpack.c.l.b16 %v429
      %v1274 = vunpack.c.h.b16 %v429
      %v1275 = vunpack.c.l.b16 %v430
      %v1276 = vunpack.c.h.b16 %v430
      %v1277 = vunpack.c.l.b16 %v431
      %v1278 = vunpack.c.h.b16 %v431
      %v1279 = vunpack.c.l.b16 %v432
      %v1280 = vunpack.c.h.b16 %v432
      %v1281 = vunpack.c.l.b16 %v433
      %v1282 = vunpack.c.h.b16 %v433
      %v1283 = vunpack.c.l.b16 %v434
      %v1284 = vunpack.c.h.b16 %v434
      %v1285 = vunpack.c.l.b16 %v435
      %v1286 = vunpack.c.h.b16 %v435
      %v1287 = vunpack.c.l.b16 %v436
      %v1288 = vunpack.c.h.b16 %v436
      %v1289 = vunpack.c.l.b16 %v437
      %v1290 = vunpack.c.h.b16 %v437
      %v1291 = vunpack.c.l.b16 %v438
      %v1292 = vunpack.c.h.b16 %v438
      %v1293 = vunpack.c.l.b16 %v439
      %v1294 = vunpack.c.h.b16 %v439
      %v1295 = vunpack.c.l.b16 %v440
      %v1296 = vunpack.c.h.b16 %v440
      %v1297 = vunpack.c.l.b16 %v441
      %v1298 = vunpack.c.h.b16 %v441
      %v1299 = vunpack.c.l.b16 %v442
      %v1300 = vunpack.c.h.b16 %v442
      %v1301 = vunpack.c.l.b16 %v443
      %v1302 = vunpack.c.h.b16 %v443
      %v1303 = vunpack.c.l.b16 %v444
      %v1304 = vunpack.c.h.b16 %v444
      %v1305 = vunpack.c.l.b16 %v445
      %v1306 = vunpack.c.h.b16 %v445
      %v1307 = vunpack.c.l.b16 %v446
      %v1308 = vunpack.c.h.b16 %v446
      %v1309 = vunpack.c.l.b16 %v447
      %v1310 = vunpack.c.h.b16 %v447
      %v1311 = vunpack.c.l.b16 %v448
      %v1312 = vunpack.c.h.b16 %v448
      %v1313 = vunpack.c.l.b16 %v449
      %v1314 = vunpack.c.h.b16 %v449
      %v1315 = vunpack.c.l.b16 %v450
      %v1316 = vunpack.c.h.b16 %v450
      %v1317 = vunpack.c.l.b16 %v451
      %v1318 = vunpack.c.h.b16 %v451
      %v1319 = vunpack.c.l.b16 %v452
      %v1320 = vunpack.c.h.b16 %v452
      %v1321 = vunpack.c.l.b16 %v453
      %v1322 = vunpack.c.h.b16 %v453
      %v1323 = vunpack.c.l.b16 %v454
      %v1324 = vunpack.c.h.b16 %v454
      %v1325 = vunpack.c.l.b16 %v455
      %v1326 = vunpack.c.h.b16 %v455
      %v1327 = vunpack.c.l.b16 %v456
      %v1328 = vunpack.c.h.b16 %v456
      %v1329 = vunpack.c.l.b16 %v457
      %v1330 = vunpack.c.h.b16 %v457
      %v1331 = vunpack.c.l.b16 %v458
      %v1332 = vunpack.c.h.b16 %v458
      %v1333 = vunpack.c.l.b16 %v459
      %v1334 = vunpack.c.h.b16 %v459
      %v1335 = vunpack.c.l.b16 %v460
      %v1336 = vunpack.c.h.b16 %v460
      %v1337 = vunpack.c.l.b16 %v461
      %v1338 = vunpack.c.h.b16 %v461
      %v1339 = vunpack.c.l.b16 %v462
      %v1340 = vunpack.c.h.b16 %v462
      %v1341 = vunpack.c.l.b16 %v463
      %v1342 = vunpack.c.h.b16 %v463
      %v1343 = vunpack.c.l.b16 %v464
      %v1344 = vunpack.c.h.b16 %v464
      %v1345 = vunpack.c.l.b16 %v465
      %v1346 = vunpack.c.h.b16 %v465
      %v1347 = vunpack.c.l.b16 %v466
      %v1348 = vunpack.c.h.b16 %v466
      %v1349 = vunpack.c.l.b16 %v467
      %v1350 = vunpack.c.h.b16 %v467
      %v1351 = vunpack.c.l.b16 %v468
      %v1352 = vunpack.c.h.b16 %v468
      %v1353 = vunpack.c.l.b16 %v469
      %v1354 = vunpack.c.h.b16 %v469
      %v1355 = vunpack.c.l.b16 %v470
      %v1356 = vunpack.c.h.b16 %v470
      %v1357 = vunpack.c.l.b16 %v471
      %v1358 = vunpack.c.h.b16 %v471
      %v1359 = vunpack.c.l.b16 %v472
      %v1360 = vunpack.c.h.b16 %v472
      %v1361 = vunpack.c.l.b16 %v473
      %v1362 = vunpack.c.h.b16 %v473
      %v1363 = vunpack.c.l.b16 %v474
      %v1364 = vunpack.c.h.b16 %v474
      %v1365 = vunpack.c.l.b16 %v475
      %v1366 = vunpack.c.h.b16 %v475
      %v1367 = vunpack.c.l.b16 %v476
      %v1368 = vunpack.c.h.b16 %v476
      %v1369 = vunpack.c.l.b16 %v477
      %v1370 = vunpack.c.h.b16 %v477
      %v1371 = vunpack.c.l.b16 %v478
      %v1372 = vunpack.c.h.b16 %v478
      %v1373 = vunpack.c.l.b16 %v479
      %v1374 = vunpack.c.h.b16 %v479
      %v1375 = vunpack.c.l.b16 %v480
      %v1376 = vunpack.c.h.b16 %v480
      %v1377 = vunpack.c.l.b16 %v481
      %v1378 = vunpack.c.h.b16 %v481
      %v1379 = vunpack.c.l.b16 %v482
      %v1380 = vunpack.c.h.b16 %v482
      %v1381 = vunpack.c.l.b16 %v483
      %v1382 = vunpack.c.h.b16 %v483
      %v1383 = vunpack.c.l.b16 %v484
      %v1384 = vunpack.c.h.b16 %v484
      %v1385 = vunpack.c.l.b16 %v485
      %v1386 = vunpack.c.h.b16 %v485
      %v1387 = vunpack.c.l.b16 %v486
      %v1388 = vunpack.c.h.b16 %v486
      %v1389 = vunpack.c.l.b16 %v487
      %v1390 = vunpack.c.h.b16 %v487
      %v1391 = vunpack.c.l.b16 %v488
      %v1392 = vunpack.c.h.b16 %v488
      %v1393 = vunpack.c.l.b16 %v489
      %v1394 = vunpack.c.h.b16 %v489
      %v1395 = vunpack.c.l.b16 %v490
      %v1396 = vunpack.c.h.b16 %v490
      %v1397 = vunpack.c.l.b16 %v491
      %v1398 = vunpack.c.h.b16 %v491
      %v1399 = vunpack.c.l.b16 %v492
      %v1400 = vunpack.c.h.b16 %v492
      %v1401 = vunpack.c.l.b16 %v493
      %v1402 = vunpack.c.h.b16 %v493
      %v1403 = vunpack.c.l.b16 %v494
      %v1404 = vunpack.c.h.b16 %v494
      %v1405 = vunpack.c.l.b16 %v495
      %v1406 = vunpack.c.h.b16 %v495
      %v1407 = vunpack.c.l.b16 %v496
      %v1408 = vunpack.c.h.b16 %v496
      %v1409 = vunpack.c.l.b16 %v497
      %v1410 = vunpack.c.h.b16 %v497
      %v1411 = vunpack.c.l.b16 %v498
      %v1412 = vunpack.c.h.b16 %v498
      %v1413 = vunpack.c.l.b16 %v499
      %v1414 = vunpack.c.h.b16 %v499
      %v1415 = vunpack.c.l.b16 %v500
      %v1416 = vunpack.c.h.b16 %v500
      %v1417 = vunpack.c.l.b16 %v501
      %v1418 = vunpack.c.h.b16 %v501
      %v1419 = vunpack.c.l.b16 %v502
      %v1420 = vunpack.c.h.b16 %v502
      %v1421 = vunpack.c.l.b16 %v503
      %v1422 = vunpack.c.h.b16 %v503
      %v1423 = vunpack.c.l.b16 %v504
      %v1424 = vunpack.c.h.b16 %v504
      %v1425 = vunpack.c.l.b16 %v505
      %v1426 = vunpack.c.h.b16 %v505
      %v1427 = vunpack.c.l.b16 %v506
      %v1428 = vunpack.c.h.b16 %v506
      %v1429 = vunpack.c.l.b16 %v507
      %v1430 = vunpack.c.h.b16 %v507
      %v1431 = vunpack.c.l.b16 %v508
      %v1432 = vunpack.c.h.b16 %v508
      %v1433 = vunpack.c.l.b16 %v509
      %v1434 = vunpack.c.h.b16 %v509
      %v1435 = vunpack.c.l.b16 %v510
      %v1436 = vunpack.c.h.b16 %v510
      %v1437 = vunpack.c.l.b16 %v511
      %v1438 = vunpack.c.h.b16 %v511
      %v1439 = vunpack.c.l.b16 %v512
      %v1440 = vunpack.c.h.b16 %v512
      %v1441 = vunpack.c.l.b16 %v513
      %v1442 = vunpack.c.h.b16 %v513
      %v1443 = vunpack.c.l.b16 %v514
      %v1444 = vunpack.c.h.b16 %v514
      %v1445 = vunpack.c.l.b16 %v515
      %v1446 = vunpack.c.h.b16 %v515
      %v1447 = vunpack.c.l.b16 %v516
      %v1448 = vunpack.c.h.b16 %v516
      %v1449 = vunpack.c.l.b16 %v517
      %v1450 = vunpack.c.h.b16 %v517
      %v1451 = vunpack.c.l.b16 %v518
      %v1452 = vunpack.c.h.b16 %v518
      %v1453 = vunpack.c.l.b16 %v519
      %v1454 = vunpack.c.h.b16 %v519
      %v1455 = vunpack.c.l.b16 %v520
      %v1456 = vunpack.c.h.b16 %v520
      %v1457 = vunpack.c.l.b16 %v521
      %v1458 = vunpack.c.h.b16 %v521
      %v1459 = vunpack.c.l.b16 %v522
      %v1460 = vunpack.c.h.b16 %v522
      %v1461 = vunpack.c.l.b16 %v523
      %v1462 = vunpack.c.h.b16 %v523
      %v1463 = vunpack.c.l.b16 %v524
      %v1464 = vunpack.c.h.b16 %v524
      %v1465 = vunpack.c.l.b16 %v525
      %v1466 = vunpack.c.h.b16 %v525
      %v1467 = vunpack.c.l.b16 %v526
      %v1468 = vunpack.c.h.b16 %v526
      %v1469 = vunpack.c.l.b16 %v527
      %v1470 = vunpack.c.h.b16 %v527
      %v1471 = vunpack.c.l.b16 %v528
      %v1472 = vunpack.c.h.b16 %v528
      %v1473 = vunpack.c.l.b16 %v529
      %v1474 = vunpack.c.h.b16 %v529
      %v1475 = vunpack.c.l.b16 %v530
      %v1476 = vunpack.c.h.b16 %v530
      %v1477 = vunpack.c.l.b16 %v531
      %v1478 = vunpack.c.h.b16 %v531
      %v1479 = vunpack.c.l.b16 %v532
      %v1480 = vunpack.c.h.b16 %v532
      %v1481 = vunpack.c.l.b16 %v533
      %v1482 = vunpack.c.h.b16 %v533
      %v1483 = vunpack.c.l.b16 %v534
      %v1484 = vunpack.c.h.b16 %v534
      %v1485 = vunpack.c.l.b16 %v535
      %v1486 = vunpack.c.h.b16 %v535
      %v1487 = vunpack.c.l.b16 %v536
      %v1488 = vunpack.c.h.b16 %v536
      %v1489 = vunpack.c.l.b16 %v537
      %v1490 = vunpack.c.h.b16 %v537
      %v1491 = vunpack.c.l.b16 %v538
      %v1492 = vunpack.c.h.b16 %v538
      %v1493 = vunpack.c.l.b16 %v539
      %v1494 = vunpack.c.h.b16 %v539
      %v1495 = vunpack.c.l.b16 %v540
      %v1496 = vunpack.c.h.b16 %v540
      %v1497 = vunpack.c.l.b16 %v541
      %v1498 = vunpack.c.h.b16 %v541
      %v1499 = vunpack.c.l.b16 %v542
      %v1500 = vunpack.c.h.b16 %v542
      %v1501 = vunpack.c.l.b16 %v543
      %v1502 = vunpack.c.h.b16 %v543
      %v1503 = vunpack.c.l.b16 %v544
      %v1504 = vunpack.c.h.b16 %v544
      %v1505 = vunpack.c.l.b16 %v545
      %v1506 = vunpack.c.h.b16 %v545
      %v1507 = vunpack.c.l.b16 %v546
      %v1508 = vunpack.c.h.b16 %v546
      %v1509 = vunpack.c.l.b16 %v547
      %v1510 = vunpack.c.h.b16 %v547
      %v1511 = vunpack.c.l.b16 %v548
      %v1512 = vunpack.c.h.b16 %v548
      %v1513 = vunpack.c.l.b16 %v549
      %v1514 = vunpack.c.h.b16 %v549
      %v1515 = vunpack.c.l.b16 %v550
      %v1516 = vunpack.c.h.b16 %v550
      %v1517 = vunpack.c.l.b16 %v551
      %v1518 = vunpack.c.h.b16 %v551
      %v1519 = vunpack.c.l.b16 %v552
      %v1520 = vunpack.c.h.b16 %v552
      %v1521 = vunpack.c.l.b16 %v553
      %v1522 = vunpack.c.h.b16 %v553
      %v1523 = vunpack.c.l.b16 %v554
      %v1524 = vunpack.c.h.b16 %v554
      %v1525 = vunpack.c.l.b16 %v555
      %v1526 = vunpack.c.h.b16 %v555
      %v1527 = vunpack.c.l.b16 %v556
      %v1528 = vunpack.c.h.b16 %v556
      %v1529 = vunpack.c.l.b16 %v557
      %v1530 = vunpack.c.h.b16 %v557
      %v1531 = vunpack.c.l.b16 %v558
      %v1532 = vunpack.c.h.b16 %v558
      %v1533 = vunpack.c.l.b16 %v559
      %v1534 = vunpack.c.h.b16 %v559
      %v1535 = vunpack.c.l.b16 %v560
      %v1536 = vunpack.c.h.b16 %v560
      %v1537 = vunpack.c.l.b16 %v561
      %v1538 = vunpack.c.h.b16 %v561
      %v1539 = vunpack.c.l.b16 %v562
      %v1540 = vunpack.c.h.b16 %v562
      %v1541 = vunpack.c.l.b16 %v563
      %v1542 = vunpack.c.h.b16 %v563
      %v1543 = vunpack.c.l.b16 %v564
      %v1544 = vunpack.c.h.b16 %v564
      %v1545 = vunpack.c.l.b16 %v565
      %v1546 = vunpack.c.h.b16 %v565
      %v1547 = vunpack.c.l.b16 %v566
      %v1548 = vunpack.c.h.b16 %v566
      %v1549 = vunpack.c.l.b16 %v567
      %v1550 = vunpack.c.h.b16 %v567
      %v1551 = vunpack.c.l.b16 %v568
      %v1552 = vunpack.c.h.b16 %v568
      %v1553 = vunpack.c.l.b16 %v569
      %v1554 = vunpack.c.h.b16 %v569
      %v1555 = vunpack.c.l.b16 %v570
      %v1556 = vunpack.c.h.b16 %v570
      %v1557 = vunpack.c.l.b16 %v571
      %v1558 = vunpack.c.h.b16 %v571
      %v1559 = vunpack.c.l.b16 %v572
      %v1560 = vunpack.c.h.b16 %v572
      %v1561 = vunpack.c.l.b16 %v573
      %v1562 = vunpack.c.h.b16 %v573
      %v1563 = vunpack.c.l.b16 %v574
      %v1564 = vunpack.c.h.b16 %v574
      %v1565 = vunpack.c.l.b16 %v575
      %v1566 = vunpack.c.h.b16 %v575
      %v1567 = vunpack.c.l.b16 %v576
      %v1568 = vunpack.c.h.b16 %v576
      %v1569 = vunpack.c.l.b16 %v577
      %v1570 = vunpack.c.h.b16 %v577
      %v1571 = vunpack.c.l.b16 %v578
      %v1572 = vunpack.c.h.b16 %v578
      %v1573 = vunpack.c.l.b16 %v579
      %v1574 = vunpack.c.h.b16 %v579
      %v1575 = vunpack.c.l.b16 %v580
      %v1576 = vunpack.c.h.b16 %v580
      %v1577 = vunpack.c.l.b16 %v581
      %v1578 = vunpack.c.h.b16 %v581
      %v1579 = vunpack.c.l.b16 %v582
      %v1580 = vunpack.c.h.b16 %v582
      %v1581 = vunpack.c.l.b16 %v583
      %v1582 = vunpack.c.h.b16 %v583
      %v1583 = vunpack.c.l.b16 %v584
      %v1584 = vunpack.c.h.b16 %v584
      %v1585 = vunpack.c.l.b16 %v585
      %v1586 = vunpack.c.h.b16 %v585
      %v1587 = vunpack.c.l.b16 %v586
      %v1588 = vunpack.c.h.b16 %v586
      %v1589 = vunpack.c.l.b16 %v587
      %v1590 = vunpack.c.h.b16 %v587
      %v1591 = vunpack.c.l.b16 %v588
      %v1592 = vunpack.c.h.b16 %v588
      %v1593 = vunpack.c.l.b16 %v589
      %v1594 = vunpack.c.h.b16 %v589
      %v1595 = vunpack.c.l.b16 %v590
      %v1596 = vunpack.c.h.b16 %v590
      %v1597 = vunpack.c.l.b16 %v591
      %v1598 = vunpack.c.h.b16 %v591
      %v1599 = vunpack.c.l.b16 %v592
      %v1600 = vunpack.c.h.b16 %v592
      %v1601 = vunpack.c.l.b16 %v593
      %v1602 = vunpack.c.h.b16 %v593
      %v1603 = vunpack.c.l.b16 %v594
      %v1604 = vunpack.c.h.b16 %v594
      %v1605 = vunpack.c.l.b16 %v595
      %v1606 = vunpack.c.h.b16 %v595
      %v1607 = vunpack.c.l.b16 %v596
      %v1608 = vunpack.c.h.b16 %v596
      %v1609 = vunpack.c.l.b16 %v597
      %v1610 = vunpack.c.h.b16 %v597
      %v1611 = vunpack.c.l.b16 %v598
      %v1612 = vunpack.c.h.b16 %v598
      %v1613 = vunpack.c.l.b16 %v599
      %v1614 = vunpack.c.h.b16 %v599
      %v1615 = vunpack.c.l.b16 %v600
      %v1616 = vunpack.c.h.b16 %v600
      %v1617 = vunpack.c.l.b16 %v601
      %v1618 = vunpack.c.h.b16 %v601
      %v1619 = vunpack.c.l.b16 %v602
      %v1620 = vunpack.c.h.b16 %v602
      %v1621 = vunpack.c.l.b16 %v603
      %v1622 = vunpack.c.h.b16 %v603
      %v1623 = vunpack.c.l.b16 %v604
      %v1624 = vunpack.c.h.b16 %v604
      %v1625 = vunpack.c.l.b16 %v605
      %v1626 = vunpack.c.h.b16 %v605
      %v1627 = vunpack.c.l.b16 %v606
      %v1628 = vunpack.c.h.b16 %v606
      %v1629 = vunpack.c.l.b16 %v607
      %v1630 = vunpack.c.h.b16 %v607
      %v1631 = vunpack.c.l.b16 %v608
      %v1632 = vunpack.c.h.b16 %v608
      %v1633 = vunpack.c.l.b16 %v609
      %v1634 = vunpack.c.h.b16 %v609
      %v1635 = vunpack.c.l.b16 %v610
      %v1636 = vunpack.c.h.b16 %v610
      %v1637 = vunpack.c.l.b16 %v611
      %v1638 = vunpack.c.h.b16 %v611
      %v1639 = vunpack.c.l.b16 %v612
      %v1640 = vunpack.c.h.b16 %v612
      %v1641 = vunpack.c.l.b16 %v613
      %v1642 = vunpack.c.h.b16 %v613
      %v1643 = vunpack.c.l.b16 %v614
      %v1644 = vunpack.c.h.b16 %v614
      %v1645 = vpack.c.b16 %v1007, %v1005
      %v1646 = vpack.c.b16 %v1008, %v1006
      %v1647 = vpack.c.b16 %v1011, %v1009
      %v1648 = vpack.c.b16 %v1012, %v1010
      %v1649 = vpack.c.b16 %v1015, %v1013
      %v1650 = vpack.c.b16 %v1016, %v1014
      %v1651 = vpack.c.b16 %v1019, %v1017
      %v1652 = vpack.c.b16 %v1020, %v1018
      %v1653 = vpack.c.b16 %v1023, %v1021
      %v1654 = vpack.c.b16 %v1024, %v1022
      %v1655 = vpack.c.b16 %v1027, %v1025
      %v1656 = vpack.c.b16 %v1028, %v1026
      %v1657 = vpack.c.b16 %v1031, %v1029
      %v1658 = vpack.c.b16 %v1032, %v1030
      %v1659 = vpack.c.b16 %v1035, %v1033
      %v1660 = vpack.c.b16 %v1036, %v1034
      %v1661 = vpack.c.b16 %v1039, %v1037
      %v1662 = vpack.c.b16 %v1040, %v1038
      %v1663 = vpack.c.b16 %v1043, %v1041
      %v1664 = vpack.c.b16 %v1044, %v1042
      %v1665 = vpack.c.b16 %v1047, %v1045
      %v1666 = vpack.c.b16 %v1048, %v1046
      %v1667 = vpack.c.b16 %v1051, %v1049
      %v1668 = vpack.c.b16 %v1052, %v1050
      %v1669 = vpack.c.b16 %v1055, %v1053
      %v1670 = vpack.c.b16 %v1056, %v1054
      %v1671 = vpack.c.b16 %v1059, %v1057
      %v1672 = vpack.c.b16 %v1060, %v1058
      %v1673 = vpack.c.b16 %v1063, %v1061
      %v1674 = vpack.c.b16 %v1064, %v1062
      %v1675 = vpack.c.b16 %v1067, %v1065
      %v1676 = vpack.c.b16 %v1068, %v1066
      %v1677 = vpack.c.b16 %v1071, %v1069
      %v1678 = vpack.c.b16 %v1072, %v1070
      %v1679 = vpack.c.b16 %v1075, %v1073
      %v1680 = vpack.c.b16 %v1076, %v1074
      %v1681 = vpack.c.b16 %v1079, %v1077
      %v1682 = vpack.c.b16 %v1080, %v1078
      %v1683 = vpack.c.b16 %v1083, %v1081
      %v1684 = vpack.c.b16 %v1084, %v1082
      %v1685 = vpack.c.b16 %v1087, %v1085
      %v1686 = vpack.c.b16 %v1088, %v1086
      %v1687 = vpack.c.b16 %v1091, %v1089
      %v1688 = vpack.c.b16 %v1092, %v1090
      %v1689 = vpack.c.b16 %v1095, %v1093
      %v1690 = vpack.c.b16 %v1096, %v1094
      %v1691 = vpack.c.b16 %v1099, %v1097
      %v1692 = vpack.c.b16 %v1100, %v1098
      %v1693 = vpack.c.b16 %v1103, %v1101
      %v1694 = vpack.c.b16 %v1104, %v1102
      %v1695 = vpack.c.b16 %v1107, %v1105
      %v1696 = vpack.c.b16 %v1108, %v1106
      %v1697 = vpack.c.b16 %v1111, %v1109
      %v1698 = vpack.c.b16 %v1112, %v1110
      %v1699 = vpack.c.b16 %v1115, %v1113
      %v1700 = vpack.c.b16 %v1116, %v1114
      %v1701 = vpack.c.b16 %v1119, %v1117
      %v1702 = vpack.c.b16 %v1120, %v1118
      %v1703 = vpack.c.b16 %v1123, %v1121
      %v1704 = vpack.c.b16 %v1124, %v1122
      %v1705 = vpack.c.b16 %v1127, %v1125
      %v1706 = vpack.c.b16 %v1128, %v1126
      %v1707 = vpack.c.b16 %v1131, %v1129
      %v1708 = vpack.c.b16 %v1132, %v1130
      %v1709 = vpack.c.b16 %v1135, %v1133
      %v1710 = vpack.c.b16 %v1136, %v1134
      %v1711 = vpack.c.b16 %v1139, %v1137
      %v1712 = vpack.c.b16 %v1140, %v1138
      %v1713 = vpack.c.b16 %v1143, %v1141
      %v1714 = vpack.c.b16 %v1144, %v1142
      %v1715 = vpack.c.b16 %v1147, %v1145
      %v1716 = vpack.c.b16 %v1148, %v1146
      %v1717 = vpack.c.b16 %v1151, %v1149
      %v1718 = vpack.c.b16 %v1152, %v1150
      %v1719 = vpack.c.b16 %v1155, %v1153
      %v1720 = vpack.c.b16 %v1156, %v1154
      %v1721 = vpack.c.b16 %v1159, %v1157
      %v1722 = vpack.c.b16 %v1160, %v1158
      %v1723 = vpack.c.b16 %v1163, %v1161
      %v1724 = vpack.c.b16 %v1164, %v1162
      %v1725 = vpack.c.b16 %v1167, %v1165
      %v1726 = vpack.c.b16 %v1168, %v1166
      %v1727 = vpack.c.b16 %v1171, %v1169
      %v1728 = vpack.c.b16 %v1172, %v1170
      %v1729 = vpack.c.b16 %v1175, %v1173
      %v1730 = vpack.c.b16 %v1176, %v1174
      %v1731 = vpack.c.b16 %v1179, %v1177
      %v1732 = vpack.c.b16 %v1180, %v1178
      %v1733 = vpack.c.b16 %v1183, %v1181
      %v1734 = vpack.c.b16 %v1184, %v1182
      %v1735 = vpack.c.b16 %v1187, %v1185
      %v1736 = vpack.c.b16 %v1188, %v1186
      %v1737 = vpack.c.b16 %v1191, %v1189
      %v1738 = vpack.c.b16 %v1192, %v1190
      %v1739 = vpack.c.b16 %v1195, %v1193
      %v1740 = vpack.c.b16 %v1196, %v1194
      %v1741 = vpack.c.b16 %v1199, %v1197
      %v1742 = vpack.c.b16 %v1200, %v1198
      %v1743 = vpack.c.b16 %v1203, %v1201
      %v1744 = vpack.c.b16 %v1204, %v1202
      %v1745 = vpack.c.b16 %v1207, %v1205
      %v1746 = vpack.c.b16 %v1208, %v1206
      %v1747 = vpack.c.b16 %v1211, %v1209
      %v1748 = vpack.c.b16 %v1212, %v1210
      %v1749 = vpack.c.b16 %v1215, %v1213
      %v1750 = vpack.c.b16 %v1216, %v1214
      %v1751 = vpack.c.b16 %v1219, %v1217
      %v1752 = vpack.c.b16 %v1220, %v1218
      %v1753 = vpack.c.b16 %v1223, %v1221
      %v1754 = vpack.c.b16 %v1224, %v1222
      %v1755 = vpack.c.b16 %v1227, %v1225
      %v1756 = vpack.c.b16 %v1228, %v1226
      %v1757 = vpack.c.b16 %v1231, %v1229
      %v1758 = vpack.c.b16 %v1232, %v1230
      %v1759 = vpack.c.b16 %v1235, %v1233
      %v1760 = vpack.c.b16 %v1236, %v1234
      %v1761 = vpack.c.b16 %v1239, %v1237
      %v1762 = vpack.c.b16 %v1240, %v1238
      %v1763 = vpack.c.b16 %v1243, %v1241
      %v1764 = vpack.c.b16 %v1244, %v1242
      %v1765 = vpack.c.b16 %v1247, %v1245
      %v1766 = vpack.c.b16 %v1248, %v1246
      %v1767 = vpack.c.b16 %v1251, %v1249
      %v1768 = vpack.c.b16 %v1252, %v1250
      %v1769 = vpack.c.b16 %v1255, %v1253
      %v1770 = vpack.c.b16 %v1256, %v1254
      %v1771 = vpack.c.b16 %v1259, %v1257
      %v1772 = vpack.c.b16 %v1260, %v1258
      %v1773 = vpack.c.b16 %v1263, %v1261
      %v1774 = vpack.c.b16 %v1264, %v1262
      %v1775 = vpack.c.b16 %v1267, %v1265
      %v1776 = vpack.c.b16 %v1268, %v1266
      %v1777 = vpack.c.b16 %v1271, %v1269
      %v1778 = vpack.c.b16 %v1272, %v1270
      %v1779 = vpack.c.b16 %v1275, %v1273
      %v1780 = vpack.c.b16 %v1276, %v1274
      %v1781 = vpack.c.b16 %v1279, %v1277
      %v1782 = vpack.c.b16 %v1280, %v1278
      %v1783 = vpack.c.b16 %v1283, %v1281
      %v1784 = vpack.c.b16 %v1284, %v1282
      %v1785 = vpack.c.b16 %v1287, %v1285
      %v1786 = vpack.c.b16 %v1288, %v1286
      %v1787 = vpack.c.b16 %v1291, %v1289
      %v1788 = vpack.c.b16 %v1292, %v1290
      %v1789 = vpack.c.b16 %v1295, %v1293
      %v1790 = vpack.c.b16 %v1296, %v1294
      %v1791 = vpack.c.b16 %v1299, %v1297
      %v1792 = vpack.c.b16 %v1300, %v1298
      %v1793 = vpack.c.b16 %v1303, %v1301
      %v1794 = vpack.c.b16 %v1304, %v1302
      %v1795 = vpack.c.b16 %v1307, %v1305
      %v1796 = vpack.c.b16 %v1308, %v1306
      %v1797 = vpack.c.b16 %v1311, %v1309
      %v1798 = vpack.c.b16 %v1312, %v1310
      %v1799 = vpack.c.b16 %v1315, %v1313
      %v1800 = vpack.c.b16 %v1316, %v1314
      %v1801 = vpack.c.b16 %v1319, %v1317
      %v1802 = vpack.c.b16 %v1320, %v1318
      %v1803 = vpack.c.b16 %v1323, %v1321
      %v1804 = vpack.c.b16 %v1324, %v1322
      %v1805 = vpack.c.b16 %v1327, %v1325
      %v1806 = vpack.c.b16 %v1328, %v1326
      %v1807 = vpack.c.b16 %v1331, %v1329
      %v1808 = vpack.c.b16 %v1332, %v1330
      %v1809 = vpack.c.b16 %v1335, %v1333
      %v1810 = vpack.c.b16 %v1336, %v1334
      %v1811 = vpack.c.b16 %v1339, %v1337
      %v1812 = vpack.c.b16 %v1340, %v1338
      %v1813 = vpack.c.b16 %v1343, %v1341
      %v1814 = vpack.c.b16 %v1344, %v1342
      %v1815 = vpack.c.b16 %v1347, %v1345
      %v1816 = vpack.c.b16 %v1348, %v1346
      %v1817 = vpack.c.b16 %v1351, %v1349
      %v1818 = vpack.c.b16 %v1352, %v1350
      %v1819 = vpack.c.b16 %v1355, %v1353
      %v1820 = vpack.c.b16 %v1356, %v1354
      %v1821 = vpack.c.b16 %v1359, %v1357
      %v1822 = vpack.c.b16 %v1360, %v1358
      %v1823 = vpack.c.b16 %v1363, %v1361
      %v1824 = vpack.c.b16 %v1364, %v1362
      %v1825 = vpack.c.b16 %v1367, %v1365
      %v1826 = vpack.c.b16 %v1368, %v1366
      %v1827 = vpack.c.b16 %v1371, %v1369
      %v1828 = vpack.c.b16 %v1372, %v1370
      %v1829 = vpack.c.b16 %v1375, %v1373
      %v1830 = vpack.c.b16 %v1376, %v1374
      %v1831 = vpack.c.b16 %v1379, %v1377
      %v1832 = vpack.c.b16 %v1380, %v1378
      %v1833 = vpack.c.b16 %v1383, %v1381
      %v1834 = vpack.c.b16 %v1384, %v1382
      %v1835 = vpack.c.b16 %v1387, %v1385
      %v1836 = vpack.c.b16 %v1388, %v1386
      %v1837 = vpack.c.b16 %v1391, %v1389
      %v1838 = vpack.c.b16 %v1392, %v1390
      %v1839 = vpack.c.b16 %v1395, %v1393
      %v1840 = vpack.c.b16 %v1396, %v1394
      %v1841 = vpack.c.b16 %v1399, %v1397
      %v1842 = vpack.c.b16 %v1400, %v1398
      %v1843 = vpack.c.b16 %v1403, %v1401
      %v1844 = vpack.c.b16 %v1404, %v1402
      %v1845 = vpack.c.b16 %v1407, %v1405
      %v1846 = vpack.c.b16 %v1408, %v1406
      %v1847 = vpack.c.b16 %v1411, %v1409
      %v1848 = vpack.c.b16 %v1412, %v1410
      %v1849 = vpack.c.b16 %v1415, %v1413
      %v1850 = vpack.c.b16 %v1416, %v1414
      %v1851 = vpack.c.b16 %v1419, %v1417
      %v1852 = vpack.c.b16 %v1420, %v1418
      %v1853 = vpack.c.b16 %v1423, %v1421
      %v1854 = vpack.c.b16 %v1424, %v1422
      %v1855 = vpack.c.b16 %v1427, %v1425
      %v1856 = vpack.c.b16 %v1428, %v1426
      %v1857 = vpack.c.b16 %v1431, %v1429
      %v1858 = vpack.c.b16 %v1432, %v1430
      %v1859 = vpack.c.b16 %v1435, %v1433
      %v1860 = vpack.c.b16 %v1436, %v1434
      %v1861 = vpack.c.b16 %v1439, %v1437
      %v1862 = vpack.c.b16 %v1440, %v1438
      %v1863 = vpack.c.b16 %v1443, %v1441
      %v1864 = vpack.c.b16 %v1444, %v1442
      %v1865 = vpack.c.b16 %v1447, %v1445
      %v1866 = vpack.c.b16 %v1448, %v1446
      %v1867 = vpack.c.b16 %v1451, %v1449
      %v1868 = vpack.c.b16 %v1452, %v1450
      %v1869 = vpack.c.b16 %v1455, %v1453
      %v1870 = vpack.c.b16 %v1456, %v1454
      %v1871 = vpack.c.b16 %v1459, %v1457
      %v1872 = vpack.c.b16 %v1460, %v1458
      %v1873 = vpack.c.b16 %v1463, %v1461
      %v1874 = vpack.c.b16 %v1464, %v1462
      %v1875 = vpack.c.b16 %v1467, %v1465
      %v1876 = vpack.c.b16 %v1468, %v1466
      %v1877 = vpack.c.b16 %v1471, %v1469
      %v1878 = vpack.c.b16 %v1472, %v1470
      %v1879 = vpack.c.b16 %v1475, %v1473
      %v1880 = vpack.c.b16 %v1476, %v1474
      %v1881 = vpack.c.b16 %v1479, %v1477
      %v1882 = vpack.c.b16 %v1480, %v1478
      %v1883 = vpack.c.b16 %v1483, %v1481
      %v1884 = vpack.c.b16 %v1484, %v1482
      %v1885 = vpack.c.b16 %v1487, %v1485
      %v1886 = vpack.c.b16 %v1488, %v1486
      %v1887 = vpack.c.b16 %v1491, %v1489
      %v1888 = vpack.c.b16 %v1492, %v1490
      %v1889 = vpack.c.b16 %v1495, %v1493
      %v1890 = vpack.c.b16 %v1496, %v1494
      %v1891 = vpack.c.b16 %v1499, %v1497
      %v1892 = vpack.c.b16 %v1500, %v1498
      %v1893 = vpack.c.b16 %v1503, %v1501
      %v1894 = vpack.c.b16 %v1504, %v1502
      %v1895 = vpack.c.b16 %v1507, %v1505
      %v1896 = vpack.c.b16 %v1508, %v1506
      %v1897 = vpack.c.b16 %v1511, %v1509
      %v1898 = vpack.c.b16 %v1512, %v1510
      %v1899 = vpack.c.b16 %v1515, %v1513
      %v1900 = vpack.c.b16 %v1516, %v1514
      %v1901 = vpack.c.b16 %v1519, %v1517
      %v1902 = vpack.c.b16 %v1520, %v1518
      %v1903 = vpack.c.b16 %v1523, %v1521
      %v1904 = vpack.c.b16 %v1524, %v1522
      %v1905 = vpack.c.b16 %v1527, %v1525
      %v1906 = vpack.c.b16 %v1528, %v1526
      %v1907 = vpack.c.b16 %v1531, %v1529
      %v1908 = vpack.c.b16 %v1532, %v1530
      %v1909 = vpack.c.b16 %v1535, %v1533
      %v1910 = vpack.c.b16 %v1536, %v1534
      %v1911 = vpack.c.b16 %v1539, %v1537
      %v1912 = vpack.c.b16 %v1540, %v1538
      %v1913 = vpack.c.b16 %v1543, %v1541
      %v1914 = vpack.c.b16 %v1544, %v1542
      %v1915 = vpack.c.b16 %v1547, %v1545
      %v1916 = vpack.c.b16 %v1548, %v1546
      %v1917 = vpack.c.b16 %v1551, %v1549
      %v1918 = vpack.c.b16 %v1552, %v1550
      %v1919 = vpack.c.b16 %v1555, %v1553
      %v1920 = vpack.c.b16 %v1556, %v1554
      %v1921 = vpack.c.b16 %v1559, %v1557
      %v1922 = vpack.c.b16 %v1560, %v1558
      %v1923 = vpack.c.b16 %v1563, %v1561
      %v1924 = vpack.c.b16 %v1564, %v1562
      %v1925 = vpack.c.b16 %v1567, %v1565
      %v1926 = vpack.c.b16 %v1568, %v1566
      %v1927 = vpack.c.b16 %v1571, %v1569
      %v1928 = vpack.c.b16 %v1572, %v1570
      %v1929 = vpack.c.b16 %v1575, %v1573
      %v1930 = vpack.c.b16 %v1576, %v1574
      %v1931 = vpack.c.b16 %v1579, %v1577
      %v1932 = vpack.c.b16 %v1580, %v1578
      %v1933 = vpack.c.b16 %v1583, %v1581
      %v1934 = vpack.c.b16 %v1584, %v1582
      %v1935 = vpack.c.b16 %v1587, %v1585
      %v1936 = vpack.c.b16 %v1588, %v1586
      %v1937 = vpack.c.b16 %v1591, %v1589
      %v1938 = vpack.c.b16 %v1592, %v1590
      %v1939 = vpack.c.b16 %v1595, %v1593
      %v1940 = vpack.c.b16 %v1596, %v1594
      %v1941 = vpack.c.b16 %v1599, %v1597
      %v1942 = vpack.c.b16 %v1600, %v1598
      %v1943 = vpack.c.b16 %v1603, %v1601
      %v1944 = vpack.c.b16 %v1604, %v1602
      %v1945 = vpack.c.b16 %v1607, %v1605
      %v1946 = vpack.c.b16 %v1608, %v1606
      %v1947 = vpack.c.b16 %v1611, %v1609
      %v1948 = vpack.c.b16 %v1612, %v1610
      %v1949 = vpack.c.b16 %v1615, %v1613
      %v1950 = vpack.c.b16 %v1616, %v1614
      %v1951 = vpack.c.b16 %v1619, %v1617
      %v1952 = vpack.c.b16 %v1620, %v1618
      %v1953 = vpack.c.b16 %v1623, %v1621
      %v1954 = vpack.c.b16 %v1624, %v1622
      %v1955 = vpack.c.b16 %v1627, %v1625
      %v1956 = vpack.c.b16 %v1628, %v1626
      %v1957 = vpack.c.b16 %v1631, %v1629
      %v1958 = vpack.c.b16 %v1632, %v1630
      %v1959 = vpack.c.b16 %v1635, %v1633
      %v1960 = vpack.c.b16 %v1636, %v1634
      %v1961 = vpack.c.b16 %v1639, %v1637
      %v1962 = vpack.c.b16 %v1640, %v1638
      %v1963 = vpack.c.b16 %v1643, %v1641
      %v1964 = vpack.c.b16 %v1644, %v1642
      %2285 = vmatprep.subr.bf16.mxu0 %v1646
      %2286 = vmatpush1.bf16.msra.mxu0 %v1645
      %2287 = vmatprep.subr.bf16.mxu0 %v1648
      %2288 = vmatpush1.bf16.msra.mxu0 %v1647
      %2289 = vmatprep.subr.bf16.mxu0 %v1650
      %2290 = vmatpush1.bf16.msra.mxu0 %v1649
      %2291 = vmatprep.subr.bf16.mxu0 %v1652
      %2292 = vmatpush1.bf16.msra.mxu0 %v1651
      %2293 = vmatprep.subr.bf16.mxu0 %v1654
      %2294 = vmatpush1.bf16.msra.mxu0 %v1653
      %2295 = vmatprep.subr.bf16.mxu0 %v1656
      %2296 = vmatpush1.bf16.msra.mxu0 %v1655
      %2297 = vmatprep.subr.bf16.mxu0 %v1658
      %2298 = vmatpush1.bf16.msra.mxu0 %v1657
      %2299 = vmatprep.subr.bf16.mxu0 %v1660
      %2300 = vmatpush1.bf16.msra.mxu0 %v1659
      %2301 = vmatprep.subr.bf16.mxu0 %v1662
      %2302 = vmatpush1.bf16.msra.mxu0 %v1661
      %2303 = vmatprep.subr.bf16.mxu0 %v1664
      %2304 = vmatpush1.bf16.msra.mxu0 %v1663
      %2305 = vmatprep.subr.bf16.mxu0 %v1666
      %2306 = vmatpush1.bf16.msra.mxu0 %v1665
      %2307 = vmatprep.subr.bf16.mxu0 %v1668
      %2308 = vmatpush1.bf16.msra.mxu0 %v1667
      %2309 = vmatprep.subr.bf16.mxu0 %v1670
      %2310 = vmatpush1.bf16.msra.mxu0 %v1669
      %2311 = vmatprep.subr.bf16.mxu0 %v1672
      %2312 = vmatpush1.bf16.msra.mxu0 %v1671
      %2313 = vmatprep.subr.bf16.mxu0 %v1674
      %2314 = vmatpush1.bf16.msra.mxu0 %v1673
      %2315 = vmatprep.subr.bf16.mxu0 %v1676
      %2316 = vmatpush1.bf16.msra.mxu0 %v1675
      %2317 = vmatprep.mubr.bf16.mxu0 %v646
      %2318 = vmatmul.mubr.bf16.gmra.mrb[0].mxu0 %v645
      %v2319 = vpop.f32.mrb[0].mxu0
      %v2320 = vadd.f32 0.0, %v2319
      %v2321 = vpop.f32.mrb[0].mxu0
      %v2322 = vadd.f32 0.0, %v2321
      %v2323 = vpop.f32.mrb[0].mxu0
      %v2324 = vpop.f32.mrb[0].mxu0
      %2325 = vdwg.mxu0
      %2326 = vmatprep.subr.bf16.mxu0 %v1678
      %2327 = vmatpush1.bf16.msra.mxu0 %v1677
      %2328 = vmatprep.subr.bf16.mxu0 %v1680
      %2329 = vmatpush1.bf16.msra.mxu0 %v1679
      %2330 = vmatprep.subr.bf16.mxu0 %v1682
      %2331 = vmatpush1.bf16.msra.mxu0 %v1681
      %2332 = vmatprep.subr.bf16.mxu0 %v1684
      %2333 = vmatpush1.bf16.msra.mxu0 %v1683
      %2334 = vmatprep.subr.bf16.mxu0 %v1686
      %2335 = vmatpush1.bf16.msra.mxu0 %v1685
      %2336 = vmatprep.subr.bf16.mxu0 %v1688
      %2337 = vmatpush1.bf16.msra.mxu0 %v1687
      %2338 = vmatprep.subr.bf16.mxu0 %v1690
      %2339 = vmatpush1.bf16.msra.mxu0 %v1689
      %2340 = vmatprep.subr.bf16.mxu0 %v1692
      %2341 = vmatpush1.bf16.msra.mxu0 %v1691
      %2342 = vmatprep.subr.bf16.mxu0 %v1694
      %2343 = vmatpush1.bf16.msra.mxu0 %v1693
      %2344 = vmatprep.subr.bf16.mxu0 %v1696
      %2345 = vmatpush1.bf16.msra.mxu0 %v1695
      %2346 = vmatprep.subr.bf16.mxu0 %v1698
      %2347 = vmatpush1.bf16.msra.mxu0 %v1697
      %2348 = vmatprep.subr.bf16.mxu0 %v1700
      %2349 = vmatpush1.bf16.msra.mxu0 %v1699
      %2350 = vmatprep.subr.bf16.mxu0 %v1702
      %2351 = vmatpush1.bf16.msra.mxu0 %v1701
      %2352 = vmatprep.subr.bf16.mxu0 %v1704
      %2353 = vmatpush1.bf16.msra.mxu0 %v1703
      %2354 = vmatprep.subr.bf16.mxu0 %v1706
      %2355 = vmatpush1.bf16.msra.mxu0 %v1705
      %2356 = vmatprep.subr.bf16.mxu0 %v1708
      %2357 = vmatpush1.bf16.msra.mxu0 %v1707
      %2358 = vmatprep.mubr.bf16.mxu0 %v648
      %2359 = vmatmul.mubr.bf16.gmra.mrb[0].mxu0 %v647
      %v2360 = vpop.f32.mrb[0].mxu0
      %v2361 = vadd.f32 %v2320, %v2360
      %v2362 = vpop.f32.mrb[0].mxu0
      %v2363 = vadd.f32 %v2322, %v2362
      %v2364 = vpop.f32.mrb[0].mxu0
      %v2365 = vpop.f32.mrb[0].mxu0
      %2366 = vdwg.mxu0
      %2367 = vmatprep.subr.bf16.mxu0 %v1710
      %2368 = vmatpush1.bf16.msra.mxu0 %v1709
      %2369 = vmatprep.subr.bf16.mxu0 %v1712
      %2370 = vmatpush1.bf16.msra.mxu0 %v1711
      %2371 = vmatprep.subr.bf16.mxu0 %v1714
      %2372 = vmatpush1.bf16.msra.mxu0 %v1713
      %2373 = vmatprep.subr.bf16.mxu0 %v1716
      %2374 = vmatpush1.bf16.msra.mxu0 %v1715
      %2375 = vmatprep.subr.bf16.mxu0 %v1718
      %2376 = vmatpush1.bf16.msra.mxu0 %v1717
      %2377 = vmatprep.subr.bf16.mxu0 %v1720
      %2378 = vmatpush1.bf16.msra.mxu0 %v1719
      %2379 = vmatprep.subr.bf16.mxu0 %v1722
      %2380 = vmatpush1.bf16.msra.mxu0 %v1721
      %2381 = vmatprep.subr.bf16.mxu0 %v1724
      %2382 = vmatpush1.bf16.msra.mxu0 %v1723
      %2383 = vmatprep.subr.bf16.mxu0 %v1726
      %2384 = vmatpush1.bf16.msra.mxu0 %v1725
      %2385 = vmatprep.subr.bf16.mxu0 %v1728
      %2386 = vmatpush1.bf16.msra.mxu0 %v1727
      %2387 = vmatprep.subr.bf16.mxu0 %v1730
      %2388 = vmatpush1.bf16.msra.mxu0 %v1729
      %2389 = vmatprep.subr.bf16.mxu0 %v1732
      %2390 = vmatpush1.bf16.msra.mxu0 %v1731
      %2391 = vmatprep.subr.bf16.mxu0 %v1734
      %2392 = vmatpush1.bf16.msra.mxu0 %v1733
      %2393 = vmatprep.subr.bf16.mxu0 %v1736
      %2394 = vmatpush1.bf16.msra.mxu0 %v1735
      %2395 = vmatprep.subr.bf16.mxu0 %v1738
      %2396 = vmatpush1.bf16.msra.mxu0 %v1737
      %2397 = vmatprep.subr.bf16.mxu0 %v1740
      %2398 = vmatpush1.bf16.msra.mxu0 %v1739
      %2399 = vmatprep.mubr.bf16.mxu0 %v650
      %2400 = vmatmul.mubr.bf16.gmra.mrb[0].mxu0 %v649
      %v2401 = vpop.f32.mrb[0].mxu0
      %v2402 = vadd.f32 %v2361, %v2401
      %v2403 = vpop.f32.mrb[0].mxu0
      %v2404 = vadd.f32 %v2363, %v2403
      %v2405 = vpop.f32.mrb[0].mxu0
      %v2406 = vpop.f32.mrb[0].mxu0
      %2407 = vdwg.mxu0
      %2408 = vmatprep.subr.bf16.mxu0 %v1742
      %2409 = vmatpush1.bf16.msra.mxu0 %v1741
      %2410 = vmatprep.subr.bf16.mxu0 %v1744
      %2411 = vmatpush1.bf16.msra.mxu0 %v1743
      %2412 = vmatprep.subr.bf16.mxu0 %v1746
      %2413 = vmatpush1.bf16.msra.mxu0 %v1745
      %2414 = vmatprep.subr.bf16.mxu0 %v1748
      %2415 = vmatpush1.bf16.msra.mxu0 %v1747
      %2416 = vmatprep.subr.bf16.mxu0 %v1750
      %2417 = vmatpush1.bf16.msra.mxu0 %v1749
      %2418 = vmatprep.subr.bf16.mxu0 %v1752
      %2419 = vmatpush1.bf16.msra.mxu0 %v1751
      %2420 = vmatprep.subr.bf16.mxu0 %v1754
      %2421 = vmatpush1.bf16.msra.mxu0 %v1753
      %2422 = vmatprep.subr.bf16.mxu0 %v1756
      %2423 = vmatpush1.bf16.msra.mxu0 %v1755
      %2424 = vmatprep.subr.bf16.mxu0 %v1758
      %2425 = vmatpush1.bf16.msra.mxu0 %v1757
      %2426 = vmatprep.subr.bf16.mxu0 %v1760
      %2427 = vmatpush1.bf16.msra.mxu0 %v1759
      %2428 = vmatprep.subr.bf16.mxu0 %v1762
      %2429 = vmatpush1.bf16.msra.mxu0 %v1761
      %2430 = vmatprep.subr.bf16.mxu0 %v1764
      %2431 = vmatpush1.bf16.msra.mxu0 %v1763
      %2432 = vmatprep.subr.bf16.mxu0 %v1766
      %2433 = vmatpush1.bf16.msra.mxu0 %v1765
      %2434 = vmatprep.subr.bf16.mxu0 %v1768
      %2435 = vmatpush1.bf16.msra.mxu0 %v1767
      %2436 = vmatprep.subr.bf16.mxu0 %v1770
      %2437 = vmatpush1.bf16.msra.mxu0 %v1769
      %2438 = vmatprep.subr.bf16.mxu0 %v1772
      %2439 = vmatpush1.bf16.msra.mxu0 %v1771
      %2440 = vmatprep.mubr.bf16.mxu0 %v652
      %2441 = vmatmul.mubr.bf16.gmra.mrb[0].mxu0 %v651
      %v2442 = vpop.f32.mrb[0].mxu0
      %v2443 = vadd.f32 %v2402, %v2442
      %v2444 = vpop.f32.mrb[0].mxu0
      %v2445 = vadd.f32 %v2404, %v2444
      %v2446 = vpop.f32.mrb[0].mxu0
      %v2447 = vpop.f32.mrb[0].mxu0
      %2448 = vdwg.mxu0
      %2449 = vmatprep.subr.bf16.mxu0 %v1774
      %2450 = vmatpush1.bf16.msra.mxu0 %v1773
      %2451 = vmatprep.subr.bf16.mxu0 %v1776
      %2452 = vmatpush1.bf16.msra.mxu0 %v1775
      %2453 = vmatprep.subr.bf16.mxu0 %v1778
      %2454 = vmatpush1.bf16.msra.mxu0 %v1777
      %2455 = vmatprep.subr.bf16.mxu0 %v1780
      %2456 = vmatpush1.bf16.msra.mxu0 %v1779
      %2457 = vmatprep.subr.bf16.mxu0 %v1782
      %2458 = vmatpush1.bf16.msra.mxu0 %v1781
      %2459 = vmatprep.subr.bf16.mxu0 %v1784
      %2460 = vmatpush1.bf16.msra.mxu0 %v1783
      %2461 = vmatprep.subr.bf16.mxu0 %v1786
      %2462 = vmatpush1.bf16.msra.mxu0 %v1785
      %2463 = vmatprep.subr.bf16.mxu0 %v1788
      %2464 = vmatpush1.bf16.msra.mxu0 %v1787
      %2465 = vmatprep.subr.bf16.mxu0 %v1790
      %2466 = vmatpush1.bf16.msra.mxu0 %v1789
      %2467 = vmatprep.subr.bf16.mxu0 %v1792
      %2468 = vmatpush1.bf16.msra.mxu0 %v1791
      %2469 = vmatprep.subr.bf16.mxu0 %v1794
      %2470 = vmatpush1.bf16.msra.mxu0 %v1793
      %2471 = vmatprep.subr.bf16.mxu0 %v1796
      %2472 = vmatpush1.bf16.msra.mxu0 %v1795
      %2473 = vmatprep.subr.bf16.mxu0 %v1798
      %2474 = vmatpush1.bf16.msra.mxu0 %v1797
      %2475 = vmatprep.subr.bf16.mxu0 %v1800
      %2476 = vmatpush1.bf16.msra.mxu0 %v1799
      %2477 = vmatprep.subr.bf16.mxu0 %v1802
      %2478 = vmatpush1.bf16.msra.mxu0 %v1801
      %2479 = vmatprep.subr.bf16.mxu0 %v1804
      %2480 = vmatpush1.bf16.msra.mxu0 %v1803
      %2481 = vmatprep.mubr.bf16.mxu0 %v654
      %2482 = vmatmul.mubr.bf16.gmra.mrb[0].mxu0 %v653
      %v2483 = vpop.f32.mrb[0].mxu0
      %v2484 = vadd.f32 %v2443, %v2483
      %v2485 = vpop.f32.mrb[0].mxu0
      %v2486 = vadd.f32 %v2445, %v2485
      %v2487 = vpop.f32.mrb[0].mxu0
      %v2488 = vpop.f32.mrb[0].mxu0
      %2489 = vdwg.mxu0
      %2490 = vmatprep.subr.bf16.mxu0 %v1806
      %2491 = vmatpush1.bf16.msra.mxu0 %v1805
      %2492 = vmatprep.subr.bf16.mxu0 %v1808
      %2493 = vmatpush1.bf16.msra.mxu0 %v1807
      %2494 = vmatprep.subr.bf16.mxu0 %v1810
      %2495 = vmatpush1.bf16.msra.mxu0 %v1809
      %2496 = vmatprep.subr.bf16.mxu0 %v1812
      %2497 = vmatpush1.bf16.msra.mxu0 %v1811
      %2498 = vmatprep.subr.bf16.mxu0 %v1814
      %2499 = vmatpush1.bf16.msra.mxu0 %v1813
      %2500 = vmatprep.subr.bf16.mxu0 %v1816
      %2501 = vmatpush1.bf16.msra.mxu0 %v1815
      %2502 = vmatprep.subr.bf16.mxu0 %v1818
      %2503 = vmatpush1.bf16.msra.mxu0 %v1817
      %2504 = vmatprep.subr.bf16.mxu0 %v1820
      %2505 = vmatpush1.bf16.msra.mxu0 %v1819
      %2506 = vmatprep.subr.bf16.mxu0 %v1822
      %2507 = vmatpush1.bf16.msra.mxu0 %v1821
      %2508 = vmatprep.subr.bf16.mxu0 %v1824
      %2509 = vmatpush1.bf16.msra.mxu0 %v1823
      %2510 = vmatprep.subr.bf16.mxu0 %v1826
      %2511 = vmatpush1.bf16.msra.mxu0 %v1825
      %2512 = vmatprep.subr.bf16.mxu0 %v1828
      %2513 = vmatpush1.bf16.msra.mxu0 %v1827
      %2514 = vmatprep.subr.bf16.mxu0 %v1830
      %2515 = vmatpush1.bf16.msra.mxu0 %v1829
      %2516 = vmatprep.subr.bf16.mxu0 %v1832
      %2517 = vmatpush1.bf16.msra.mxu0 %v1831
      %2518 = vmatprep.subr.bf16.mxu0 %v1834
      %2519 = vmatpush1.bf16.msra.mxu0 %v1833
      %2520 = vmatprep.subr.bf16.mxu0 %v1836
      %2521 = vmatpush1.bf16.msra.mxu0 %v1835
      %2522 = vmatprep.mubr.bf16.mxu0 %v656
      %2523 = vmatmul.mubr.bf16.gmra.mrb[0].mxu0 %v655
      %v2524 = vpop.f32.mrb[0].mxu0
      %v2525 = vadd.f32 %v2484, %v2524
      %v2526 = vpop.f32.mrb[0].mxu0
      %v2527 = vadd.f32 %v2486, %v2526
      %v2528 = vpop.f32.mrb[0].mxu0
      %v2529 = vpop.f32.mrb[0].mxu0
      %2530 = vdwg.mxu0
      %2531 = vmatprep.subr.bf16.mxu0 %v1838
      %2532 = vmatpush1.bf16.msra.mxu0 %v1837
      %2533 = vmatprep.subr.bf16.mxu0 %v1840
      %2534 = vmatpush1.bf16.msra.mxu0 %v1839
      %2535 = vmatprep.subr.bf16.mxu0 %v1842
      %2536 = vmatpush1.bf16.msra.mxu0 %v1841
      %2537 = vmatprep.subr.bf16.mxu0 %v1844
      %2538 = vmatpush1.bf16.msra.mxu0 %v1843
      %2539 = vmatprep.subr.bf16.mxu0 %v1846
      %2540 = vmatpush1.bf16.msra.mxu0 %v1845
      %2541 = vmatprep.subr.bf16.mxu0 %v1848
      %2542 = vmatpush1.bf16.msra.mxu0 %v1847
      %2543 = vmatprep.subr.bf16.mxu0 %v1850
      %2544 = vmatpush1.bf16.msra.mxu0 %v1849
      %2545 = vmatprep.subr.bf16.mxu0 %v1852
      %2546 = vmatpush1.bf16.msra.mxu0 %v1851
      %2547 = vmatprep.subr.bf16.mxu0 %v1854
      %2548 = vmatpush1.bf16.msra.mxu0 %v1853
      %2549 = vmatprep.subr.bf16.mxu0 %v1856
      %2550 = vmatpush1.bf16.msra.mxu0 %v1855
      %2551 = vmatprep.subr.bf16.mxu0 %v1858
      %2552 = vmatpush1.bf16.msra.mxu0 %v1857
      %2553 = vmatprep.subr.bf16.mxu0 %v1860
      %2554 = vmatpush1.bf16.msra.mxu0 %v1859
      %2555 = vmatprep.subr.bf16.mxu0 %v1862
      %2556 = vmatpush1.bf16.msra.mxu0 %v1861
      %2557 = vmatprep.subr.bf16.mxu0 %v1864
      %2558 = vmatpush1.bf16.msra.mxu0 %v1863
      %2559 = vmatprep.subr.bf16.mxu0 %v1866
      %2560 = vmatpush1.bf16.msra.mxu0 %v1865
      %2561 = vmatprep.subr.bf16.mxu0 %v1868
      %2562 = vmatpush1.bf16.msra.mxu0 %v1867
      %2563 = vmatprep.mubr.bf16.mxu0 %v658
      %2564 = vmatmul.mubr.bf16.gmra.mrb[0].mxu0 %v657
      %v2565 = vpop.f32.mrb[0].mxu0
      %v2566 = vadd.f32 %v2525, %v2565
      %v2567 = vpop.f32.mrb[0].mxu0
      %v2568 = vadd.f32 %v2527, %v2567
      %v2569 = vpop.f32.mrb[0].mxu0
      %v2570 = vpop.f32.mrb[0].mxu0
      %2571 = vdwg.mxu0
      %2572 = vmatprep.subr.bf16.mxu0 %v1870
      %2573 = vmatpush1.bf16.msra.mxu0 %v1869
      %2574 = vmatprep.subr.bf16.mxu0 %v1872
      %2575 = vmatpush1.bf16.msra.mxu0 %v1871
      %2576 = vmatprep.subr.bf16.mxu0 %v1874
      %2577 = vmatpush1.bf16.msra.mxu0 %v1873
      %2578 = vmatprep.subr.bf16.mxu0 %v1876
      %2579 = vmatpush1.bf16.msra.mxu0 %v1875
      %2580 = vmatprep.subr.bf16.mxu0 %v1878
      %2581 = vmatpush1.bf16.msra.mxu0 %v1877
      %2582 = vmatprep.subr.bf16.mxu0 %v1880
      %2583 = vmatpush1.bf16.msra.mxu0 %v1879
      %2584 = vmatprep.subr.bf16.mxu0 %v1882
      %2585 = vmatpush1.bf16.msra.mxu0 %v1881
      %2586 = vmatprep.subr.bf16.mxu0 %v1884
      %2587 = vmatpush1.bf16.msra.mxu0 %v1883
      %2588 = vmatprep.subr.bf16.mxu0 %v1886
      %2589 = vmatpush1.bf16.msra.mxu0 %v1885
      %2590 = vmatprep.subr.bf16.mxu0 %v1888
      %2591 = vmatpush1.bf16.msra.mxu0 %v1887
      %2592 = vmatprep.subr.bf16.mxu0 %v1890
      %2593 = vmatpush1.bf16.msra.mxu0 %v1889
      %2594 = vmatprep.subr.bf16.mxu0 %v1892
      %2595 = vmatpush1.bf16.msra.mxu0 %v1891
      %2596 = vmatprep.subr.bf16.mxu0 %v1894
      %2597 = vmatpush1.bf16.msra.mxu0 %v1893
      %2598 = vmatprep.subr.bf16.mxu0 %v1896
      %2599 = vmatpush1.bf16.msra.mxu0 %v1895
      %2600 = vmatprep.subr.bf16.mxu0 %v1898
      %2601 = vmatpush1.bf16.msra.mxu0 %v1897
      %2602 = vmatprep.subr.bf16.mxu0 %v1900
      %2603 = vmatpush1.bf16.msra.mxu0 %v1899
      %2604 = vmatprep.mubr.bf16.mxu0 %v660
      %2605 = vmatmul.mubr.bf16.gmra.mrb[0].mxu0 %v659
      %v2606 = vpop.f32.mrb[0].mxu0
      %v2607 = vadd.f32 %v2566, %v2606
      %v2608 = vpop.f32.mrb[0].mxu0
      %v2609 = vadd.f32 %v2568, %v2608
      %v2610 = vpop.f32.mrb[0].mxu0
      %v2611 = vpop.f32.mrb[0].mxu0
      %2612 = vdwg.mxu0
      %2613 = vmatprep.subr.bf16.mxu0 %v1902
      %2614 = vmatpush1.bf16.msra.mxu0 %v1901
      %2615 = vmatprep.subr.bf16.mxu0 %v1904
      %2616 = vmatpush1.bf16.msra.mxu0 %v1903
      %2617 = vmatprep.subr.bf16.mxu0 %v1906
      %2618 = vmatpush1.bf16.msra.mxu0 %v1905
      %2619 = vmatprep.subr.bf16.mxu0 %v1908
      %2620 = vmatpush1.bf16.msra.mxu0 %v1907
      %2621 = vmatprep.subr.bf16.mxu0 %v1910
      %2622 = vmatpush1.bf16.msra.mxu0 %v1909
      %2623 = vmatprep.subr.bf16.mxu0 %v1912
      %2624 = vmatpush1.bf16.msra.mxu0 %v1911
      %2625 = vmatprep.subr.bf16.mxu0 %v1914
      %2626 = vmatpush1.bf16.msra.mxu0 %v1913
      %2627 = vmatprep.subr.bf16.mxu0 %v1916
      %2628 = vmatpush1.bf16.msra.mxu0 %v1915
      %2629 = vmatprep.subr.bf16.mxu0 %v1918
      %2630 = vmatpush1.bf16.msra.mxu0 %v1917
      %2631 = vmatprep.subr.bf16.mxu0 %v1920
      %2632 = vmatpush1.bf16.msra.mxu0 %v1919
      %2633 = vmatprep.subr.bf16.mxu0 %v1922
      %2634 = vmatpush1.bf16.msra.mxu0 %v1921
      %2635 = vmatprep.subr.bf16.mxu0 %v1924
      %2636 = vmatpush1.bf16.msra.mxu0 %v1923
      %2637 = vmatprep.subr.bf16.mxu0 %v1926
      %2638 = vmatpush1.bf16.msra.mxu0 %v1925
      %2639 = vmatprep.subr.bf16.mxu0 %v1928
      %2640 = vmatpush1.bf16.msra.mxu0 %v1927
      %2641 = vmatprep.subr.bf16.mxu0 %v1930
      %2642 = vmatpush1.bf16.msra.mxu0 %v1929
      %2643 = vmatprep.subr.bf16.mxu0 %v1932
      %2644 = vmatpush1.bf16.msra.mxu0 %v1931
      %2645 = vmatprep.mubr.bf16.mxu0 %v662
      %2646 = vmatmul.mubr.bf16.gmra.mrb[0].mxu0 %v661
      %v2647 = vpop.f32.mrb[0].mxu0
      %v2648 = vadd.f32 %v2607, %v2647
      %v2649 = vpop.f32.mrb[0].mxu0
      %v2650 = vadd.f32 %v2609, %v2649
      %v2651 = vpop.f32.mrb[0].mxu0
      %v2652 = vpop.f32.mrb[0].mxu0
      %2653 = vdwg.mxu0
      %2654 = vmatprep.subr.bf16.mxu0 %v1934
      %2655 = vmatpush1.bf16.msra.mxu0 %v1933
      %2656 = vmatprep.subr.bf16.mxu0 %v1936
      %2657 = vmatpush1.bf16.msra.mxu0 %v1935
      %2658 = vmatprep.subr.bf16.mxu0 %v1938
      %2659 = vmatpush1.bf16.msra.mxu0 %v1937
      %2660 = vmatprep.subr.bf16.mxu0 %v1940
      %2661 = vmatpush1.bf16.msra.mxu0 %v1939
      %2662 = vmatprep.subr.bf16.mxu0 %v1942
      %2663 = vmatpush1.bf16.msra.mxu0 %v1941
      %2664 = vmatprep.subr.bf16.mxu0 %v1944
      %2665 = vmatpush1.bf16.msra.mxu0 %v1943
      %2666 = vmatprep.subr.bf16.mxu0 %v1946
      %2667 = vmatpush1.bf16.msra.mxu0 %v1945
      %2668 = vmatprep.subr.bf16.mxu0 %v1948
      %2669 = vmatpush1.bf16.msra.mxu0 %v1947
      %2670 = vmatprep.subr.bf16.mxu0 %v1950
      %2671 = vmatpush1.bf16.msra.mxu0 %v1949
      %2672 = vmatprep.subr.bf16.mxu0 %v1952
      %2673 = vmatpush1.bf16.msra.mxu0 %v1951
      %2674 = vmatprep.subr.bf16.mxu0 %v1954
      %2675 = vmatpush1.bf16.msra.mxu0 %v1953
      %2676 = vmatprep.subr.bf16.mxu0 %v1956
      %2677 = vmatpush1.bf16.msra.mxu0 %v1955
      %2678 = vmatprep.subr.bf16.mxu0 %v1958
      %2679 = vmatpush1.bf16.msra.mxu0 %v1957
      %2680 = vmatprep.subr.bf16.mxu0 %v1960
      %2681 = vmatpush1.bf16.msra.mxu0 %v1959
      %2682 = vmatprep.subr.bf16.mxu0 %v1962
      %2683 = vmatpush1.bf16.msra.mxu0 %v1961
      %2684 = vmatprep.subr.bf16.mxu0 %v1964
      %2685 = vmatpush1.bf16.msra.mxu0 %v1963
      %2686 = vmatprep.mubr.bf16.mxu0 %v664
      %2687 = vmatmul.mubr.bf16.gmra.mrb[0].mxu0 %v663
      %v2688 = vpop.f32.mrb[0].mxu0
      %v2689 = vadd.f32 %v2648, %v2688
      %v2690 = vpop.f32.mrb[0].mxu0
      %v2691 = vadd.f32 %v2650, %v2690
      %v2692 = vpop.f32.mrb[0].mxu0
      %v2693 = vpop.f32.mrb[0].mxu0
      %2694 = vdwg.mxu0
      %v2695 = vadd.f32 %v283, %v2689
      %v2696 = vadd.f32 %v284, %v2691
      %2697 = vst [vmem:[#allocation2] sm:$0xff] %v2695
      %vm2698 = vcmask 179200
      %2699 = vst.msk [vmem:[#allocation2 + $0x8] sm:$0xff] %vm2698, %v2696
      %p2700 = scmp.eq.s32.totalorder %s21, 1
      // Predicated region
      $region45: #{dense_cnn_forward.3} parent=39 // pred_check
        %p2701 = pneg %p2700
      $region46: #{dense_cnn_forward.3} parent=39 // pred_check_branch
        %2703 = sbr.rel (%p2701) target = $region48
      $region47: #{dense_cnn_forward.3} parent=39 // pred_region
        %v2704 = vld [vmem:[#allocation2] sm:$0xff]
        %v2705 = vld [vmem:[#allocation2 + $0x8] sm:$0xff]
        %v2706 = vld [vmem:[%s2] sm:$0x3]
        %v2708 = vlaneseq
        %v2709 = vshrl.u32 %v2708, 7
        %v2710 = vsub.s32 0, %v2709
        %v2711 = vrot.slane %v2706, %v2710
        %v2712 = vlaneseq
        %v2713 = vshrl.u32 %v2712, 7
        %v2714 = vsub.s32 1, %v2713
        %v2715 = vrot.slane %v2706, %v2714
        %v2718 = vadd.f32 %v2704, %v2711
        %v2719 = vadd.f32 %v2705, %v2715
        %v2720 = vmax.f32 %v2718, 0.0
        %v2721 = vmax.f32 %v2719, 0.0
        %v2722 = vld [vmem:[%s3] sm:$0xff]
        %v2723 = vld [vmem:[%s3 + $0x8] sm:$0xff]
        %v2724 = vld [vmem:[%s3 + $0x10] sm:$0xff]
        %v2725 = vld [vmem:[%s3 + $0x18] sm:$0xff]
        %v2726 = vld [vmem:[%s3 + $0x20] sm:$0xff]
        %v2727 = vld [vmem:[%s3 + $0x28] sm:$0xff]
        %v2728 = vld [vmem:[%s3 + $0x30] sm:$0xff]
        %v2729 = vld [vmem:[%s3 + $0x38] sm:$0xff]
        %v2730 = vld [vmem:[%s3 + $0x40] sm:$0xff]
        %v2731 = vld [vmem:[%s3 + $0x48] sm:$0xff]
        %v2732 = vld [vmem:[%s3 + $0x50] sm:$0xff]
        %v2733 = vld [vmem:[%s3 + $0x58] sm:$0xff]
        %v2734 = vld [vmem:[%s3 + $0x60] sm:$0xff]
        %v2735 = vld [vmem:[%s3 + $0x68] sm:$0xff]
        %v2736 = vld [vmem:[%s3 + $0x70] sm:$0xff]
        %v2737 = vld [vmem:[%s3 + $0x78] sm:$0xff]
        %v2738 = vld [vmem:[%s3 + $0x80] sm:$0xff]
        %v2739 = vld [vmem:[%s3 + $0x88] sm:$0xff]
        %v2740 = vld [vmem:[%s3 + $0x90] sm:$0x3f]
        %v2741 = vld [vmem:[%s4] sm:$0x1]
        %v2743 = vlaneseq
        %v2744 = vshrl.u32 %v2743, 7
        %v2745 = vsub.s32 0, %v2744
        %v2746 = vrot.slane %v2741, %v2745
        %v2749 = vsel %vm2698, %v2721, 0
        %vm2751 = vcmask 1045504
        %v2753 = vsel %vm2751, %v2740, 0
        %2755 = vmatprep.subr.mxu0 0.0
        %2756 = vmatpush1.msra.mxu0 %v2722
        %2757 = vmatprep.subr.mxu0 0.0
        %2758 = vmatpush1.msra.mxu0 %v2723
        %2759 = vmatprep.subr.mxu0 0.0
        %2760 = vmatpush1.msra.mxu0 %v2724
        %2761 = vmatprep.subr.mxu0 0.0
        %2762 = vmatpush1.msra.mxu0 %v2725
        %2763 = vmatprep.subr.mxu0 0.0
        %2764 = vmatpush1.msra.mxu0 %v2726
        %2765 = vmatprep.subr.mxu0 0.0
        %2766 = vmatpush1.msra.mxu0 %v2727
        %2767 = vmatprep.subr.mxu0 0.0
        %2768 = vmatpush1.msra.mxu0 %v2728
        %2769 = vmatprep.subr.mxu0 0.0
        %2770 = vmatpush1.msra.mxu0 %v2729
        %2771 = vmatprep.subr.mxu0 0.0
        %2772 = vmatpush1.msra.mxu0 %v2730
        %2773 = vmatprep.subr.mxu0 0.0
        %2774 = vmatpush1.msra.mxu0 %v2731
        %2775 = vmatprep.subr.mxu0 0.0
        %2776 = vmatpush1.msra.mxu0 %v2732
        %2777 = vmatprep.subr.mxu0 0.0
        %2778 = vmatpush1.msra.mxu0 %v2733
        %2779 = vmatprep.subr.mxu0 0.0
        %2780 = vmatpush1.msra.mxu0 %v2734
        %2781 = vmatprep.subr.mxu0 0.0
        %2782 = vmatpush1.msra.mxu0 %v2735
        %2783 = vmatprep.subr.mxu0 0.0
        %2784 = vmatpush1.msra.mxu0 %v2736
        %2785 = vmatprep.subr.mxu0 0.0
        %2786 = vmatpush1.msra.mxu0 %v2737
        %2787 = vmatprep.subr.mxu0 0.0
        %2788 = vmatpush1.msra.mxu0 %v2738
        %2789 = vmatprep.subr.mxu0 0.0
        %2790 = vmatpush1.msra.mxu0 %v2739
        %2791 = vmatprep.subr.mxu0 0.0
        %2792 = vmatpush1.msra.mxu0 %v2753
        %2793 = vmatprep.subr.mxu0 0.0
        %2794 = vmatpush1.msra.mxu0 0.0
        %2795 = vmatprep.subr.mxu0 0.0
        %2796 = vmatpush1.msra.mxu0 0.0
        %2797 = vmatprep.subr.mxu0 0.0
        %2798 = vmatpush1.msra.mxu0 0.0
        %2799 = vmatprep.subr.mxu0 0.0
        %2800 = vmatpush1.msra.mxu0 0.0
        %2801 = vmatprep.subr.mxu0 0.0
        %2802 = vmatpush1.msra.mxu0 0.0
        %2803 = vmatprep.subr.mxu0 0.0
        %2804 = vmatpush1.msra.mxu0 0.0
        %2805 = vmatprep.subr.mxu0 0.0
        %2806 = vmatpush1.msra.mxu0 0.0
        %2807 = vmatprep.subr.mxu0 0.0
        %2808 = vmatpush1.msra.mxu0 0.0
        %2809 = vmatprep.subr.mxu0 0.0
        %2810 = vmatpush1.msra.mxu0 0.0
        %2811 = vmatprep.subr.mxu0 0.0
        %2812 = vmatpush1.msra.mxu0 0.0
        %2813 = vmatprep.subr.mxu0 0.0
        %2814 = vmatpush1.msra.mxu0 0.0
        %2815 = vmatprep.subr.mxu0 0.0
        %2816 = vmatpush1.msra.mxu0 0.0
        %2817 = vmatprep.subr.mxu0 0.0
        %2818 = vmatpush1.msra.mxu0 0.0
        %2819 = vmatprep.mubr.f32.mxu0 %v2749
        %2820 = vmatmul.mubr.f32.gmra.mrb[0].mxu0 %v2720
        %v2821 = vpop.f32.mrb[0].mxu0
        %v2822 = vadd.f32 %v2746, %v2821
        %v2823 = vpop.f32.mrb[0].mxu0
        %2824 = vdwg.mxu0
        %vm2825 = vcmask 80896
        %2826 = vst.msk [vmem:[%s275] sm:$0xff] %vm2825, %v2822
      $region48: #{dense_cnn_forward.3} parent=39 // pred_fallthru
        _
      %p2827 = scmp.lt.s32.totalorder %s20, 0
      %s2828 = scalar_select %p2827, %s20, 0
      %s2829 = smul.addr %s2828, 8
      %s2830 = scalar_lea.vmem %s5, %s2829
      // Predicated region
      $region49: #{dense_cnn_forward.3} parent=39 // pred_check
        %p2831 = pneg %p163
      $region50: #{dense_cnn_forward.3} parent=39 // pred_check_branch
        %2833 = sbr.rel (%p2831) target = $region52
      $region51: #{dense_cnn_forward.3} parent=39 // pred_region
        _
      $region52: #{dense_cnn_forward.3} parent=39 // pred_fallthru
        _
      // Predicated region
      $region53: #{dense_cnn_forward.3} parent=39 // pred_check
        %p2834 = pneg %p163
      $region54: #{dense_cnn_forward.3} parent=39 // pred_check_branch
        %2836 = sbr.rel (%p2834) target = $region56
      $region55: #{dense_cnn_forward.3} parent=39 // pred_region
        %p2837 = scmp.lt.s32.totalorder %s20, 0
        %s2838 = scalar_select %p2837, %s20, 0
        %s2839 = smul.addr %s2838, 8
        %s2840 = scalar_lea.vmem %s5, %s2839
      $region56: #{dense_cnn_forward.3} parent=39 // pred_fallthru
        _
    $region40: #{dense_cnn_forward.3} parent=5 // pred_fallthru
      _
    %p2841 = scmp.le.s32.totalorder 2, %s11
    // Predicated region
    $region57: #{dense_cnn_forward.3} parent=5 // pred_check
      %p2842 = pneg %p2841
    $region58: #{dense_cnn_forward.3} parent=5 // pred_check_branch
      %2844 = sbr.rel (%p2842) target = $region60
    $region59: #{dense_cnn_forward.3} parent=5 // pred_region
      %s2845 = ssub.s32 %s11, 2
    $region60: #{dense_cnn_forward.3} parent=5 // pred_fallthru
      _
  $region6: #{dense_cnn_forward.3} parent=0 // loop_footer
    %s15 = sadd.s32 1, %s11
  $region7: #{dense_cnn_forward.3} parent=0 // loop_footer_branch
    %10 = sbr.rel target = $region3
  $region8: #{dense_cnn_forward.3} parent=0 // loop_exit
    _

</llo_original>
